<compile_context>
chip_gen: v7x
topology: tpu7x:2x2x1
jax: 0.10.0
libtpu: 0.0.40
codegen_flags: <defaults>
</compile_context>

<pallas_src>
import functools

import jax
import jax.numpy as jnp
import numpy as np
from jax.experimental import pallas as pl
from jax.experimental.pallas import tpu as pltpu


# ----------------------------------------------------------------------------
# Weight preprocessing (tiny ops on weights only -- no activation traffic)
# ----------------------------------------------------------------------------
def _conv_band_matrices(w_oihw, W, split_pool):
    """3x3 'same' conv as banded matmuls over a (rows=H, lanes=W*C) layout.

    For a height-padded image row r (vector of length W*IC, channel fastest),
    sum_kh xpad[r+kh] @ M[kh] equals conv-output row r (length W*OC).
    Width padding is folded into the band (zero bands at the borders).
    split_pool=True splits the output columns into even-w / odd-w groups so a
    horizontal 2x max-pool becomes a plain elementwise maximum.
    """
    OC, IC = w_oihw.shape[0], w_oihw.shape[1]
    wk = jnp.transpose(w_oihw, (2, 3, 1, 0))            # (kh, kw, ic, oc)
    wi = np.arange(W)[:, None]
    wo = np.arange(W)[None, :]
    kw_idx = wi - wo + 1                                 # kw = w_in - w_out + 1
    valid = jnp.asarray((kw_idx >= 0) & (kw_idx <= 2), jnp.float32)
    kw_clip = np.clip(kw_idx, 0, 2)
    mats = []
    for kh in range(3):
        g = wk[kh][kw_clip] * valid[:, :, None, None]    # (w_in, w_out, ic, oc)
        g = jnp.transpose(g, (0, 2, 1, 3))               # (w_in, ic, w_out, oc)
        if split_pool:
            mats.append(g[:, :, 0::2, :].reshape(W * IC, (W // 2) * OC))
            mats.append(g[:, :, 1::2, :].reshape(W * IC, (W // 2) * OC))
        else:
            mats.append(g.reshape(W * IC, W * OC))
    return jnp.stack(mats, axis=0)


def _upconv_block_diag(w_part, W):
    """ConvTranspose2d(k=2, s=2) as 2 block-diagonal matrices (one per di)."""
    IC, OC = w_part.shape[0], w_part.shape[1]
    B = jnp.transpose(w_part, (2, 0, 3, 1)).reshape(2, IC, 2 * OC)  # (di, ic, dj*OC+oc)
    eyeW = jnp.eye(W, dtype=w_part.dtype)
    U = eyeW[None, :, None, :, None] * B[:, None, :, None, :]       # (2, W, IC, W, 2OC)
    return U.reshape(2, W * IC, 2 * W * OC)


# ----------------------------------------------------------------------------
# Pallas kernels
# ----------------------------------------------------------------------------
def _enc_kernel(x_ref, m_ref, b_ref, o_ref, xps, hps, *, H):
    """Fused conv3x3(+pad1) + bias + ReLU + 2x2 maxpool for one image."""
    Wc = xps.shape[1]
    half = hps.shape[1]
    # in-kernel height padding
    xps[...] = jnp.zeros((H + 2, Wc), jnp.float32)
    xps[pl.ds(1, H), :] = x_ref[0]
    # conv as 3 row-shifted band matmuls, split into even/odd w_out columns
    acc_e = jnp.zeros((H, half), jnp.float32)
    acc_o = jnp.zeros((H, half), jnp.float32)
    for kh in range(3):
        a = xps[pl.ds(kh, H), :]
        acc_e = acc_e + jnp.dot(a, m_ref[2 * kh], preferred_element_type=jnp.float32)
        acc_o = acc_o + jnp.dot(a, m_ref[2 * kh + 1], preferred_element_type=jnp.float32)
    bias = b_ref[...]
    acc_e = jnp.maximum(acc_e + bias, 0.0)
    acc_o = jnp.maximum(acc_o + bias, 0.0)
    hps[...] = jnp.maximum(acc_e, acc_o)                 # horizontal 2x max
    for p in range(H // 2):                              # vertical 2x max
        o_ref[0, p, :] = jnp.maximum(hps[2 * p, :], hps[2 * p + 1, :])


def _bn_lastconv_kernel(x_ref, sel_ref, selT_ref, g_ref, bt_ref, m_ref, b_ref,
                        o_ref, xps, *, N, H, cnt, eps):
    """Train-mode BatchNorm2d stats + affine fused into the 3x3 last conv."""
    L = x_ref.shape[1]
    L2 = o_ref.shape[2]
    x = x_ref[...]                                               # (N*H, W*C)
    ssum = jnp.sum(x, axis=0, keepdims=True)                     # (1, W*C)
    mean_c = jnp.dot(ssum, sel_ref[...],
                     preferred_element_type=jnp.float32) / cnt   # (1, C)
    mean_row = jnp.dot(mean_c, selT_ref[...],
                       preferred_element_type=jnp.float32)       # (1, W*C)
    xc = x - mean_row
    var_c = jnp.dot(jnp.sum(xc * xc, axis=0, keepdims=True), sel_ref[...],
                    preferred_element_type=jnp.float32) / cnt    # (1, C) biased
    inv_c = jax.lax.rsqrt(var_c + eps)
    scale_c = g_ref[...] * inv_c
    shift_c = bt_ref[...] - mean_c * scale_c
    scale_row = jnp.dot(scale_c, selT_ref[...], preferred_element_type=jnp.float32)
    shift_row = jnp.dot(shift_c, selT_ref[...], preferred_element_type=jnp.float32)
    bias = b_ref[...]
    for n in range(N):                                           # per image conv
        xn = x_ref[pl.ds(n * H, H), :] * scale_row + shift_row   # BN applied inline
        xps[...] = jnp.zeros((H + 2, L), jnp.float32)
        xps[pl.ds(1, H), :] = xn
        acc = jnp.zeros((H, L2), jnp.float32)
        for kh in range(3):
            acc = acc + jnp.dot(xps[pl.ds(kh, H), :], m_ref[kh],
                                preferred_element_type=jnp.float32)
        o_ref[n] = acc + bias


def _dec_kernel(x_ref, sh_ref, ux_ref, us_ref, b_ref, o_ref, s0, s1, *, H):
    """Fused ReLU(x) | sh concat + ConvTranspose2d(2, stride=2) with in-kernel
    sub-pixel (depth-to-space) row interleaving."""
    xr = jnp.maximum(x_ref[0], 0.0)                     # act() only on the x half
    sh = sh_ref[0]
    bias = b_ref[...]
    s0[...] = (jnp.dot(xr, ux_ref[0], preferred_element_type=jnp.float32)
               + jnp.dot(sh, us_ref[0], preferred_element_type=jnp.float32) + bias)
    s1[...] = (jnp.dot(xr, ux_ref[1], preferred_element_type=jnp.float32)
               + jnp.dot(sh, us_ref[1], preferred_element_type=jnp.float32) + bias)
    for i in range(H):
        o_ref[0, 2 * i, :] = s0[i, :]
        o_ref[0, 2 * i + 1, :] = s1[i, :]


# ----------------------------------------------------------------------------
# kernel wrappers
# ----------------------------------------------------------------------------
def encoder_layer(x, w, b, H, W, C):
    """x: (N, H, W*C) -> (N, H//2, (W//2)*OC)   [conv+bias+relu+maxpool]."""
    N = x.shape[0]
    OC = w.shape[0]
    Wc = W * C
    half = (W // 2) * OC
    M = _conv_band_matrices(w, W, split_pool=True)        # (6, Wc, half)
    bias_cols = jnp.tile(b, W // 2).reshape(1, half)
    return pl.pallas_call(
        functools.partial(_enc_kernel, H=H),
        out_shape=jax.ShapeDtypeStruct((N, H // 2, half), jnp.float32),
        grid=(N,),
        in_specs=[pl.BlockSpec((1, H, Wc), lambda n: (n, 0, 0)),
                  pl.BlockSpec((6, Wc, half), lambda n: (0, 0, 0)),
                  pl.BlockSpec((1, half), lambda n: (0, 0))],
        out_specs=pl.BlockSpec((1, H // 2, half), lambda n: (n, 0, 0)),
        scratch_shapes=[pltpu.VMEM((H + 2, Wc), jnp.float32),
                        pltpu.VMEM((H, half), jnp.float32)],
        compiler_params=pltpu.CompilerParams(dimension_semantics=("parallel",)),
    )(x, M, bias_cols)


def bn_lastconv(x, gamma, beta, w, b, N, H, W, C, eps=1e-5):
    """x: (N, H, W*C) -> BN(train) + conv3x3 -> (N, H, W*OC)."""
    OC = w.shape[0]
    L = W * C
    L2 = W * OC
    x2 = x.reshape(N * H, L)
    sel = jnp.tile(jnp.eye(C, dtype=jnp.float32), (W, 1))   # (W*C, C): per-channel sum
    selT = jnp.transpose(sel)                                # (C, W*C): broadcast back
    M = _conv_band_matrices(w, W, split_pool=False)          # (3, L, L2)
    bias_cols = jnp.tile(b, W).reshape(1, L2)
    return pl.pallas_call(
        functools.partial(_bn_lastconv_kernel, N=N, H=H, cnt=float(N * H * W), eps=eps),
        out_shape=jax.ShapeDtypeStruct((N, H, L2), jnp.float32),
        grid=(1,),
        in_specs=[pl.BlockSpec((N * H, L), lambda i: (0, 0)),
                  pl.BlockSpec((L, C), lambda i: (0, 0)),
                  pl.BlockSpec((C, L), lambda i: (0, 0)),
                  pl.BlockSpec((1, C), lambda i: (0, 0)),
                  pl.BlockSpec((1, C), lambda i: (0, 0)),
                  pl.BlockSpec((3, L, L2), lambda i: (0, 0, 0)),
                  pl.BlockSpec((1, L2), lambda i: (0, 0))],
        out_specs=pl.BlockSpec((N, H, L2), lambda i: (0, 0, 0)),
        scratch_shapes=[pltpu.VMEM((H + 2, L), jnp.float32)],
        compiler_params=pltpu.CompilerParams(dimension_semantics=("arbitrary",)),
    )(x2, sel, selT, gamma.reshape(1, C), beta.reshape(1, C), M, bias_cols)


def decoder_layer(x, sh, w_iokk, b, H, W, Cx, Cs):
    """up(cat(relu(x), sh)):  (N,H,W*Cx),(N,H,W*Cs) -> (N, 2H, 2W*OC)."""
    N = x.shape[0]
    OC = w_iokk.shape[1]
    Lx, Ls, Lo2 = W * Cx, W * Cs, 2 * W * OC
    Ux = _upconv_block_diag(w_iokk[:Cx], W)                # (2, Lx, Lo2)
    Us = _upconv_block_diag(w_iokk[Cx:], W)                # (2, Ls, Lo2)
    bias_cols = jnp.tile(b, 2 * W).reshape(1, Lo2)
    return pl.pallas_call(
        functools.partial(_dec_kernel, H=H),
        out_shape=jax.ShapeDtypeStruct((N, 2 * H, Lo2), jnp.float32),
        grid=(N,),
        in_specs=[pl.BlockSpec((1, H, Lx), lambda n: (n, 0, 0)),
                  pl.BlockSpec((1, H, Ls), lambda n: (n, 0, 0)),
                  pl.BlockSpec((2, Lx, Lo2), lambda n: (0, 0, 0)),
                  pl.BlockSpec((2, Ls, Lo2), lambda n: (0, 0, 0)),
                  pl.BlockSpec((1, Lo2), lambda n: (0, 0))],
        out_specs=pl.BlockSpec((1, 2 * H, Lo2), lambda n: (n, 0, 0)),
        scratch_shapes=[pltpu.VMEM((H, Lo2), jnp.float32),
                        pltpu.VMEM((H, Lo2), jnp.float32)],
        compiler_params=pltpu.CompilerParams(dimension_semantics=("parallel",)),
    )(x, sh, Ux, Us, bias_cols)


# ----------------------------------------------------------------------------
# full forward (matches Unet.forward; NCHW in / NCHW out)
# ----------------------------------------------------------------------------
@jax.jit
def unet_forward(x_nchw, params):
    N, Cin, H, W = x_nchw.shape
    # NCHW -> rows = spatial rows, lanes = (w, c) channel-fastest
    x = jnp.transpose(x_nchw, (0, 2, 3, 1)).reshape(N, H, W * Cin)
    h, w, c = H, W, Cin
    shorted = []
    for cw, cb in params["convs"]:
        # dropout(p=0.0) == identity
        x = encoder_layer(x, cw, cb, h, w, c)            # conv+relu+pool fused
        h, w, c = h // 2, w // 2, cw.shape[0]
        shorted.append((x, c))
    wl, bl = params["last_conv"]
    x = bn_lastconv(x, params["bn_gamma"], params["bn_beta"], wl, bl, N, h, w, c)
    cx = wl.shape[0]
    for (uw, ub), (sh, cs) in zip(params["ups"], shorted[::-1]):
        # dropout(p=0.0) == identity
        x = decoder_layer(x, sh, uw, ub, h, w, cx, cs)   # up(cat(relu(x), sh)) fused
        h, w = 2 * h, 2 * w
        cx = uw.shape[1]
    out = x.reshape(N, h, w, cx)
    return {"out": jnp.transpose(out, (0, 3, 1, 2))}     # -> NCHW


# ----------------------------------------------------------------------------
# pure-JAX reference (independent path: lax conv / reduce_window / einsum)
# ----------------------------------------------------------------------------
def _ref_convT(x, w, b):  # x: NCHW, w: (IC, OC, 2, 2)
    y = jnp.einsum("nchw,copq->nohpwq", x, w)
    n, oc, h, _, wd, _ = y.shape
    return y.reshape(n, oc, 2 * h, 2 * wd) + b[None, :, None, None]


def ref_forward(x, params, eps=1e-5):
    shorted = []
    for w, b in params["convs"]:
        x = jax.lax.conv_general_dilated(
            x, w, (1, 1), "SAME", dimension_numbers=("NCHW", "OIHW", "NCHW"))
        x = jnp.maximum(x + b[None, :, None, None], 0.0)
        x = jax.lax.reduce_window(x, -jnp.inf, jax.lax.max,
                                  (1, 1, 2, 2), (1, 1, 2, 2), "VALID")
        shorted.append(x)
    mean = jnp.mean(x, axis=(0, 2, 3), keepdims=True)
    var = jnp.mean((x - mean) ** 2, axis=(0, 2, 3), keepdims=True)
    x = (x - mean) / jnp.sqrt(var + eps)
    x = x * params["bn_gamma"][None, :, None, None] + params["bn_beta"][None, :, None, None]
    wl, bl = params["last_conv"]
    x = jax.lax.conv_general_dilated(
        x, wl, (1, 1), "SAME", dimension_numbers=("NCHW", "OIHW", "NCHW"))
    x = x + bl[None, :, None, None]
    for (wu, bu), sh in zip(params["ups"], shorted[::-1]):
        xc = jnp.concatenate([jnp.maximum(x, 0.0), sh], axis=1)
        x = _ref_convT(xc, wu, bu)
    return x


# ----------------------------------------------------------------------------
# deterministic parameter construction (shapes follow Unet.__init__)
# ----------------------------------------------------------------------------
def make_params(channels, out_labels, key):
    keys = iter(jax.random.split(key, 32))
    convs = []
    for ic, oc in zip([3] + channels, channels):
        w = 0.1 * jax.random.normal(next(keys), (oc, ic, 3, 3), jnp.float32)
        b = 0.1 * jax.random.normal(next(keys), (oc,), jnp.float32)
        convs.append((w, b))
    c_last = channels[-1]
    last_w = 0.1 * jax.random.normal(next(keys), (c_last, c_last, 3, 3), jnp.float32)
    last_b = 0.1 * jax.random.normal(next(keys), (c_last,), jnp.float32)
    channels_without_last = ([out_labels] + channels)[:-1]
    ups = []
    for oc, ic in zip(channels_without_last[::-1], channels[::-1]):
        w = 0.1 * jax.random.normal(next(keys), (2 * ic, oc, 2, 2), jnp.float32)
        b = 0.1 * jax.random.normal(next(keys), (oc,), jnp.float32)
        ups.append((w, b))
    gamma = 1.0 + 0.1 * jax.random.normal(next(keys), (c_last,), jnp.float32)
    beta = 0.1 * jax.random.normal(next(keys), (c_last,), jnp.float32)
    return {"convs": convs, "last_conv": (last_w, last_b), "ups": ups,
            "bn_gamma": gamma, "bn_beta": beta}


if __name__ == "__main__":
    channels = [8, 16]
    out_labels = 5
    key = jax.random.PRNGKey(0)
    pkey, xkey = jax.random.split(key)
    params = make_params(channels, out_labels, pkey)

    x = jax.random.normal(xkey, (2, 3, 16, 16), jnp.float32)   # NCHW, like PyTorch

    out = unet_forward(x, params)
    jax.block_until_ready(out)

    assert out["out"].shape == (2, out_labels, 16, 16), out["out"].shape

    ref = ref_forward(x, params)
    err = float(jnp.max(jnp.abs(out["out"] - ref)))
    assert err < 1e-3, f"max abs error vs reference: {err}"

    print("KERNEL_OK")
</pallas_src>

<mosaic_0001>
module attributes {stable_mosaic.version = 11 : i64} {
  func.func @_enc_kernel(%arg0: i32, %arg1: memref<1x16x48xf32, #tpu.memory_space<vmem>>, %arg2: memref<6x48x64xf32, #tpu.memory_space<vmem>>, %arg3: memref<1x64xf32, #tpu.memory_space<vmem>>, %arg4: memref<1x8x64xf32, #tpu.memory_space<vmem>>, %arg5: memref<18x48xf32, #tpu.memory_space<vmem>>, %arg6: memref<16x64xf32, #tpu.memory_space<vmem>>) attributes {dimension_semantics = [#tpu.dimension_semantics<parallel>], iteration_bounds = array<i64: 2>, scalar_prefetch = 0 : i64, scratch_operands = 2 : i64, tpu.core_type = #tpu.core_type<tc>, window_params = [{transform_indices = @transform_0, window_bounds = array<i64: 1, 16, 48>}, {pipeline_mode = #tpu.pipeline_mode<synchronous>, transform_indices = @transform_1, window_bounds = array<i64: 6, 48, 64>}, {pipeline_mode = #tpu.pipeline_mode<synchronous>, transform_indices = @transform_2, window_bounds = array<i64: 1, 64>}, {transform_indices = @transform_3, window_bounds = array<i64: 1, 8, 64>}]} {
    %cst = arith.constant 0.000000e+00 : f32
    %0 = vector.broadcast %cst : f32 to vector<18x48xf32>
    %c0 = arith.constant 0 : index
    %c0_0 = arith.constant 0 : index
    %1 = vector.load %arg5[%c0, %c0_0] : memref<18x48xf32, #tpu.memory_space<vmem>>, vector<18x48xf32>
    tpu.vector_store %arg5[%c0, %c0_0], %0 {strides = array<i32>} : memref<18x48xf32, #tpu.memory_space<vmem>>, vector<18x48xf32>,
    %c0_1 = arith.constant 0 : index
    %c0_2 = arith.constant 0 : index
    %c0_3 = arith.constant 0 : index
    %2 = vector.load %arg1[%c0_1, %c0_2, %c0_3] : memref<1x16x48xf32, #tpu.memory_space<vmem>>, vector<1x16x48xf32>
    %3 = vector.shape_cast %2 : vector<1x16x48xf32> to vector<16x48xf32>
    %c1 = arith.constant 1 : index
    %c0_4 = arith.constant 0 : index
    %4 = vector.load %arg5[%c1, %c0_4] : memref<18x48xf32, #tpu.memory_space<vmem>>, vector<16x48xf32>
    tpu.vector_store %arg5[%c1, %c0_4], %3 {strides = array<i32>} : memref<18x48xf32, #tpu.memory_space<vmem>>, vector<16x48xf32>,
    %cst_5 = arith.constant 0.000000e+00 : f32
    %5 = vector.broadcast %cst_5 : f32 to vector<16x64xf32>
    %cst_6 = arith.constant 0.000000e+00 : f32
    %6 = vector.broadcast %cst_6 : f32 to vector<16x64xf32>
    %c0_7 = arith.constant 0 : index
    %c0_8 = arith.constant 0 : index
    %7 = vector.load %arg5[%c0_7, %c0_8] : memref<18x48xf32, #tpu.memory_space<vmem>>, vector<16x48xf32>
    %c0_9 = arith.constant 0 : index
    %c0_10 = arith.constant 0 : index
    %c0_11 = arith.constant 0 : index
    %8 = vector.load %arg2[%c0_9, %c0_10, %c0_11] : memref<6x48x64xf32, #tpu.memory_space<vmem>>, vector<1x48x64xf32>
    %9 = vector.shape_cast %8 : vector<1x48x64xf32> to vector<48x64xf32>
    %cst_12 = arith.constant dense<0.000000e+00> : vector<16x64xf32>
    %10 = tpu.matmul %7, %9, %cst_12 {dimension_numbers = #tpu.dot_dimension_numbers<[1], [0], [0], [1], [0, 0, 1, 1], [], []>} : vector<16x48xf32>, vector<48x64xf32>, vector<16x64xf32> -> vector<16x64xf32>
    %11 = arith.addf %5, %10 : vector<16x64xf32>
    %c1_13 = arith.constant 1 : index
    %c0_14 = arith.constant 0 : index
    %c0_15 = arith.constant 0 : index
    %12 = vector.load %arg2[%c1_13, %c0_14, %c0_15] : memref<6x48x64xf32, #tpu.memory_space<vmem>>, vector<1x48x64xf32>
    %13 = vector.shape_cast %12 : vector<1x48x64xf32> to vector<48x64xf32>
    %cst_16 = arith.constant dense<0.000000e+00> : vector<16x64xf32>
    %14 = tpu.matmul %7, %13, %cst_16 {dimension_numbers = #tpu.dot_dimension_numbers<[1], [0], [0], [1], [0, 0, 1, 1], [], []>} : vector<16x48xf32>, vector<48x64xf32>, vector<16x64xf32> -> vector<16x64xf32>
    %15 = arith.addf %6, %14 : vector<16x64xf32>
    %c1_17 = arith.constant 1 : index
    %c0_18 = arith.constant 0 : index
    %16 = vector.load %arg5[%c1_17, %c0_18] : memref<18x48xf32, #tpu.memory_space<vmem>>, vector<16x48xf32>
    %c2 = arith.constant 2 : index
    %c0_19 = arith.constant 0 : index
    %c0_20 = arith.constant 0 : index
    %17 = vector.load %arg2[%c2, %c0_19, %c0_20] : memref<6x48x64xf32, #tpu.memory_space<vmem>>, vector<1x48x64xf32>
    %18 = vector.shape_cast %17 : vector<1x48x64xf32> to vector<48x64xf32>
    %cst_21 = arith.constant dense<0.000000e+00> : vector<16x64xf32>
    %19 = tpu.matmul %16, %18, %cst_21 {dimension_numbers = #tpu.dot_dimension_numbers<[1], [0], [0], [1], [0, 0, 1, 1], [], []>} : vector<16x48xf32>, vector<48x64xf32>, vector<16x64xf32> -> vector<16x64xf32>
    %20 = arith.addf %11, %19 : vector<16x64xf32>
    %c3 = arith.constant 3 : index
    %c0_22 = arith.constant 0 : index
    %c0_23 = arith.constant 0 : index
    %21 = vector.load %arg2[%c3, %c0_22, %c0_23] : memref<6x48x64xf32, #tpu.memory_space<vmem>>, vector<1x48x64xf32>
    %22 = vector.shape_cast %21 : vector<1x48x64xf32> to vector<48x64xf32>
    %cst_24 = arith.constant dense<0.000000e+00> : vector<16x64xf32>
    %23 = tpu.matmul %16, %22, %cst_24 {dimension_numbers = #tpu.dot_dimension_numbers<[1], [0], [0], [1], [0, 0, 1, 1], [], []>} : vector<16x48xf32>, vector<48x64xf32>, vector<16x64xf32> -> vector<16x64xf32>
    %24 = arith.addf %15, %23 : vector<16x64xf32>
    %c2_25 = arith.constant 2 : index
    %c0_26 = arith.constant 0 : index
    %25 = vector.load %arg5[%c2_25, %c0_26] : memref<18x48xf32, #tpu.memory_space<vmem>>, vector<16x48xf32>
    %c4 = arith.constant 4 : index
    %c0_27 = arith.constant 0 : index
    %c0_28 = arith.constant 0 : index
    %26 = vector.load %arg2[%c4, %c0_27, %c0_28] : memref<6x48x64xf32, #tpu.memory_space<vmem>>, vector<1x48x64xf32>
    %27 = vector.shape_cast %26 : vector<1x48x64xf32> to vector<48x64xf32>
    %cst_29 = arith.constant dense<0.000000e+00> : vector<16x64xf32>
    %28 = tpu.matmul %25, %27, %cst_29 {dimension_numbers = #tpu.dot_dimension_numbers<[1], [0], [0], [1], [0, 0, 1, 1], [], []>} : vector<16x48xf32>, vector<48x64xf32>, vector<16x64xf32> -> vector<16x64xf32>
    %29 = arith.addf %20, %28 : vector<16x64xf32>
    %c5 = arith.constant 5 : index
    %c0_30 = arith.constant 0 : index
    %c0_31 = arith.constant 0 : index
    %30 = vector.load %arg2[%c5, %c0_30, %c0_31] : memref<6x48x64xf32, #tpu.memory_space<vmem>>, vector<1x48x64xf32>
    %31 = vector.shape_cast %30 : vector<1x48x64xf32> to vector<48x64xf32>
    %cst_32 = arith.constant dense<0.000000e+00> : vector<16x64xf32>
    %32 = tpu.matmul %25, %31, %cst_32 {dimension_numbers = #tpu.dot_dimension_numbers<[1], [0], [0], [1], [0, 0, 1, 1], [], []>} : vector<16x48xf32>, vector<48x64xf32>, vector<16x64xf32> -> vector<16x64xf32>
    %33 = arith.addf %24, %32 : vector<16x64xf32>
    %c0_33 = arith.constant 0 : index
    %c0_34 = arith.constant 0 : index
    %34 = vector.load %arg3[%c0_33, %c0_34] : memref<1x64xf32, #tpu.memory_space<vmem>>, vector<1x64xf32>
    %35 = vector.broadcast %34 : vector<1x64xf32> to vector<16x64xf32>
    %36 = arith.addf %29, %35 : vector<16x64xf32>
    %cst_35 = arith.constant 0.000000e+00 : f32
    %37 = vector.broadcast %cst_35 : f32 to vector<16x64xf32>
    %38 = arith.maximumf %36, %37 : vector<16x64xf32>
    %39 = vector.broadcast %34 : vector<1x64xf32> to vector<16x64xf32>
    %40 = arith.addf %33, %39 : vector<16x64xf32>
    %cst_36 = arith.constant 0.000000e+00 : f32
    %41 = vector.broadcast %cst_36 : f32 to vector<16x64xf32>
    %42 = arith.maximumf %40, %41 : vector<16x64xf32>
    %43 = arith.maximumf %38, %42 : vector<16x64xf32>
    %c0_37 = arith.constant 0 : index
    %c0_38 = arith.constant 0 : index
    %44 = vector.load %arg6[%c0_37, %c0_38] : memref<16x64xf32, #tpu.memory_space<vmem>>, vector<16x64xf32>
    tpu.vector_store %arg6[%c0_37, %c0_38], %43 {strides = array<i32>} : memref<16x64xf32, #tpu.memory_space<vmem>>, vector<16x64xf32>,
    %c0_39 = arith.constant 0 : index
    %c0_40 = arith.constant 0 : index
    %45 = vector.load %arg6[%c0_39, %c0_40] : memref<16x64xf32, #tpu.memory_space<vmem>>, vector<1x64xf32>
    %46 = vector.shape_cast %45 : vector<1x64xf32> to vector<64xf32>
    %c1_41 = arith.constant 1 : index
    %c0_42 = arith.constant 0 : index
    %47 = vector.load %arg6[%c1_41, %c0_42] : memref<16x64xf32, #tpu.memory_space<vmem>>, vector<1x64xf32>
    %48 = vector.shape_cast %47 : vector<1x64xf32> to vector<64xf32>
    %49 = arith.maximumf %46, %48 : vector<64xf32>
    %c0_43 = arith.constant 0 : index
    %c0_44 = arith.constant 0 : index
    %c0_45 = arith.constant 0 : index
    %50 = vector.load %arg4[%c0_43, %c0_44, %c0_45] : memref<1x8x64xf32, #tpu.memory_space<vmem>>, vector<1x1x64xf32>
    %51 = vector.shape_cast %50 : vector<1x1x64xf32> to vector<64xf32>
    %52 = vector.shape_cast %49 : vector<64xf32> to vector<1x1x64xf32>
    tpu.vector_store %arg4[%c0_43, %c0_44, %c0_45], %52 {strides = array<i32>} : memref<1x8x64xf32, #tpu.memory_space<vmem>>, vector<1x1x64xf32>,
    %c2_46 = arith.constant 2 : index
    %c0_47 = arith.constant 0 : index
    %53 = vector.load %arg6[%c2_46, %c0_47] : memref<16x64xf32, #tpu.memory_space<vmem>>, vector<1x64xf32>
    %54 = vector.shape_cast %53 : vector<1x64xf32> to vector<64xf32>
    %c3_48 = arith.constant 3 : index
    %c0_49 = arith.constant 0 : index
    %55 = vector.load %arg6[%c3_48, %c0_49] : memref<16x64xf32, #tpu.memory_space<vmem>>, vector<1x64xf32>
    %56 = vector.shape_cast %55 : vector<1x64xf32> to vector<64xf32>
    %57 = arith.maximumf %54, %56 : vector<64xf32>
    %c0_50 = arith.constant 0 : index
    %c1_51 = arith.constant 1 : index
    %c0_52 = arith.constant 0 : index
    %58 = vector.load %arg4[%c0_50, %c1_51, %c0_52] : memref<1x8x64xf32, #tpu.memory_space<vmem>>, vector<1x1x64xf32>
    %59 = vector.shape_cast %58 : vector<1x1x64xf32> to vector<64xf32>
    %60 = vector.shape_cast %57 : vector<64xf32> to vector<1x1x64xf32>
    tpu.vector_store %arg4[%c0_50, %c1_51, %c0_52], %60 {strides = array<i32>} : memref<1x8x64xf32, #tpu.memory_space<vmem>>, vector<1x1x64xf32>,
    %c4_53 = arith.constant 4 : index
    %c0_54 = arith.constant 0 : index
    %61 = vector.load %arg6[%c4_53, %c0_54] : memref<16x64xf32, #tpu.memory_space<vmem>>, vector<1x64xf32>
    %62 = vector.shape_cast %61 : vector<1x64xf32> to vector<64xf32>
    %c5_55 = arith.constant 5 : index
    %c0_56 = arith.constant 0 : index
    %63 = vector.load %arg6[%c5_55, %c0_56] : memref<16x64xf32, #tpu.memory_space<vmem>>, vector<1x64xf32>
    %64 = vector.shape_cast %63 : vector<1x64xf32> to vector<64xf32>
    %65 = arith.maximumf %62, %64 : vector<64xf32>
    %c0_57 = arith.constant 0 : index
    %c2_58 = arith.constant 2 : index
    %c0_59 = arith.constant 0 : index
    %66 = vector.load %arg4[%c0_57, %c2_58, %c0_59] : memref<1x8x64xf32, #tpu.memory_space<vmem>>, vector<1x1x64xf32>
    %67 = vector.shape_cast %66 : vector<1x1x64xf32> to vector<64xf32>
    %68 = vector.shape_cast %65 : vector<64xf32> to vector<1x1x64xf32>
    tpu.vector_store %arg4[%c0_57, %c2_58, %c0_59], %68 {strides = array<i32>} : memref<1x8x64xf32, #tpu.memory_space<vmem>>, vector<1x1x64xf32>,
    %c6 = arith.constant 6 : index
    %c0_60 = arith.constant 0 : index
    %69 = vector.load %arg6[%c6, %c0_60] : memref<16x64xf32, #tpu.memory_space<vmem>>, vector<1x64xf32>
    %70 = vector.shape_cast %69 : vector<1x64xf32> to vector<64xf32>
    %c7 = arith.constant 7 : index
    %c0_61 = arith.constant 0 : index
    %71 = vector.load %arg6[%c7, %c0_61] : memref<16x64xf32, #tpu.memory_space<vmem>>, vector<1x64xf32>
    %72 = vector.shape_cast %71 : vector<1x64xf32> to vector<64xf32>
    %73 = arith.maximumf %70, %72 : vector<64xf32>
    %c0_62 = arith.constant 0 : index
    %c3_63 = arith.constant 3 : index
    %c0_64 = arith.constant 0 : index
    %74 = vector.load %arg4[%c0_62, %c3_63, %c0_64] : memref<1x8x64xf32, #tpu.memory_space<vmem>>, vector<1x1x64xf32>
    %75 = vector.shape_cast %74 : vector<1x1x64xf32> to vector<64xf32>
    %76 = vector.shape_cast %73 : vector<64xf32> to vector<1x1x64xf32>
    tpu.vector_store %arg4[%c0_62, %c3_63, %c0_64], %76 {strides = array<i32>} : memref<1x8x64xf32, #tpu.memory_space<vmem>>, vector<1x1x64xf32>,
    %c8 = arith.constant 8 : index
    %c0_65 = arith.constant 0 : index
    %77 = vector.load %arg6[%c8, %c0_65] : memref<16x64xf32, #tpu.memory_space<vmem>>, vector<1x64xf32>
    %78 = vector.shape_cast %77 : vector<1x64xf32> to vector<64xf32>
    %c9 = arith.constant 9 : index
    %c0_66 = arith.constant 0 : index
    %79 = vector.load %arg6[%c9, %c0_66] : memref<16x64xf32, #tpu.memory_space<vmem>>, vector<1x64xf32>
    %80 = vector.shape_cast %79 : vector<1x64xf32> to vector<64xf32>
    %81 = arith.maximumf %78, %80 : vector<64xf32>
    %c0_67 = arith.constant 0 : index
    %c4_68 = arith.constant 4 : index
    %c0_69 = arith.constant 0 : index
    %82 = vector.load %arg4[%c0_67, %c4_68, %c0_69] : memref<1x8x64xf32, #tpu.memory_space<vmem>>, vector<1x1x64xf32>
    %83 = vector.shape_cast %82 : vector<1x1x64xf32> to vector<64xf32>
    %84 = vector.shape_cast %81 : vector<64xf32> to vector<1x1x64xf32>
    tpu.vector_store %arg4[%c0_67, %c4_68, %c0_69], %84 {strides = array<i32>} : memref<1x8x64xf32, #tpu.memory_space<vmem>>, vector<1x1x64xf32>,
    %c10 = arith.constant 10 : index
    %c0_70 = arith.constant 0 : index
    %85 = vector.load %arg6[%c10, %c0_70] : memref<16x64xf32, #tpu.memory_space<vmem>>, vector<1x64xf32>
    %86 = vector.shape_cast %85 : vector<1x64xf32> to vector<64xf32>
    %c11 = arith.constant 11 : index
    %c0_71 = arith.constant 0 : index
    %87 = vector.load %arg6[%c11, %c0_71] : memref<16x64xf32, #tpu.memory_space<vmem>>, vector<1x64xf32>
    %88 = vector.shape_cast %87 : vector<1x64xf32> to vector<64xf32>
    %89 = arith.maximumf %86, %88 : vector<64xf32>
    %c0_72 = arith.constant 0 : index
    %c5_73 = arith.constant 5 : index
    %c0_74 = arith.constant 0 : index
    %90 = vector.load %arg4[%c0_72, %c5_73, %c0_74] : memref<1x8x64xf32, #tpu.memory_space<vmem>>, vector<1x1x64xf32>
    %91 = vector.shape_cast %90 : vector<1x1x64xf32> to vector<64xf32>
    %92 = vector.shape_cast %89 : vector<64xf32> to vector<1x1x64xf32>
    tpu.vector_store %arg4[%c0_72, %c5_73, %c0_74], %92 {strides = array<i32>} : memref<1x8x64xf32, #tpu.memory_space<vmem>>, vector<1x1x64xf32>,
    %c12 = arith.constant 12 : index
    %c0_75 = arith.constant 0 : index
    %93 = vector.load %arg6[%c12, %c0_75] : memref<16x64xf32, #tpu.memory_space<vmem>>, vector<1x64xf32>
    %94 = vector.shape_cast %93 : vector<1x64xf32> to vector<64xf32>
    %c13 = arith.constant 13 : index
    %c0_76 = arith.constant 0 : index
    %95 = vector.load %arg6[%c13, %c0_76] : memref<16x64xf32, #tpu.memory_space<vmem>>, vector<1x64xf32>
    %96 = vector.shape_cast %95 : vector<1x64xf32> to vector<64xf32>
    %97 = arith.maximumf %94, %96 : vector<64xf32>
    %c0_77 = arith.constant 0 : index
    %c6_78 = arith.constant 6 : index
    %c0_79 = arith.constant 0 : index
    %98 = vector.load %arg4[%c0_77, %c6_78, %c0_79] : memref<1x8x64xf32, #tpu.memory_space<vmem>>, vector<1x1x64xf32>
    %99 = vector.shape_cast %98 : vector<1x1x64xf32> to vector<64xf32>
    %100 = vector.shape_cast %97 : vector<64xf32> to vector<1x1x64xf32>
    tpu.vector_store %arg4[%c0_77, %c6_78, %c0_79], %100 {strides = array<i32>} : memref<1x8x64xf32, #tpu.memory_space<vmem>>, vector<1x1x64xf32>,
    %c14 = arith.constant 14 : index
    %c0_80 = arith.constant 0 : index
    %101 = vector.load %arg6[%c14, %c0_80] : memref<16x64xf32, #tpu.memory_space<vmem>>, vector<1x64xf32>
    %102 = vector.shape_cast %101 : vector<1x64xf32> to vector<64xf32>
    %c15 = arith.constant 15 : index
    %c0_81 = arith.constant 0 : index
    %103 = vector.load %arg6[%c15, %c0_81] : memref<16x64xf32, #tpu.memory_space<vmem>>, vector<1x64xf32>
    %104 = vector.shape_cast %103 : vector<1x64xf32> to vector<64xf32>
    %105 = arith.maximumf %102, %104 : vector<64xf32>
    %c0_82 = arith.constant 0 : index
    %c7_83 = arith.constant 7 : index
    %c0_84 = arith.constant 0 : index
    %106 = vector.load %arg4[%c0_82, %c7_83, %c0_84] : memref<1x8x64xf32, #tpu.memory_space<vmem>>, vector<1x1x64xf32>
    %107 = vector.shape_cast %106 : vector<1x1x64xf32> to vector<64xf32>
    %108 = vector.shape_cast %105 : vector<64xf32> to vector<1x1x64xf32>
    tpu.vector_store %arg4[%c0_82, %c7_83, %c0_84], %108 {strides = array<i32>} : memref<1x8x64xf32, #tpu.memory_space<vmem>>, vector<1x1x64xf32>,
    return
  }
  func.func @transform_0(%arg0: i32) -> (i32, i32, i32) {
    %c0_i32 = arith.constant 0 : i32
    %c0_i32_0 = arith.constant 0 : i32
    %c0_i32_1 = arith.constant 0 : i32
    return %arg0, %c0_i32, %c0_i32_0 : i32, i32, i32
  }
  func.func @transform_1(%arg0: i32) -> (i32, i32, i32) {
    %c0_i32 = arith.constant 0 : i32
    %c0_i32_0 = arith.constant 0 : i32
    %c0_i32_1 = arith.constant 0 : i32
    %c0_i32_2 = arith.constant 0 : i32
    return %c0_i32, %c0_i32_0, %c0_i32_1 : i32, i32, i32
  }
  func.func @transform_2(%arg0: i32) -> (i32, i32) {
    %c0_i32 = arith.constant 0 : i32
    %c0_i32_0 = arith.constant 0 : i32
    %c0_i32_1 = arith.constant 0 : i32
    return %c0_i32, %c0_i32_0 : i32, i32
  }
  func.func @transform_3(%arg0: i32) -> (i32, i32, i32) {
    %c0_i32 = arith.constant 0 : i32
    %c0_i32_0 = arith.constant 0 : i32
    %c0_i32_1 = arith.constant 0 : i32
    return %arg0, %c0_i32, %c0_i32_0 : i32, i32, i32
  }
}

module attributes {stable_mosaic.version = 11 : i64} {
  func.func @_enc_kernel(%arg0: i32, %arg1: memref<1x8x64xf32, #tpu.memory_space<vmem>>, %arg2: memref<6x64x64xf32, #tpu.memory_space<vmem>>, %arg3: memref<1x64xf32, #tpu.memory_space<vmem>>, %arg4: memref<1x4x64xf32, #tpu.memory_space<vmem>>, %arg5: memref<10x64xf32, #tpu.memory_space<vmem>>, %arg6: memref<8x64xf32, #tpu.memory_space<vmem>>) attributes {dimension_semantics = [#tpu.dimension_semantics<parallel>], iteration_bounds = array<i64: 2>, scalar_prefetch = 0 : i64, scratch_operands = 2 : i64, tpu.core_type = #tpu.core_type<tc>, window_params = [{transform_indices = @transform_0, window_bounds = array<i64: 1, 8, 64>}, {pipeline_mode = #tpu.pipeline_mode<synchronous>, transform_indices = @transform_1, window_bounds = array<i64: 6, 64, 64>}, {pipeline_mode = #tpu.pipeline_mode<synchronous>, transform_indices = @transform_2, window_bounds = array<i64: 1, 64>}, {transform_indices = @transform_3, window_bounds = array<i64: 1, 4, 64>}]} {
    %cst = arith.constant 0.000000e+00 : f32
    %0 = vector.broadcast %cst : f32 to vector<10x64xf32>
    %c0 = arith.constant 0 : index
    %c0_0 = arith.constant 0 : index
    %1 = vector.load %arg5[%c0, %c0_0] : memref<10x64xf32, #tpu.memory_space<vmem>>, vector<10x64xf32>
    tpu.vector_store %arg5[%c0, %c0_0], %0 {strides = array<i32>} : memref<10x64xf32, #tpu.memory_space<vmem>>, vector<10x64xf32>,
    %c0_1 = arith.constant 0 : index
    %c0_2 = arith.constant 0 : index
    %c0_3 = arith.constant 0 : index
    %2 = vector.load %arg1[%c0_1, %c0_2, %c0_3] : memref<1x8x64xf32, #tpu.memory_space<vmem>>, vector<1x8x64xf32>
    %3 = vector.shape_cast %2 : vector<1x8x64xf32> to vector<8x64xf32>
    %c1 = arith.constant 1 : index
    %c0_4 = arith.constant 0 : index
    %4 = vector.load %arg5[%c1, %c0_4] : memref<10x64xf32, #tpu.memory_space<vmem>>, vector<8x64xf32>
    tpu.vector_store %arg5[%c1, %c0_4], %3 {strides = array<i32>} : memref<10x64xf32, #tpu.memory_space<vmem>>, vector<8x64xf32>,
    %cst_5 = arith.constant 0.000000e+00 : f32
    %5 = vector.broadcast %cst_5 : f32 to vector<8x64xf32>
    %cst_6 = arith.constant 0.000000e+00 : f32
    %6 = vector.broadcast %cst_6 : f32 to vector<8x64xf32>
    %c0_7 = arith.constant 0 : index
    %c0_8 = arith.constant 0 : index
    %7 = vector.load %arg5[%c0_7, %c0_8] : memref<10x64xf32, #tpu.memory_space<vmem>>, vector<8x64xf32>
    %c0_9 = arith.constant 0 : index
    %c0_10 = arith.constant 0 : index
    %c0_11 = arith.constant 0 : index
    %8 = vector.load %arg2[%c0_9, %c0_10, %c0_11] : memref<6x64x64xf32, #tpu.memory_space<vmem>>, vector<1x64x64xf32>
    %9 = vector.shape_cast %8 : vector<1x64x64xf32> to vector<64x64xf32>
    %cst_12 = arith.constant dense<0.000000e+00> : vector<8x64xf32>
    %10 = tpu.matmul %7, %9, %cst_12 {dimension_numbers = #tpu.dot_dimension_numbers<[1], [0], [0], [1], [0, 0, 1, 1], [], []>} : vector<8x64xf32>, vector<64x64xf32>, vector<8x64xf32> -> vector<8x64xf32>
    %11 = arith.addf %5, %10 : vector<8x64xf32>
    %c1_13 = arith.constant 1 : index
    %c0_14 = arith.constant 0 : index
    %c0_15 = arith.constant 0 : index
    %12 = vector.load %arg2[%c1_13, %c0_14, %c0_15] : memref<6x64x64xf32, #tpu.memory_space<vmem>>, vector<1x64x64xf32>
    %13 = vector.shape_cast %12 : vector<1x64x64xf32> to vector<64x64xf32>
    %cst_16 = arith.constant dense<0.000000e+00> : vector<8x64xf32>
    %14 = tpu.matmul %7, %13, %cst_16 {dimension_numbers = #tpu.dot_dimension_numbers<[1], [0], [0], [1], [0, 0, 1, 1], [], []>} : vector<8x64xf32>, vector<64x64xf32>, vector<8x64xf32> -> vector<8x64xf32>
    %15 = arith.addf %6, %14 : vector<8x64xf32>
    %c1_17 = arith.constant 1 : index
    %c0_18 = arith.constant 0 : index
    %16 = vector.load %arg5[%c1_17, %c0_18] : memref<10x64xf32, #tpu.memory_space<vmem>>, vector<8x64xf32>
    %c2 = arith.constant 2 : index
    %c0_19 = arith.constant 0 : index
    %c0_20 = arith.constant 0 : index
    %17 = vector.load %arg2[%c2, %c0_19, %c0_20] : memref<6x64x64xf32, #tpu.memory_space<vmem>>, vector<1x64x64xf32>
    %18 = vector.shape_cast %17 : vector<1x64x64xf32> to vector<64x64xf32>
    %cst_21 = arith.constant dense<0.000000e+00> : vector<8x64xf32>
    %19 = tpu.matmul %16, %18, %cst_21 {dimension_numbers = #tpu.dot_dimension_numbers<[1], [0], [0], [1], [0, 0, 1, 1], [], []>} : vector<8x64xf32>, vector<64x64xf32>, vector<8x64xf32> -> vector<8x64xf32>
    %20 = arith.addf %11, %19 : vector<8x64xf32>
    %c3 = arith.constant 3 : index
    %c0_22 = arith.constant 0 : index
    %c0_23 = arith.constant 0 : index
    %21 = vector.load %arg2[%c3, %c0_22, %c0_23] : memref<6x64x64xf32, #tpu.memory_space<vmem>>, vector<1x64x64xf32>
    %22 = vector.shape_cast %21 : vector<1x64x64xf32> to vector<64x64xf32>
    %cst_24 = arith.constant dense<0.000000e+00> : vector<8x64xf32>
    %23 = tpu.matmul %16, %22, %cst_24 {dimension_numbers = #tpu.dot_dimension_numbers<[1], [0], [0], [1], [0, 0, 1, 1], [], []>} : vector<8x64xf32>, vector<64x64xf32>, vector<8x64xf32> -> vector<8x64xf32>
    %24 = arith.addf %15, %23 : vector<8x64xf32>
    %c2_25 = arith.constant 2 : index
    %c0_26 = arith.constant 0 : index
    %25 = vector.load %arg5[%c2_25, %c0_26] : memref<10x64xf32, #tpu.memory_space<vmem>>, vector<8x64xf32>
    %c4 = arith.constant 4 : index
    %c0_27 = arith.constant 0 : index
    %c0_28 = arith.constant 0 : index
    %26 = vector.load %arg2[%c4, %c0_27, %c0_28] : memref<6x64x64xf32, #tpu.memory_space<vmem>>, vector<1x64x64xf32>
    %27 = vector.shape_cast %26 : vector<1x64x64xf32> to vector<64x64xf32>
    %cst_29 = arith.constant dense<0.000000e+00> : vector<8x64xf32>
    %28 = tpu.matmul %25, %27, %cst_29 {dimension_numbers = #tpu.dot_dimension_numbers<[1], [0], [0], [1], [0, 0, 1, 1], [], []>} : vector<8x64xf32>, vector<64x64xf32>, vector<8x64xf32> -> vector<8x64xf32>
    %29 = arith.addf %20, %28 : vector<8x64xf32>
    %c5 = arith.constant 5 : index
    %c0_30 = arith.constant 0 : index
    %c0_31 = arith.constant 0 : index
    %30 = vector.load %arg2[%c5, %c0_30, %c0_31] : memref<6x64x64xf32, #tpu.memory_space<vmem>>, vector<1x64x64xf32>
    %31 = vector.shape_cast %30 : vector<1x64x64xf32> to vector<64x64xf32>
    %cst_32 = arith.constant dense<0.000000e+00> : vector<8x64xf32>
    %32 = tpu.matmul %25, %31, %cst_32 {dimension_numbers = #tpu.dot_dimension_numbers<[1], [0], [0], [1], [0, 0, 1, 1], [], []>} : vector<8x64xf32>, vector<64x64xf32>, vector<8x64xf32> -> vector<8x64xf32>
    %33 = arith.addf %24, %32 : vector<8x64xf32>
    %c0_33 = arith.constant 0 : index
    %c0_34 = arith.constant 0 : index
    %34 = vector.load %arg3[%c0_33, %c0_34] : memref<1x64xf32, #tpu.memory_space<vmem>>, vector<1x64xf32>
    %35 = vector.broadcast %34 : vector<1x64xf32> to vector<8x64xf32>
    %36 = arith.addf %29, %35 : vector<8x64xf32>
    %cst_35 = arith.constant 0.000000e+00 : f32
    %37 = vector.broadcast %cst_35 : f32 to vector<8x64xf32>
    %38 = arith.maximumf %36, %37 : vector<8x64xf32>
    %39 = vector.broadcast %34 : vector<1x64xf32> to vector<8x64xf32>
    %40 = arith.addf %33, %39 : vector<8x64xf32>
    %cst_36 = arith.constant 0.000000e+00 : f32
    %41 = vector.broadcast %cst_36 : f32 to vector<8x64xf32>
    %42 = arith.maximumf %40, %41 : vector<8x64xf32>
    %43 = arith.maximumf %38, %42 : vector<8x64xf32>
    %c0_37 = arith.constant 0 : index
    %c0_38 = arith.constant 0 : index
    %44 = vector.load %arg6[%c0_37, %c0_38] : memref<8x64xf32, #tpu.memory_space<vmem>>, vector<8x64xf32>
    tpu.vector_store %arg6[%c0_37, %c0_38], %43 {strides = array<i32>} : memref<8x64xf32, #tpu.memory_space<vmem>>, vector<8x64xf32>,
    %c0_39 = arith.constant 0 : index
    %c0_40 = arith.constant 0 : index
    %45 = vector.load %arg6[%c0_39, %c0_40] : memref<8x64xf32, #tpu.memory_space<vmem>>, vector<1x64xf32>
    %46 = vector.shape_cast %45 : vector<1x64xf32> to vector<64xf32>
    %c1_41 = arith.constant 1 : index
    %c0_42 = arith.constant 0 : index
    %47 = vector.load %arg6[%c1_41, %c0_42] : memref<8x64xf32, #tpu.memory_space<vmem>>, vector<1x64xf32>
    %48 = vector.shape_cast %47 : vector<1x64xf32> to vector<64xf32>
    %49 = arith.maximumf %46, %48 : vector<64xf32>
    %c0_43 = arith.constant 0 : index
    %c0_44 = arith.constant 0 : index
    %c0_45 = arith.constant 0 : index
    %50 = vector.load %arg4[%c0_43, %c0_44, %c0_45] : memref<1x4x64xf32, #tpu.memory_space<vmem>>, vector<1x1x64xf32>
    %51 = vector.shape_cast %50 : vector<1x1x64xf32> to vector<64xf32>
    %52 = vector.shape_cast %49 : vector<64xf32> to vector<1x1x64xf32>
    tpu.vector_store %arg4[%c0_43, %c0_44, %c0_45], %52 {strides = array<i32>} : memref<1x4x64xf32, #tpu.memory_space<vmem>>, vector<1x1x64xf32>,
    %c2_46 = arith.constant 2 : index
    %c0_47 = arith.constant 0 : index
    %53 = vector.load %arg6[%c2_46, %c0_47] : memref<8x64xf32, #tpu.memory_space<vmem>>, vector<1x64xf32>
    %54 = vector.shape_cast %53 : vector<1x64xf32> to vector<64xf32>
    %c3_48 = arith.constant 3 : index
    %c0_49 = arith.constant 0 : index
    %55 = vector.load %arg6[%c3_48, %c0_49] : memref<8x64xf32, #tpu.memory_space<vmem>>, vector<1x64xf32>
    %56 = vector.shape_cast %55 : vector<1x64xf32> to vector<64xf32>
    %57 = arith.maximumf %54, %56 : vector<64xf32>
    %c0_50 = arith.constant 0 : index
    %c1_51 = arith.constant 1 : index
    %c0_52 = arith.constant 0 : index
    %58 = vector.load %arg4[%c0_50, %c1_51, %c0_52] : memref<1x4x64xf32, #tpu.memory_space<vmem>>, vector<1x1x64xf32>
    %59 = vector.shape_cast %58 : vector<1x1x64xf32> to vector<64xf32>
    %60 = vector.shape_cast %57 : vector<64xf32> to vector<1x1x64xf32>
    tpu.vector_store %arg4[%c0_50, %c1_51, %c0_52], %60 {strides = array<i32>} : memref<1x4x64xf32, #tpu.memory_space<vmem>>, vector<1x1x64xf32>,
    %c4_53 = arith.constant 4 : index
    %c0_54 = arith.constant 0 : index
    %61 = vector.load %arg6[%c4_53, %c0_54] : memref<8x64xf32, #tpu.memory_space<vmem>>, vector<1x64xf32>
    %62 = vector.shape_cast %61 : vector<1x64xf32> to vector<64xf32>
    %c5_55 = arith.constant 5 : index
    %c0_56 = arith.constant 0 : index
    %63 = vector.load %arg6[%c5_55, %c0_56] : memref<8x64xf32, #tpu.memory_space<vmem>>, vector<1x64xf32>
    %64 = vector.shape_cast %63 : vector<1x64xf32> to vector<64xf32>
    %65 = arith.maximumf %62, %64 : vector<64xf32>
    %c0_57 = arith.constant 0 : index
    %c2_58 = arith.constant 2 : index
    %c0_59 = arith.constant 0 : index
    %66 = vector.load %arg4[%c0_57, %c2_58, %c0_59] : memref<1x4x64xf32, #tpu.memory_space<vmem>>, vector<1x1x64xf32>
    %67 = vector.shape_cast %66 : vector<1x1x64xf32> to vector<64xf32>
    %68 = vector.shape_cast %65 : vector<64xf32> to vector<1x1x64xf32>
    tpu.vector_store %arg4[%c0_57, %c2_58, %c0_59], %68 {strides = array<i32>} : memref<1x4x64xf32, #tpu.memory_space<vmem>>, vector<1x1x64xf32>,
    %c6 = arith.constant 6 : index
    %c0_60 = arith.constant 0 : index
    %69 = vector.load %arg6[%c6, %c0_60] : memref<8x64xf32, #tpu.memory_space<vmem>>, vector<1x64xf32>
    %70 = vector.shape_cast %69 : vector<1x64xf32> to vector<64xf32>
    %c7 = arith.constant 7 : index
    %c0_61 = arith.constant 0 : index
    %71 = vector.load %arg6[%c7, %c0_61] : memref<8x64xf32, #tpu.memory_space<vmem>>, vector<1x64xf32>
    %72 = vector.shape_cast %71 : vector<1x64xf32> to vector<64xf32>
    %73 = arith.maximumf %70, %72 : vector<64xf32>
    %c0_62 = arith.constant 0 : index
    %c3_63 = arith.constant 3 : index
    %c0_64 = arith.constant 0 : index
    %74 = vector.load %arg4[%c0_62, %c3_63, %c0_64] : memref<1x4x64xf32, #tpu.memory_space<vmem>>, vector<1x1x64xf32>
    %75 = vector.shape_cast %74 : vector<1x1x64xf32> to vector<64xf32>
    %76 = vector.shape_cast %73 : vector<64xf32> to vector<1x1x64xf32>
    tpu.vector_store %arg4[%c0_62, %c3_63, %c0_64], %76 {strides = array<i32>} : memref<1x4x64xf32, #tpu.memory_space<vmem>>, vector<1x1x64xf32>,
    return
  }
  func.func @transform_0(%arg0: i32) -> (i32, i32, i32) {
    %c0_i32 = arith.constant 0 : i32
    %c0_i32_0 = arith.constant 0 : i32
    %c0_i32_1 = arith.constant 0 : i32
    return %arg0, %c0_i32, %c0_i32_0 : i32, i32, i32
  }
  func.func @transform_1(%arg0: i32) -> (i32, i32, i32) {
    %c0_i32 = arith.constant 0 : i32
    %c0_i32_0 = arith.constant 0 : i32
    %c0_i32_1 = arith.constant 0 : i32
    %c0_i32_2 = arith.constant 0 : i32
    return %c0_i32, %c0_i32_0, %c0_i32_1 : i32, i32, i32
  }
  func.func @transform_2(%arg0: i32) -> (i32, i32) {
    %c0_i32 = arith.constant 0 : i32
    %c0_i32_0 = arith.constant 0 : i32
    %c0_i32_1 = arith.constant 0 : i32
    return %c0_i32, %c0_i32_0 : i32, i32
  }
  func.func @transform_3(%arg0: i32) -> (i32, i32, i32) {
    %c0_i32 = arith.constant 0 : i32
    %c0_i32_0 = arith.constant 0 : i32
    %c0_i32_1 = arith.constant 0 : i32
    return %arg0, %c0_i32, %c0_i32_0 : i32, i32, i32
  }
}

module attributes {stable_mosaic.version = 11 : i64} {
  func.func @_bn_lastconv_kernel(%arg0: i32, %arg1: memref<8x64xf32, #tpu.memory_space<vmem>>, %arg2: memref<64x16xf32, #tpu.memory_space<vmem>>, %arg3: memref<16x64xf32, #tpu.memory_space<vmem>>, %arg4: memref<1x16xf32, #tpu.memory_space<vmem>>, %arg5: memref<1x16xf32, #tpu.memory_space<vmem>>, %arg6: memref<3x64x64xf32, #tpu.memory_space<vmem>>, %arg7: memref<1x64xf32, #tpu.memory_space<vmem>>, %arg8: memref<2x4x64xf32, #tpu.memory_space<vmem>>, %arg9: memref<6x64xf32, #tpu.memory_space<vmem>>) attributes {dimension_semantics = [#tpu.dimension_semantics<arbitrary>], iteration_bounds = array<i64: 1>, scalar_prefetch = 0 : i64, scratch_operands = 1 : i64, tpu.core_type = #tpu.core_type<tc>, window_params = [{pipeline_mode = #tpu.pipeline_mode<synchronous>, transform_indices = @transform_0, window_bounds = array<i64: 8, 64>}, {pipeline_mode = #tpu.pipeline_mode<synchronous>, transform_indices = @transform_1, window_bounds = array<i64: 64, 16>}, {pipeline_mode = #tpu.pipeline_mode<synchronous>, transform_indices = @transform_2, window_bounds = array<i64: 16, 64>}, {pipeline_mode = #tpu.pipeline_mode<synchronous>, transform_indices = @transform_3, window_bounds = array<i64: 1, 16>}, {pipeline_mode = #tpu.pipeline_mode<synchronous>, transform_indices = @transform_4, window_bounds = array<i64: 1, 16>}, {pipeline_mode = #tpu.pipeline_mode<synchronous>, transform_indices = @transform_5, window_bounds = array<i64: 3, 64, 64>}, {pipeline_mode = #tpu.pipeline_mode<synchronous>, transform_indices = @transform_6, window_bounds = array<i64: 1, 64>}, {pipeline_mode = #tpu.pipeline_mode<synchronous>, transform_indices = @transform_7, window_bounds = array<i64: 2, 4, 64>}]} {
    %c0 = arith.constant 0 : index
    %c0_0 = arith.constant 0 : index
    %0 = vector.load %arg1[%c0, %c0_0] : memref<8x64xf32, #tpu.memory_space<vmem>>, vector<8x64xf32>
    %cst = arith.constant dense<0.000000e+00> : vector<64xf32>
    %1 = vector.multi_reduction <add>, %0, %cst [0] : vector<8x64xf32> to vector<64xf32>
    %2 = vector.shape_cast %1 : vector<64xf32> to vector<1x64xf32>
    %c0_1 = arith.constant 0 : index
    %c0_2 = arith.constant 0 : index
    %3 = vector.load %arg2[%c0_1, %c0_2] : memref<64x16xf32, #tpu.memory_space<vmem>>, vector<64x16xf32>
    %cst_3 = arith.constant dense<0.000000e+00> : vector<1x16xf32>
    %4 = tpu.matmul %2, %3, %cst_3 {dimension_numbers = #tpu.dot_dimension_numbers<[1], [0], [0], [1], [0, 0, 1, 1], [], []>} : vector<1x64xf32>, vector<64x16xf32>, vector<1x16xf32> -> vector<1x16xf32>
    %cst_4 = arith.constant 3.200000e+01 : f32
    %5 = vector.broadcast %cst_4 : f32 to vector<1x16xf32>
    %6 = arith.divf %4, %5 : vector<1x16xf32>
    %c0_5 = arith.constant 0 : index
    %c0_6 = arith.constant 0 : index
    %7 = vector.load %arg3[%c0_5, %c0_6] : memref<16x64xf32, #tpu.memory_space<vmem>>, vector<16x64xf32>
    %cst_7 = arith.constant dense<0.000000e+00> : vector<1x64xf32>
    %8 = tpu.matmul %6, %7, %cst_7 {dimension_numbers = #tpu.dot_dimension_numbers<[1], [0], [0], [1], [0, 0, 1, 1], [], []>} : vector<1x16xf32>, vector<16x64xf32>, vector<1x64xf32> -> vector<1x64xf32>
    %9 = vector.broadcast %8 : vector<1x64xf32> to vector<8x64xf32>
    %10 = arith.subf %0, %9 : vector<8x64xf32>
    %11 = arith.mulf %10, %10 : vector<8x64xf32>
    %cst_8 = arith.constant dense<0.000000e+00> : vector<64xf32>
    %12 = vector.multi_reduction <add>, %11, %cst_8 [0] : vector<8x64xf32> to vector<64xf32>
    %13 = vector.shape_cast %12 : vector<64xf32> to vector<1x64xf32>
    %c0_9 = arith.constant 0 : index
    %c0_10 = arith.constant 0 : index
    %14 = vector.load %arg2[%c0_9, %c0_10] : memref<64x16xf32, #tpu.memory_space<vmem>>, vector<64x16xf32>
    %cst_11 = arith.constant dense<0.000000e+00> : vector<1x16xf32>
    %15 = tpu.matmul %13, %14, %cst_11 {dimension_numbers = #tpu.dot_dimension_numbers<[1], [0], [0], [1], [0, 0, 1, 1], [], []>} : vector<1x64xf32>, vector<64x16xf32>, vector<1x16xf32> -> vector<1x16xf32>
    %cst_12 = arith.constant 3.200000e+01 : f32
    %16 = vector.broadcast %cst_12 : f32 to vector<1x16xf32>
    %17 = arith.divf %15, %16 : vector<1x16xf32>
    %cst_13 = arith.constant 9.99999974E-6 : f32
    %18 = vector.broadcast %cst_13 : f32 to vector<1x16xf32>
    %19 = arith.addf %17, %18 : vector<1x16xf32>
    %20 = math.rsqrt %19 : vector<1x16xf32>
    %c0_14 = arith.constant 0 : index
    %c0_15 = arith.constant 0 : index
    %21 = vector.load %arg4[%c0_14, %c0_15] : memref<1x16xf32, #tpu.memory_space<vmem>>, vector<1x16xf32>
    %22 = arith.mulf %21, %20 : vector<1x16xf32>
    %c0_16 = arith.constant 0 : index
    %c0_17 = arith.constant 0 : index
    %23 = vector.load %arg5[%c0_16, %c0_17] : memref<1x16xf32, #tpu.memory_space<vmem>>, vector<1x16xf32>
    %24 = arith.mulf %6, %22 : vector<1x16xf32>
    %25 = arith.subf %23, %24 : vector<1x16xf32>
    %c0_18 = arith.constant 0 : index
    %c0_19 = arith.constant 0 : index
    %26 = vector.load %arg3[%c0_18, %c0_19] : memref<16x64xf32, #tpu.memory_space<vmem>>, vector<16x64xf32>
    %cst_20 = arith.constant dense<0.000000e+00> : vector<1x64xf32>
    %27 = tpu.matmul %22, %26, %cst_20 {dimension_numbers = #tpu.dot_dimension_numbers<[1], [0], [0], [1], [0, 0, 1, 1], [], []>} : vector<1x16xf32>, vector<16x64xf32>, vector<1x64xf32> -> vector<1x64xf32>
    %c0_21 = arith.constant 0 : index
    %c0_22 = arith.constant 0 : index
    %28 = vector.load %arg3[%c0_21, %c0_22] : memref<16x64xf32, #tpu.memory_space<vmem>>, vector<16x64xf32>
    %cst_23 = arith.constant dense<0.000000e+00> : vector<1x64xf32>
    %29 = tpu.matmul %25, %28, %cst_23 {dimension_numbers = #tpu.dot_dimension_numbers<[1], [0], [0], [1], [0, 0, 1, 1], [], []>} : vector<1x16xf32>, vector<16x64xf32>, vector<1x64xf32> -> vector<1x64xf32>
    %c0_24 = arith.constant 0 : index
    %c0_25 = arith.constant 0 : index
    %30 = vector.load %arg7[%c0_24, %c0_25] : memref<1x64xf32, #tpu.memory_space<vmem>>, vector<1x64xf32>
    %c0_26 = arith.constant 0 : index
    %c0_27 = arith.constant 0 : index
    %31 = vector.load %arg1[%c0_26, %c0_27] : memref<8x64xf32, #tpu.memory_space<vmem>>, vector<4x64xf32>
    %32 = vector.broadcast %27 : vector<1x64xf32> to vector<4x64xf32>
    %33 = arith.mulf %31, %32 : vector<4x64xf32>
    %34 = vector.broadcast %29 : vector<1x64xf32> to vector<4x64xf32>
    %35 = arith.addf %33, %34 : vector<4x64xf32>
    %cst_28 = arith.constant 0.000000e+00 : f32
    %36 = vector.broadcast %cst_28 : f32 to vector<6x64xf32>
    %c0_29 = arith.constant 0 : index
    %c0_30 = arith.constant 0 : index
    %37 = vector.load %arg9[%c0_29, %c0_30] : memref<6x64xf32, #tpu.memory_space<vmem>>, vector<6x64xf32>
    tpu.vector_store %arg9[%c0_29, %c0_30], %36 {strides = array<i32>} : memref<6x64xf32, #tpu.memory_space<vmem>>, vector<6x64xf32>,
    %c1 = arith.constant 1 : index
    %c0_31 = arith.constant 0 : index
    %38 = vector.load %arg9[%c1, %c0_31] : memref<6x64xf32, #tpu.memory_space<vmem>>, vector<4x64xf32>
    tpu.vector_store %arg9[%c1, %c0_31], %35 {strides = array<i32>} : memref<6x64xf32, #tpu.memory_space<vmem>>, vector<4x64xf32>,
    %cst_32 = arith.constant 0.000000e+00 : f32
    %39 = vector.broadcast %cst_32 : f32 to vector<4x64xf32>
    %c0_33 = arith.constant 0 : index
    %c0_34 = arith.constant 0 : index
    %40 = vector.load %arg9[%c0_33, %c0_34] : memref<6x64xf32, #tpu.memory_space<vmem>>, vector<4x64xf32>
    %c0_35 = arith.constant 0 : index
    %c0_36 = arith.constant 0 : index
    %c0_37 = arith.constant 0 : index
    %41 = vector.load %arg6[%c0_35, %c0_36, %c0_37] : memref<3x64x64xf32, #tpu.memory_space<vmem>>, vector<1x64x64xf32>
    %42 = vector.shape_cast %41 : vector<1x64x64xf32> to vector<64x64xf32>
    %cst_38 = arith.constant dense<0.000000e+00> : vector<4x64xf32>
    %43 = tpu.matmul %40, %42, %cst_38 {dimension_numbers = #tpu.dot_dimension_numbers<[1], [0], [0], [1], [0, 0, 1, 1], [], []>} : vector<4x64xf32>, vector<64x64xf32>, vector<4x64xf32> -> vector<4x64xf32>
    %44 = arith.addf %39, %43 : vector<4x64xf32>
    %c1_39 = arith.constant 1 : index
    %c0_40 = arith.constant 0 : index
    %45 = vector.load %arg9[%c1_39, %c0_40] : memref<6x64xf32, #tpu.memory_space<vmem>>, vector<4x64xf32>
    %c1_41 = arith.constant 1 : index
    %c0_42 = arith.constant 0 : index
    %c0_43 = arith.constant 0 : index
    %46 = vector.load %arg6[%c1_41, %c0_42, %c0_43] : memref<3x64x64xf32, #tpu.memory_space<vmem>>, vector<1x64x64xf32>
    %47 = vector.shape_cast %46 : vector<1x64x64xf32> to vector<64x64xf32>
    %cst_44 = arith.constant dense<0.000000e+00> : vector<4x64xf32>
    %48 = tpu.matmul %45, %47, %cst_44 {dimension_numbers = #tpu.dot_dimension_numbers<[1], [0], [0], [1], [0, 0, 1, 1], [], []>} : vector<4x64xf32>, vector<64x64xf32>, vector<4x64xf32> -> vector<4x64xf32>
    %49 = arith.addf %44, %48 : vector<4x64xf32>
    %c2 = arith.constant 2 : index
    %c0_45 = arith.constant 0 : index
    %50 = vector.load %arg9[%c2, %c0_45] : memref<6x64xf32, #tpu.memory_space<vmem>>, vector<4x64xf32>
    %c2_46 = arith.constant 2 : index
    %c0_47 = arith.constant 0 : index
    %c0_48 = arith.constant 0 : index
    %51 = vector.load %arg6[%c2_46, %c0_47, %c0_48] : memref<3x64x64xf32, #tpu.memory_space<vmem>>, vector<1x64x64xf32>
    %52 = vector.shape_cast %51 : vector<1x64x64xf32> to vector<64x64xf32>
    %cst_49 = arith.constant dense<0.000000e+00> : vector<4x64xf32>
    %53 = tpu.matmul %50, %52, %cst_49 {dimension_numbers = #tpu.dot_dimension_numbers<[1], [0], [0], [1], [0, 0, 1, 1], [], []>} : vector<4x64xf32>, vector<64x64xf32>, vector<4x64xf32> -> vector<4x64xf32>
    %54 = arith.addf %49, %53 : vector<4x64xf32>
    %55 = vector.broadcast %30 : vector<1x64xf32> to vector<4x64xf32>
    %56 = arith.addf %54, %55 : vector<4x64xf32>
    %c0_50 = arith.constant 0 : index
    %c0_51 = arith.constant 0 : index
    %c0_52 = arith.constant 0 : index
    %57 = vector.load %arg8[%c0_50, %c0_51, %c0_52] : memref<2x4x64xf32, #tpu.memory_space<vmem>>, vector<1x4x64xf32>
    %58 = vector.shape_cast %57 : vector<1x4x64xf32> to vector<4x64xf32>
    %59 = vector.shape_cast %56 : vector<4x64xf32> to vector<1x4x64xf32>
    tpu.vector_store %arg8[%c0_50, %c0_51, %c0_52], %59 {strides = array<i32>} : memref<2x4x64xf32, #tpu.memory_space<vmem>>, vector<1x4x64xf32>,
    %c4 = arith.constant 4 : index
    %c0_53 = arith.constant 0 : index
    %60 = vector.load %arg1[%c4, %c0_53] : memref<8x64xf32, #tpu.memory_space<vmem>>, vector<4x64xf32>
    %61 = vector.broadcast %27 : vector<1x64xf32> to vector<4x64xf32>
    %62 = arith.mulf %60, %61 : vector<4x64xf32>
    %63 = vector.broadcast %29 : vector<1x64xf32> to vector<4x64xf32>
    %64 = arith.addf %62, %63 : vector<4x64xf32>
    %cst_54 = arith.constant 0.000000e+00 : f32
    %65 = vector.broadcast %cst_54 : f32 to vector<6x64xf32>
    %c0_55 = arith.constant 0 : index
    %c0_56 = arith.constant 0 : index
    %66 = vector.load %arg9[%c0_55, %c0_56] : memref<6x64xf32, #tpu.memory_space<vmem>>, vector<6x64xf32>
    tpu.vector_store %arg9[%c0_55, %c0_56], %65 {strides = array<i32>} : memref<6x64xf32, #tpu.memory_space<vmem>>, vector<6x64xf32>,
    %c1_57 = arith.constant 1 : index
    %c0_58 = arith.constant 0 : index
    %67 = vector.load %arg9[%c1_57, %c0_58] : memref<6x64xf32, #tpu.memory_space<vmem>>, vector<4x64xf32>
    tpu.vector_store %arg9[%c1_57, %c0_58], %64 {strides = array<i32>} : memref<6x64xf32, #tpu.memory_space<vmem>>, vector<4x64xf32>,
    %cst_59 = arith.constant 0.000000e+00 : f32
    %68 = vector.broadcast %cst_59 : f32 to vector<4x64xf32>
    %c0_60 = arith.constant 0 : index
    %c0_61 = arith.constant 0 : index
    %69 = vector.load %arg9[%c0_60, %c0_61] : memref<6x64xf32, #tpu.memory_space<vmem>>, vector<4x64xf32>
    %c0_62 = arith.constant 0 : index
    %c0_63 = arith.constant 0 : index
    %c0_64 = arith.constant 0 : index
    %70 = vector.load %arg6[%c0_62, %c0_63, %c0_64] : memref<3x64x64xf32, #tpu.memory_space<vmem>>, vector<1x64x64xf32>
    %71 = vector.shape_cast %70 : vector<1x64x64xf32> to vector<64x64xf32>
    %cst_65 = arith.constant dense<0.000000e+00> : vector<4x64xf32>
    %72 = tpu.matmul %69, %71, %cst_65 {dimension_numbers = #tpu.dot_dimension_numbers<[1], [0], [0], [1], [0, 0, 1, 1], [], []>} : vector<4x64xf32>, vector<64x64xf32>, vector<4x64xf32> -> vector<4x64xf32>
    %73 = arith.addf %68, %72 : vector<4x64xf32>
    %c1_66 = arith.constant 1 : index
    %c0_67 = arith.constant 0 : index
    %74 = vector.load %arg9[%c1_66, %c0_67] : memref<6x64xf32, #tpu.memory_space<vmem>>, vector<4x64xf32>
    %c1_68 = arith.constant 1 : index
    %c0_69 = arith.constant 0 : index
    %c0_70 = arith.constant 0 : index
    %75 = vector.load %arg6[%c1_68, %c0_69, %c0_70] : memref<3x64x64xf32, #tpu.memory_space<vmem>>, vector<1x64x64xf32>
    %76 = vector.shape_cast %75 : vector<1x64x64xf32> to vector<64x64xf32>
    %cst_71 = arith.constant dense<0.000000e+00> : vector<4x64xf32>
    %77 = tpu.matmul %74, %76, %cst_71 {dimension_numbers = #tpu.dot_dimension_numbers<[1], [0], [0], [1], [0, 0, 1, 1], [], []>} : vector<4x64xf32>, vector<64x64xf32>, vector<4x64xf32> -> vector<4x64xf32>
    %78 = arith.addf %73, %77 : vector<4x64xf32>
    %c2_72 = arith.constant 2 : index
    %c0_73 = arith.constant 0 : index
    %79 = vector.load %arg9[%c2_72, %c0_73] : memref<6x64xf32, #tpu.memory_space<vmem>>, vector<4x64xf32>
    %c2_74 = arith.constant 2 : index
    %c0_75 = arith.constant 0 : index
    %c0_76 = arith.constant 0 : index
    %80 = vector.load %arg6[%c2_74, %c0_75, %c0_76] : memref<3x64x64xf32, #tpu.memory_space<vmem>>, vector<1x64x64xf32>
    %81 = vector.shape_cast %80 : vector<1x64x64xf32> to vector<64x64xf32>
    %cst_77 = arith.constant dense<0.000000e+00> : vector<4x64xf32>
    %82 = tpu.matmul %79, %81, %cst_77 {dimension_numbers = #tpu.dot_dimension_numbers<[1], [0], [0], [1], [0, 0, 1, 1], [], []>} : vector<4x64xf32>, vector<64x64xf32>, vector<4x64xf32> -> vector<4x64xf32>
    %83 = arith.addf %78, %82 : vector<4x64xf32>
    %84 = vector.broadcast %30 : vector<1x64xf32> to vector<4x64xf32>
    %85 = arith.addf %83, %84 : vector<4x64xf32>
    %c1_78 = arith.constant 1 : index
    %c0_79 = arith.constant 0 : index
    %c0_80 = arith.constant 0 : index
    %86 = vector.load %arg8[%c1_78, %c0_79, %c0_80] : memref<2x4x64xf32, #tpu.memory_space<vmem>>, vector<1x4x64xf32>
    %87 = vector.shape_cast %86 : vector<1x4x64xf32> to vector<4x64xf32>
    %88 = vector.shape_cast %85 : vector<4x64xf32> to vector<1x4x64xf32>
    tpu.vector_store %arg8[%c1_78, %c0_79, %c0_80], %88 {strides = array<i32>} : memref<2x4x64xf32, #tpu.memory_space<vmem>>, vector<1x4x64xf32>,
    return
  }
  func.func @transform_0(%arg0: i32) -> (i32, i32) {
    %c0_i32 = arith.constant 0 : i32
    %c0_i32_0 = arith.constant 0 : i32
    %c0_i32_1 = arith.constant 0 : i32
    return %c0_i32, %c0_i32_0 : i32, i32
  }
  func.func @transform_1(%arg0: i32) -> (i32, i32) {
    %c0_i32 = arith.constant 0 : i32
    %c0_i32_0 = arith.constant 0 : i32
    %c0_i32_1 = arith.constant 0 : i32
    return %c0_i32, %c0_i32_0 : i32, i32
  }
  func.func @transform_2(%arg0: i32) -> (i32, i32) {
    %c0_i32 = arith.constant 0 : i32
    %c0_i32_0 = arith.constant 0 : i32
    %c0_i32_1 = arith.constant 0 : i32
    return %c0_i32, %c0_i32_0 : i32, i32
  }
  func.func @transform_3(%arg0: i32) -> (i32, i32) {
    %c0_i32 = arith.constant 0 : i32
    %c0_i32_0 = arith.constant 0 : i32
    %c0_i32_1 = arith.constant 0 : i32
    return %c0_i32, %c0_i32_0 : i32, i32
  }
  func.func @transform_4(%arg0: i32) -> (i32, i32) {
    %c0_i32 = arith.constant 0 : i32
    %c0_i32_0 = arith.constant 0 : i32
    %c0_i32_1 = arith.constant 0 : i32
    return %c0_i32, %c0_i32_0 : i32, i32
  }
  func.func @transform_5(%arg0: i32) -> (i32, i32, i32) {
    %c0_i32 = arith.constant 0 : i32
    %c0_i32_0 = arith.constant 0 : i32
    %c0_i32_1 = arith.constant 0 : i32
    %c0_i32_2 = arith.constant 0 : i32
    return %c0_i32, %c0_i32_0, %c0_i32_1 : i32, i32, i32
  }
  func.func @transform_6(%arg0: i32) -> (i32, i32) {
    %c0_i32 = arith.constant 0 : i32
    %c0_i32_0 = arith.constant 0 : i32
    %c0_i32_1 = arith.constant 0 : i32
    return %c0_i32, %c0_i32_0 : i32, i32
  }
  func.func @transform_7(%arg0: i32) -> (i32, i32, i32) {
    %c0_i32 = arith.constant 0 : i32
    %c0_i32_0 = arith.constant 0 : i32
    %c0_i32_1 = arith.constant 0 : i32
    %c0_i32_2 = arith.constant 0 : i32
    return %c0_i32, %c0_i32_0, %c0_i32_1 : i32, i32, i32
  }
}

module attributes {stable_mosaic.version = 11 : i64} {
  func.func @_dec_kernel(%arg0: i32, %arg1: memref<1x4x64xf32, #tpu.memory_space<vmem>>, %arg2: memref<1x4x64xf32, #tpu.memory_space<vmem>>, %arg3: memref<2x64x64xf32, #tpu.memory_space<vmem>>, %arg4: memref<2x64x64xf32, #tpu.memory_space<vmem>>, %arg5: memref<1x64xf32, #tpu.memory_space<vmem>>, %arg6: memref<1x8x64xf32, #tpu.memory_space<vmem>>, %arg7: memref<4x64xf32, #tpu.memory_space<vmem>>, %arg8: memref<4x64xf32, #tpu.memory_space<vmem>>) attributes {dimension_semantics = [#tpu.dimension_semantics<parallel>], iteration_bounds = array<i64: 2>, scalar_prefetch = 0 : i64, scratch_operands = 2 : i64, tpu.core_type = #tpu.core_type<tc>, window_params = [{transform_indices = @transform_0, window_bounds = array<i64: 1, 4, 64>}, {transform_indices = @transform_1, window_bounds = array<i64: 1, 4, 64>}, {pipeline_mode = #tpu.pipeline_mode<synchronous>, transform_indices = @transform_2, window_bounds = array<i64: 2, 64, 64>}, {pipeline_mode = #tpu.pipeline_mode<synchronous>, transform_indices = @transform_3, window_bounds = array<i64: 2, 64, 64>}, {pipeline_mode = #tpu.pipeline_mode<synchronous>, transform_indices = @transform_4, window_bounds = array<i64: 1, 64>}, {transform_indices = @transform_5, window_bounds = array<i64: 1, 8, 64>}]} {
    %c0 = arith.constant 0 : index
    %c0_0 = arith.constant 0 : index
    %c0_1 = arith.constant 0 : index
    %0 = vector.load %arg1[%c0, %c0_0, %c0_1] : memref<1x4x64xf32, #tpu.memory_space<vmem>>, vector<1x4x64xf32>
    %1 = vector.shape_cast %0 : vector<1x4x64xf32> to vector<4x64xf32>
    %cst = arith.constant 0.000000e+00 : f32
    %2 = vector.broadcast %cst : f32 to vector<4x64xf32>
    %3 = arith.maximumf %1, %2 : vector<4x64xf32>
    %c0_2 = arith.constant 0 : index
    %c0_3 = arith.constant 0 : index
    %c0_4 = arith.constant 0 : index
    %4 = vector.load %arg2[%c0_2, %c0_3, %c0_4] : memref<1x4x64xf32, #tpu.memory_space<vmem>>, vector<1x4x64xf32>
    %5 = vector.shape_cast %4 : vector<1x4x64xf32> to vector<4x64xf32>
    %c0_5 = arith.constant 0 : index
    %c0_6 = arith.constant 0 : index
    %6 = vector.load %arg5[%c0_5, %c0_6] : memref<1x64xf32, #tpu.memory_space<vmem>>, vector<1x64xf32>
    %c0_7 = arith.constant 0 : index
    %c0_8 = arith.constant 0 : index
    %c0_9 = arith.constant 0 : index
    %7 = vector.load %arg3[%c0_7, %c0_8, %c0_9] : memref<2x64x64xf32, #tpu.memory_space<vmem>>, vector<1x64x64xf32>
    %8 = vector.shape_cast %7 : vector<1x64x64xf32> to vector<64x64xf32>
    %cst_10 = arith.constant dense<0.000000e+00> : vector<4x64xf32>
    %9 = tpu.matmul %3, %8, %cst_10 {dimension_numbers = #tpu.dot_dimension_numbers<[1], [0], [0], [1], [0, 0, 1, 1], [], []>} : vector<4x64xf32>, vector<64x64xf32>, vector<4x64xf32> -> vector<4x64xf32>
    %c0_11 = arith.constant 0 : index
    %c0_12 = arith.constant 0 : index
    %c0_13 = arith.constant 0 : index
    %10 = vector.load %arg4[%c0_11, %c0_12, %c0_13] : memref<2x64x64xf32, #tpu.memory_space<vmem>>, vector<1x64x64xf32>
    %11 = vector.shape_cast %10 : vector<1x64x64xf32> to vector<64x64xf32>
    %cst_14 = arith.constant dense<0.000000e+00> : vector<4x64xf32>
    %12 = tpu.matmul %5, %11, %cst_14 {dimension_numbers = #tpu.dot_dimension_numbers<[1], [0], [0], [1], [0, 0, 1, 1], [], []>} : vector<4x64xf32>, vector<64x64xf32>, vector<4x64xf32> -> vector<4x64xf32>
    %13 = arith.addf %9, %12 : vector<4x64xf32>
    %14 = vector.broadcast %6 : vector<1x64xf32> to vector<4x64xf32>
    %15 = arith.addf %13, %14 : vector<4x64xf32>
    %c0_15 = arith.constant 0 : index
    %c0_16 = arith.constant 0 : index
    %16 = vector.load %arg7[%c0_15, %c0_16] : memref<4x64xf32, #tpu.memory_space<vmem>>, vector<4x64xf32>
    tpu.vector_store %arg7[%c0_15, %c0_16], %15 {strides = array<i32>} : memref<4x64xf32, #tpu.memory_space<vmem>>, vector<4x64xf32>,
    %c1 = arith.constant 1 : index
    %c0_17 = arith.constant 0 : index
    %c0_18 = arith.constant 0 : index
    %17 = vector.load %arg3[%c1, %c0_17, %c0_18] : memref<2x64x64xf32, #tpu.memory_space<vmem>>, vector<1x64x64xf32>
    %18 = vector.shape_cast %17 : vector<1x64x64xf32> to vector<64x64xf32>
    %cst_19 = arith.constant dense<0.000000e+00> : vector<4x64xf32>
    %19 = tpu.matmul %3, %18, %cst_19 {dimension_numbers = #tpu.dot_dimension_numbers<[1], [0], [0], [1], [0, 0, 1, 1], [], []>} : vector<4x64xf32>, vector<64x64xf32>, vector<4x64xf32> -> vector<4x64xf32>
    %c1_20 = arith.constant 1 : index
    %c0_21 = arith.constant 0 : index
    %c0_22 = arith.constant 0 : index
    %20 = vector.load %arg4[%c1_20, %c0_21, %c0_22] : memref<2x64x64xf32, #tpu.memory_space<vmem>>, vector<1x64x64xf32>
    %21 = vector.shape_cast %20 : vector<1x64x64xf32> to vector<64x64xf32>
    %cst_23 = arith.constant dense<0.000000e+00> : vector<4x64xf32>
    %22 = tpu.matmul %5, %21, %cst_23 {dimension_numbers = #tpu.dot_dimension_numbers<[1], [0], [0], [1], [0, 0, 1, 1], [], []>} : vector<4x64xf32>, vector<64x64xf32>, vector<4x64xf32> -> vector<4x64xf32>
    %23 = arith.addf %19, %22 : vector<4x64xf32>
    %24 = vector.broadcast %6 : vector<1x64xf32> to vector<4x64xf32>
    %25 = arith.addf %23, %24 : vector<4x64xf32>
    %c0_24 = arith.constant 0 : index
    %c0_25 = arith.constant 0 : index
    %26 = vector.load %arg8[%c0_24, %c0_25] : memref<4x64xf32, #tpu.memory_space<vmem>>, vector<4x64xf32>
    tpu.vector_store %arg8[%c0_24, %c0_25], %25 {strides = array<i32>} : memref<4x64xf32, #tpu.memory_space<vmem>>, vector<4x64xf32>,
    %c0_26 = arith.constant 0 : index
    %c0_27 = arith.constant 0 : index
    %27 = vector.load %arg7[%c0_26, %c0_27] : memref<4x64xf32, #tpu.memory_space<vmem>>, vector<1x64xf32>
    %28 = vector.shape_cast %27 : vector<1x64xf32> to vector<64xf32>
    %c0_28 = arith.constant 0 : index
    %c0_29 = arith.constant 0 : index
    %c0_30 = arith.constant 0 : index
    %29 = vector.load %arg6[%c0_28, %c0_29, %c0_30] : memref<1x8x64xf32, #tpu.memory_space<vmem>>, vector<1x1x64xf32>
    %30 = vector.shape_cast %29 : vector<1x1x64xf32> to vector<64xf32>
    %31 = vector.shape_cast %28 : vector<64xf32> to vector<1x1x64xf32>
    tpu.vector_store %arg6[%c0_28, %c0_29, %c0_30], %31 {strides = array<i32>} : memref<1x8x64xf32, #tpu.memory_space<vmem>>, vector<1x1x64xf32>,
    %c0_31 = arith.constant 0 : index
    %c0_32 = arith.constant 0 : index
    %32 = vector.load %arg8[%c0_31, %c0_32] : memref<4x64xf32, #tpu.memory_space<vmem>>, vector<1x64xf32>
    %33 = vector.shape_cast %32 : vector<1x64xf32> to vector<64xf32>
    %c0_33 = arith.constant 0 : index
    %c1_34 = arith.constant 1 : index
    %c0_35 = arith.constant 0 : index
    %34 = vector.load %arg6[%c0_33, %c1_34, %c0_35] : memref<1x8x64xf32, #tpu.memory_space<vmem>>, vector<1x1x64xf32>
    %35 = vector.shape_cast %34 : vector<1x1x64xf32> to vector<64xf32>
    %36 = vector.shape_cast %33 : vector<64xf32> to vector<1x1x64xf32>
    tpu.vector_store %arg6[%c0_33, %c1_34, %c0_35], %36 {strides = array<i32>} : memref<1x8x64xf32, #tpu.memory_space<vmem>>, vector<1x1x64xf32>,
    %c1_36 = arith.constant 1 : index
    %c0_37 = arith.constant 0 : index
    %37 = vector.load %arg7[%c1_36, %c0_37] : memref<4x64xf32, #tpu.memory_space<vmem>>, vector<1x64xf32>
    %38 = vector.shape_cast %37 : vector<1x64xf32> to vector<64xf32>
    %c0_38 = arith.constant 0 : index
    %c2 = arith.constant 2 : index
    %c0_39 = arith.constant 0 : index
    %39 = vector.load %arg6[%c0_38, %c2, %c0_39] : memref<1x8x64xf32, #tpu.memory_space<vmem>>, vector<1x1x64xf32>
    %40 = vector.shape_cast %39 : vector<1x1x64xf32> to vector<64xf32>
    %41 = vector.shape_cast %38 : vector<64xf32> to vector<1x1x64xf32>
    tpu.vector_store %arg6[%c0_38, %c2, %c0_39], %41 {strides = array<i32>} : memref<1x8x64xf32, #tpu.memory_space<vmem>>, vector<1x1x64xf32>,
    %c1_40 = arith.constant 1 : index
    %c0_41 = arith.constant 0 : index
    %42 = vector.load %arg8[%c1_40, %c0_41] : memref<4x64xf32, #tpu.memory_space<vmem>>, vector<1x64xf32>
    %43 = vector.shape_cast %42 : vector<1x64xf32> to vector<64xf32>
    %c0_42 = arith.constant 0 : index
    %c3 = arith.constant 3 : index
    %c0_43 = arith.constant 0 : index
    %44 = vector.load %arg6[%c0_42, %c3, %c0_43] : memref<1x8x64xf32, #tpu.memory_space<vmem>>, vector<1x1x64xf32>
    %45 = vector.shape_cast %44 : vector<1x1x64xf32> to vector<64xf32>
    %46 = vector.shape_cast %43 : vector<64xf32> to vector<1x1x64xf32>
    tpu.vector_store %arg6[%c0_42, %c3, %c0_43], %46 {strides = array<i32>} : memref<1x8x64xf32, #tpu.memory_space<vmem>>, vector<1x1x64xf32>,
    %c2_44 = arith.constant 2 : index
    %c0_45 = arith.constant 0 : index
    %47 = vector.load %arg7[%c2_44, %c0_45] : memref<4x64xf32, #tpu.memory_space<vmem>>, vector<1x64xf32>
    %48 = vector.shape_cast %47 : vector<1x64xf32> to vector<64xf32>
    %c0_46 = arith.constant 0 : index
    %c4 = arith.constant 4 : index
    %c0_47 = arith.constant 0 : index
    %49 = vector.load %arg6[%c0_46, %c4, %c0_47] : memref<1x8x64xf32, #tpu.memory_space<vmem>>, vector<1x1x64xf32>
    %50 = vector.shape_cast %49 : vector<1x1x64xf32> to vector<64xf32>
    %51 = vector.shape_cast %48 : vector<64xf32> to vector<1x1x64xf32>
    tpu.vector_store %arg6[%c0_46, %c4, %c0_47], %51 {strides = array<i32>} : memref<1x8x64xf32, #tpu.memory_space<vmem>>, vector<1x1x64xf32>,
    %c2_48 = arith.constant 2 : index
    %c0_49 = arith.constant 0 : index
    %52 = vector.load %arg8[%c2_48, %c0_49] : memref<4x64xf32, #tpu.memory_space<vmem>>, vector<1x64xf32>
    %53 = vector.shape_cast %52 : vector<1x64xf32> to vector<64xf32>
    %c0_50 = arith.constant 0 : index
    %c5 = arith.constant 5 : index
    %c0_51 = arith.constant 0 : index
    %54 = vector.load %arg6[%c0_50, %c5, %c0_51] : memref<1x8x64xf32, #tpu.memory_space<vmem>>, vector<1x1x64xf32>
    %55 = vector.shape_cast %54 : vector<1x1x64xf32> to vector<64xf32>
    %56 = vector.shape_cast %53 : vector<64xf32> to vector<1x1x64xf32>
    tpu.vector_store %arg6[%c0_50, %c5, %c0_51], %56 {strides = array<i32>} : memref<1x8x64xf32, #tpu.memory_space<vmem>>, vector<1x1x64xf32>,
    %c3_52 = arith.constant 3 : index
    %c0_53 = arith.constant 0 : index
    %57 = vector.load %arg7[%c3_52, %c0_53] : memref<4x64xf32, #tpu.memory_space<vmem>>, vector<1x64xf32>
    %58 = vector.shape_cast %57 : vector<1x64xf32> to vector<64xf32>
    %c0_54 = arith.constant 0 : index
    %c6 = arith.constant 6 : index
    %c0_55 = arith.constant 0 : index
    %59 = vector.load %arg6[%c0_54, %c6, %c0_55] : memref<1x8x64xf32, #tpu.memory_space<vmem>>, vector<1x1x64xf32>
    %60 = vector.shape_cast %59 : vector<1x1x64xf32> to vector<64xf32>
    %61 = vector.shape_cast %58 : vector<64xf32> to vector<1x1x64xf32>
    tpu.vector_store %arg6[%c0_54, %c6, %c0_55], %61 {strides = array<i32>} : memref<1x8x64xf32, #tpu.memory_space<vmem>>, vector<1x1x64xf32>,
    %c3_56 = arith.constant 3 : index
    %c0_57 = arith.constant 0 : index
    %62 = vector.load %arg8[%c3_56, %c0_57] : memref<4x64xf32, #tpu.memory_space<vmem>>, vector<1x64xf32>
    %63 = vector.shape_cast %62 : vector<1x64xf32> to vector<64xf32>
    %c0_58 = arith.constant 0 : index
    %c7 = arith.constant 7 : index
    %c0_59 = arith.constant 0 : index
    %64 = vector.load %arg6[%c0_58, %c7, %c0_59] : memref<1x8x64xf32, #tpu.memory_space<vmem>>, vector<1x1x64xf32>
    %65 = vector.shape_cast %64 : vector<1x1x64xf32> to vector<64xf32>
    %66 = vector.shape_cast %63 : vector<64xf32> to vector<1x1x64xf32>
    tpu.vector_store %arg6[%c0_58, %c7, %c0_59], %66 {strides = array<i32>} : memref<1x8x64xf32, #tpu.memory_space<vmem>>, vector<1x1x64xf32>,
    return
  }
  func.func @transform_0(%arg0: i32) -> (i32, i32, i32) {
    %c0_i32 = arith.constant 0 : i32
    %c0_i32_0 = arith.constant 0 : i32
    %c0_i32_1 = arith.constant 0 : i32
    return %arg0, %c0_i32, %c0_i32_0 : i32, i32, i32
  }
  func.func @transform_1(%arg0: i32) -> (i32, i32, i32) {
    %c0_i32 = arith.constant 0 : i32
    %c0_i32_0 = arith.constant 0 : i32
    %c0_i32_1 = arith.constant 0 : i32
    return %arg0, %c0_i32, %c0_i32_0 : i32, i32, i32
  }
  func.func @transform_2(%arg0: i32) -> (i32, i32, i32) {
    %c0_i32 = arith.constant 0 : i32
    %c0_i32_0 = arith.constant 0 : i32
    %c0_i32_1 = arith.constant 0 : i32
    %c0_i32_2 = arith.constant 0 : i32
    return %c0_i32, %c0_i32_0, %c0_i32_1 : i32, i32, i32
  }
  func.func @transform_3(%arg0: i32) -> (i32, i32, i32) {
    %c0_i32 = arith.constant 0 : i32
    %c0_i32_0 = arith.constant 0 : i32
    %c0_i32_1 = arith.constant 0 : i32
    %c0_i32_2 = arith.constant 0 : i32
    return %c0_i32, %c0_i32_0, %c0_i32_1 : i32, i32, i32
  }
  func.func @transform_4(%arg0: i32) -> (i32, i32) {
    %c0_i32 = arith.constant 0 : i32
    %c0_i32_0 = arith.constant 0 : i32
    %c0_i32_1 = arith.constant 0 : i32
    return %c0_i32, %c0_i32_0 : i32, i32
  }
  func.func @transform_5(%arg0: i32) -> (i32, i32, i32) {
    %c0_i32 = arith.constant 0 : i32
    %c0_i32_0 = arith.constant 0 : i32
    %c0_i32_1 = arith.constant 0 : i32
    return %arg0, %c0_i32, %c0_i32_0 : i32, i32, i32
  }
}

module attributes {stable_mosaic.version = 11 : i64} {
  func.func @_dec_kernel(%arg0: i32, %arg1: memref<1x8x64xf32, #tpu.memory_space<vmem>>, %arg2: memref<1x8x64xf32, #tpu.memory_space<vmem>>, %arg3: memref<2x64x80xf32, #tpu.memory_space<vmem>>, %arg4: memref<2x64x80xf32, #tpu.memory_space<vmem>>, %arg5: memref<1x80xf32, #tpu.memory_space<vmem>>, %arg6: memref<1x16x80xf32, #tpu.memory_space<vmem>>, %arg7: memref<8x80xf32, #tpu.memory_space<vmem>>, %arg8: memref<8x80xf32, #tpu.memory_space<vmem>>) attributes {dimension_semantics = [#tpu.dimension_semantics<parallel>], iteration_bounds = array<i64: 2>, scalar_prefetch = 0 : i64, scratch_operands = 2 : i64, tpu.core_type = #tpu.core_type<tc>, window_params = [{transform_indices = @transform_0, window_bounds = array<i64: 1, 8, 64>}, {transform_indices = @transform_1, window_bounds = array<i64: 1, 8, 64>}, {pipeline_mode = #tpu.pipeline_mode<synchronous>, transform_indices = @transform_2, window_bounds = array<i64: 2, 64, 80>}, {pipeline_mode = #tpu.pipeline_mode<synchronous>, transform_indices = @transform_3, window_bounds = array<i64: 2, 64, 80>}, {pipeline_mode = #tpu.pipeline_mode<synchronous>, transform_indices = @transform_4, window_bounds = array<i64: 1, 80>}, {transform_indices = @transform_5, window_bounds = array<i64: 1, 16, 80>}]} {
    %c0 = arith.constant 0 : index
    %c0_0 = arith.constant 0 : index
    %c0_1 = arith.constant 0 : index
    %0 = vector.load %arg1[%c0, %c0_0, %c0_1] : memref<1x8x64xf32, #tpu.memory_space<vmem>>, vector<1x8x64xf32>
    %1 = vector.shape_cast %0 : vector<1x8x64xf32> to vector<8x64xf32>
    %cst = arith.constant 0.000000e+00 : f32
    %2 = vector.broadcast %cst : f32 to vector<8x64xf32>
    %3 = arith.maximumf %1, %2 : vector<8x64xf32>
    %c0_2 = arith.constant 0 : index
    %c0_3 = arith.constant 0 : index
    %c0_4 = arith.constant 0 : index
    %4 = vector.load %arg2[%c0_2, %c0_3, %c0_4] : memref<1x8x64xf32, #tpu.memory_space<vmem>>, vector<1x8x64xf32>
    %5 = vector.shape_cast %4 : vector<1x8x64xf32> to vector<8x64xf32>
    %c0_5 = arith.constant 0 : index
    %c0_6 = arith.constant 0 : index
    %6 = vector.load %arg5[%c0_5, %c0_6] : memref<1x80xf32, #tpu.memory_space<vmem>>, vector<1x80xf32>
    %c0_7 = arith.constant 0 : index
    %c0_8 = arith.constant 0 : index
    %c0_9 = arith.constant 0 : index
    %7 = vector.load %arg3[%c0_7, %c0_8, %c0_9] : memref<2x64x80xf32, #tpu.memory_space<vmem>>, vector<1x64x80xf32>
    %8 = vector.shape_cast %7 : vector<1x64x80xf32> to vector<64x80xf32>
    %cst_10 = arith.constant dense<0.000000e+00> : vector<8x80xf32>
    %9 = tpu.matmul %3, %8, %cst_10 {dimension_numbers = #tpu.dot_dimension_numbers<[1], [0], [0], [1], [0, 0, 1, 1], [], []>} : vector<8x64xf32>, vector<64x80xf32>, vector<8x80xf32> -> vector<8x80xf32>
    %c0_11 = arith.constant 0 : index
    %c0_12 = arith.constant 0 : index
    %c0_13 = arith.constant 0 : index
    %10 = vector.load %arg4[%c0_11, %c0_12, %c0_13] : memref<2x64x80xf32, #tpu.memory_space<vmem>>, vector<1x64x80xf32>
    %11 = vector.shape_cast %10 : vector<1x64x80xf32> to vector<64x80xf32>
    %cst_14 = arith.constant dense<0.000000e+00> : vector<8x80xf32>
    %12 = tpu.matmul %5, %11, %cst_14 {dimension_numbers = #tpu.dot_dimension_numbers<[1], [0], [0], [1], [0, 0, 1, 1], [], []>} : vector<8x64xf32>, vector<64x80xf32>, vector<8x80xf32> -> vector<8x80xf32>
    %13 = arith.addf %9, %12 : vector<8x80xf32>
    %14 = vector.broadcast %6 : vector<1x80xf32> to vector<8x80xf32>
    %15 = arith.addf %13, %14 : vector<8x80xf32>
    %c0_15 = arith.constant 0 : index
    %c0_16 = arith.constant 0 : index
    %16 = vector.load %arg7[%c0_15, %c0_16] : memref<8x80xf32, #tpu.memory_space<vmem>>, vector<8x80xf32>
    tpu.vector_store %arg7[%c0_15, %c0_16], %15 {strides = array<i32>} : memref<8x80xf32, #tpu.memory_space<vmem>>, vector<8x80xf32>,
    %c1 = arith.constant 1 : index
    %c0_17 = arith.constant 0 : index
    %c0_18 = arith.constant 0 : index
    %17 = vector.load %arg3[%c1, %c0_17, %c0_18] : memref<2x64x80xf32, #tpu.memory_space<vmem>>, vector<1x64x80xf32>
    %18 = vector.shape_cast %17 : vector<1x64x80xf32> to vector<64x80xf32>
    %cst_19 = arith.constant dense<0.000000e+00> : vector<8x80xf32>
    %19 = tpu.matmul %3, %18, %cst_19 {dimension_numbers = #tpu.dot_dimension_numbers<[1], [0], [0], [1], [0, 0, 1, 1], [], []>} : vector<8x64xf32>, vector<64x80xf32>, vector<8x80xf32> -> vector<8x80xf32>
    %c1_20 = arith.constant 1 : index
    %c0_21 = arith.constant 0 : index
    %c0_22 = arith.constant 0 : index
    %20 = vector.load %arg4[%c1_20, %c0_21, %c0_22] : memref<2x64x80xf32, #tpu.memory_space<vmem>>, vector<1x64x80xf32>
    %21 = vector.shape_cast %20 : vector<1x64x80xf32> to vector<64x80xf32>
    %cst_23 = arith.constant dense<0.000000e+00> : vector<8x80xf32>
    %22 = tpu.matmul %5, %21, %cst_23 {dimension_numbers = #tpu.dot_dimension_numbers<[1], [0], [0], [1], [0, 0, 1, 1], [], []>} : vector<8x64xf32>, vector<64x80xf32>, vector<8x80xf32> -> vector<8x80xf32>
    %23 = arith.addf %19, %22 : vector<8x80xf32>
    %24 = vector.broadcast %6 : vector<1x80xf32> to vector<8x80xf32>
    %25 = arith.addf %23, %24 : vector<8x80xf32>
    %c0_24 = arith.constant 0 : index
    %c0_25 = arith.constant 0 : index
    %26 = vector.load %arg8[%c0_24, %c0_25] : memref<8x80xf32, #tpu.memory_space<vmem>>, vector<8x80xf32>
    tpu.vector_store %arg8[%c0_24, %c0_25], %25 {strides = array<i32>} : memref<8x80xf32, #tpu.memory_space<vmem>>, vector<8x80xf32>,
    %c0_26 = arith.constant 0 : index
    %c0_27 = arith.constant 0 : index
    %27 = vector.load %arg7[%c0_26, %c0_27] : memref<8x80xf32, #tpu.memory_space<vmem>>, vector<1x80xf32>
    %28 = vector.shape_cast %27 : vector<1x80xf32> to vector<80xf32>
    %c0_28 = arith.constant 0 : index
    %c0_29 = arith.constant 0 : index
    %c0_30 = arith.constant 0 : index
    %29 = vector.load %arg6[%c0_28, %c0_29, %c0_30] : memref<1x16x80xf32, #tpu.memory_space<vmem>>, vector<1x1x80xf32>
    %30 = vector.shape_cast %29 : vector<1x1x80xf32> to vector<80xf32>
    %31 = vector.shape_cast %28 : vector<80xf32> to vector<1x1x80xf32>
    tpu.vector_store %arg6[%c0_28, %c0_29, %c0_30], %31 {strides = array<i32>} : memref<1x16x80xf32, #tpu.memory_space<vmem>>, vector<1x1x80xf32>,
    %c0_31 = arith.constant 0 : index
    %c0_32 = arith.constant 0 : index
    %32 = vector.load %arg8[%c0_31, %c0_32] : memref<8x80xf32, #tpu.memory_space<vmem>>, vector<1x80xf32>
    %33 = vector.shape_cast %32 : vector<1x80xf32> to vector<80xf32>
    %c0_33 = arith.constant 0 : index
    %c1_34 = arith.constant 1 : index
    %c0_35 = arith.constant 0 : index
    %34 = vector.load %arg6[%c0_33, %c1_34, %c0_35] : memref<1x16x80xf32, #tpu.memory_space<vmem>>, vector<1x1x80xf32>
    %35 = vector.shape_cast %34 : vector<1x1x80xf32> to vector<80xf32>
    %36 = vector.shape_cast %33 : vector<80xf32> to vector<1x1x80xf32>
    tpu.vector_store %arg6[%c0_33, %c1_34, %c0_35], %36 {strides = array<i32>} : memref<1x16x80xf32, #tpu.memory_space<vmem>>, vector<1x1x80xf32>,
    %c1_36 = arith.constant 1 : index
    %c0_37 = arith.constant 0 : index
    %37 = vector.load %arg7[%c1_36, %c0_37] : memref<8x80xf32, #tpu.memory_space<vmem>>, vector<1x80xf32>
    %38 = vector.shape_cast %37 : vector<1x80xf32> to vector<80xf32>
    %c0_38 = arith.constant 0 : index
    %c2 = arith.constant 2 : index
    %c0_39 = arith.constant 0 : index
    %39 = vector.load %arg6[%c0_38, %c2, %c0_39] : memref<1x16x80xf32, #tpu.memory_space<vmem>>, vector<1x1x80xf32>
    %40 = vector.shape_cast %39 : vector<1x1x80xf32> to vector<80xf32>
    %41 = vector.shape_cast %38 : vector<80xf32> to vector<1x1x80xf32>
    tpu.vector_store %arg6[%c0_38, %c2, %c0_39], %41 {strides = array<i32>} : memref<1x16x80xf32, #tpu.memory_space<vmem>>, vector<1x1x80xf32>,
    %c1_40 = arith.constant 1 : index
    %c0_41 = arith.constant 0 : index
    %42 = vector.load %arg8[%c1_40, %c0_41] : memref<8x80xf32, #tpu.memory_space<vmem>>, vector<1x80xf32>
    %43 = vector.shape_cast %42 : vector<1x80xf32> to vector<80xf32>
    %c0_42 = arith.constant 0 : index
    %c3 = arith.constant 3 : index
    %c0_43 = arith.constant 0 : index
    %44 = vector.load %arg6[%c0_42, %c3, %c0_43] : memref<1x16x80xf32, #tpu.memory_space<vmem>>, vector<1x1x80xf32>
    %45 = vector.shape_cast %44 : vector<1x1x80xf32> to vector<80xf32>
    %46 = vector.shape_cast %43 : vector<80xf32> to vector<1x1x80xf32>
    tpu.vector_store %arg6[%c0_42, %c3, %c0_43], %46 {strides = array<i32>} : memref<1x16x80xf32, #tpu.memory_space<vmem>>, vector<1x1x80xf32>,
    %c2_44 = arith.constant 2 : index
    %c0_45 = arith.constant 0 : index
    %47 = vector.load %arg7[%c2_44, %c0_45] : memref<8x80xf32, #tpu.memory_space<vmem>>, vector<1x80xf32>
    %48 = vector.shape_cast %47 : vector<1x80xf32> to vector<80xf32>
    %c0_46 = arith.constant 0 : index
    %c4 = arith.constant 4 : index
    %c0_47 = arith.constant 0 : index
    %49 = vector.load %arg6[%c0_46, %c4, %c0_47] : memref<1x16x80xf32, #tpu.memory_space<vmem>>, vector<1x1x80xf32>
    %50 = vector.shape_cast %49 : vector<1x1x80xf32> to vector<80xf32>
    %51 = vector.shape_cast %48 : vector<80xf32> to vector<1x1x80xf32>
    tpu.vector_store %arg6[%c0_46, %c4, %c0_47], %51 {strides = array<i32>} : memref<1x16x80xf32, #tpu.memory_space<vmem>>, vector<1x1x80xf32>,
    %c2_48 = arith.constant 2 : index
    %c0_49 = arith.constant 0 : index
    %52 = vector.load %arg8[%c2_48, %c0_49] : memref<8x80xf32, #tpu.memory_space<vmem>>, vector<1x80xf32>
    %53 = vector.shape_cast %52 : vector<1x80xf32> to vector<80xf32>
    %c0_50 = arith.constant 0 : index
    %c5 = arith.constant 5 : index
    %c0_51 = arith.constant 0 : index
    %54 = vector.load %arg6[%c0_50, %c5, %c0_51] : memref<1x16x80xf32, #tpu.memory_space<vmem>>, vector<1x1x80xf32>
    %55 = vector.shape_cast %54 : vector<1x1x80xf32> to vector<80xf32>
    %56 = vector.shape_cast %53 : vector<80xf32> to vector<1x1x80xf32>
    tpu.vector_store %arg6[%c0_50, %c5, %c0_51], %56 {strides = array<i32>} : memref<1x16x80xf32, #tpu.memory_space<vmem>>, vector<1x1x80xf32>,
    %c3_52 = arith.constant 3 : index
    %c0_53 = arith.constant 0 : index
    %57 = vector.load %arg7[%c3_52, %c0_53] : memref<8x80xf32, #tpu.memory_space<vmem>>, vector<1x80xf32>
    %58 = vector.shape_cast %57 : vector<1x80xf32> to vector<80xf32>
    %c0_54 = arith.constant 0 : index
    %c6 = arith.constant 6 : index
    %c0_55 = arith.constant 0 : index
    %59 = vector.load %arg6[%c0_54, %c6, %c0_55] : memref<1x16x80xf32, #tpu.memory_space<vmem>>, vector<1x1x80xf32>
    %60 = vector.shape_cast %59 : vector<1x1x80xf32> to vector<80xf32>
    %61 = vector.shape_cast %58 : vector<80xf32> to vector<1x1x80xf32>
    tpu.vector_store %arg6[%c0_54, %c6, %c0_55], %61 {strides = array<i32>} : memref<1x16x80xf32, #tpu.memory_space<vmem>>, vector<1x1x80xf32>,
    %c3_56 = arith.constant 3 : index
    %c0_57 = arith.constant 0 : index
    %62 = vector.load %arg8[%c3_56, %c0_57] : memref<8x80xf32, #tpu.memory_space<vmem>>, vector<1x80xf32>
    %63 = vector.shape_cast %62 : vector<1x80xf32> to vector<80xf32>
    %c0_58 = arith.constant 0 : index
    %c7 = arith.constant 7 : index
    %c0_59 = arith.constant 0 : index
    %64 = vector.load %arg6[%c0_58, %c7, %c0_59] : memref<1x16x80xf32, #tpu.memory_space<vmem>>, vector<1x1x80xf32>
    %65 = vector.shape_cast %64 : vector<1x1x80xf32> to vector<80xf32>
    %66 = vector.shape_cast %63 : vector<80xf32> to vector<1x1x80xf32>
    tpu.vector_store %arg6[%c0_58, %c7, %c0_59], %66 {strides = array<i32>} : memref<1x16x80xf32, #tpu.memory_space<vmem>>, vector<1x1x80xf32>,
    %c4_60 = arith.constant 4 : index
    %c0_61 = arith.constant 0 : index
    %67 = vector.load %arg7[%c4_60, %c0_61] : memref<8x80xf32, #tpu.memory_space<vmem>>, vector<1x80xf32>
    %68 = vector.shape_cast %67 : vector<1x80xf32> to vector<80xf32>
    %c0_62 = arith.constant 0 : index
    %c8 = arith.constant 8 : index
    %c0_63 = arith.constant 0 : index
    %69 = vector.load %arg6[%c0_62, %c8, %c0_63] : memref<1x16x80xf32, #tpu.memory_space<vmem>>, vector<1x1x80xf32>
    %70 = vector.shape_cast %69 : vector<1x1x80xf32> to vector<80xf32>
    %71 = vector.shape_cast %68 : vector<80xf32> to vector<1x1x80xf32>
    tpu.vector_store %arg6[%c0_62, %c8, %c0_63], %71 {strides = array<i32>} : memref<1x16x80xf32, #tpu.memory_space<vmem>>, vector<1x1x80xf32>,
    %c4_64 = arith.constant 4 : index
    %c0_65 = arith.constant 0 : index
    %72 = vector.load %arg8[%c4_64, %c0_65] : memref<8x80xf32, #tpu.memory_space<vmem>>, vector<1x80xf32>
    %73 = vector.shape_cast %72 : vector<1x80xf32> to vector<80xf32>
    %c0_66 = arith.constant 0 : index
    %c9 = arith.constant 9 : index
    %c0_67 = arith.constant 0 : index
    %74 = vector.load %arg6[%c0_66, %c9, %c0_67] : memref<1x16x80xf32, #tpu.memory_space<vmem>>, vector<1x1x80xf32>
    %75 = vector.shape_cast %74 : vector<1x1x80xf32> to vector<80xf32>
    %76 = vector.shape_cast %73 : vector<80xf32> to vector<1x1x80xf32>
    tpu.vector_store %arg6[%c0_66, %c9, %c0_67], %76 {strides = array<i32>} : memref<1x16x80xf32, #tpu.memory_space<vmem>>, vector<1x1x80xf32>,
    %c5_68 = arith.constant 5 : index
    %c0_69 = arith.constant 0 : index
    %77 = vector.load %arg7[%c5_68, %c0_69] : memref<8x80xf32, #tpu.memory_space<vmem>>, vector<1x80xf32>
    %78 = vector.shape_cast %77 : vector<1x80xf32> to vector<80xf32>
    %c0_70 = arith.constant 0 : index
    %c10 = arith.constant 10 : index
    %c0_71 = arith.constant 0 : index
    %79 = vector.load %arg6[%c0_70, %c10, %c0_71] : memref<1x16x80xf32, #tpu.memory_space<vmem>>, vector<1x1x80xf32>
    %80 = vector.shape_cast %79 : vector<1x1x80xf32> to vector<80xf32>
    %81 = vector.shape_cast %78 : vector<80xf32> to vector<1x1x80xf32>
    tpu.vector_store %arg6[%c0_70, %c10, %c0_71], %81 {strides = array<i32>} : memref<1x16x80xf32, #tpu.memory_space<vmem>>, vector<1x1x80xf32>,
    %c5_72 = arith.constant 5 : index
    %c0_73 = arith.constant 0 : index
    %82 = vector.load %arg8[%c5_72, %c0_73] : memref<8x80xf32, #tpu.memory_space<vmem>>, vector<1x80xf32>
    %83 = vector.shape_cast %82 : vector<1x80xf32> to vector<80xf32>
    %c0_74 = arith.constant 0 : index
    %c11 = arith.constant 11 : index
    %c0_75 = arith.constant 0 : index
    %84 = vector.load %arg6[%c0_74, %c11, %c0_75] : memref<1x16x80xf32, #tpu.memory_space<vmem>>, vector<1x1x80xf32>
    %85 = vector.shape_cast %84 : vector<1x1x80xf32> to vector<80xf32>
    %86 = vector.shape_cast %83 : vector<80xf32> to vector<1x1x80xf32>
    tpu.vector_store %arg6[%c0_74, %c11, %c0_75], %86 {strides = array<i32>} : memref<1x16x80xf32, #tpu.memory_space<vmem>>, vector<1x1x80xf32>,
    %c6_76 = arith.constant 6 : index
    %c0_77 = arith.constant 0 : index
    %87 = vector.load %arg7[%c6_76, %c0_77] : memref<8x80xf32, #tpu.memory_space<vmem>>, vector<1x80xf32>
    %88 = vector.shape_cast %87 : vector<1x80xf32> to vector<80xf32>
    %c0_78 = arith.constant 0 : index
    %c12 = arith.constant 12 : index
    %c0_79 = arith.constant 0 : index
    %89 = vector.load %arg6[%c0_78, %c12, %c0_79] : memref<1x16x80xf32, #tpu.memory_space<vmem>>, vector<1x1x80xf32>
    %90 = vector.shape_cast %89 : vector<1x1x80xf32> to vector<80xf32>
    %91 = vector.shape_cast %88 : vector<80xf32> to vector<1x1x80xf32>
    tpu.vector_store %arg6[%c0_78, %c12, %c0_79], %91 {strides = array<i32>} : memref<1x16x80xf32, #tpu.memory_space<vmem>>, vector<1x1x80xf32>,
    %c6_80 = arith.constant 6 : index
    %c0_81 = arith.constant 0 : index
    %92 = vector.load %arg8[%c6_80, %c0_81] : memref<8x80xf32, #tpu.memory_space<vmem>>, vector<1x80xf32>
    %93 = vector.shape_cast %92 : vector<1x80xf32> to vector<80xf32>
    %c0_82 = arith.constant 0 : index
    %c13 = arith.constant 13 : index
    %c0_83 = arith.constant 0 : index
    %94 = vector.load %arg6[%c0_82, %c13, %c0_83] : memref<1x16x80xf32, #tpu.memory_space<vmem>>, vector<1x1x80xf32>
    %95 = vector.shape_cast %94 : vector<1x1x80xf32> to vector<80xf32>
    %96 = vector.shape_cast %93 : vector<80xf32> to vector<1x1x80xf32>
    tpu.vector_store %arg6[%c0_82, %c13, %c0_83], %96 {strides = array<i32>} : memref<1x16x80xf32, #tpu.memory_space<vmem>>, vector<1x1x80xf32>,
    %c7_84 = arith.constant 7 : index
    %c0_85 = arith.constant 0 : index
    %97 = vector.load %arg7[%c7_84, %c0_85] : memref<8x80xf32, #tpu.memory_space<vmem>>, vector<1x80xf32>
    %98 = vector.shape_cast %97 : vector<1x80xf32> to vector<80xf32>
    %c0_86 = arith.constant 0 : index
    %c14 = arith.constant 14 : index
    %c0_87 = arith.constant 0 : index
    %99 = vector.load %arg6[%c0_86, %c14, %c0_87] : memref<1x16x80xf32, #tpu.memory_space<vmem>>, vector<1x1x80xf32>
    %100 = vector.shape_cast %99 : vector<1x1x80xf32> to vector<80xf32>
    %101 = vector.shape_cast %98 : vector<80xf32> to vector<1x1x80xf32>
    tpu.vector_store %arg6[%c0_86, %c14, %c0_87], %101 {strides = array<i32>} : memref<1x16x80xf32, #tpu.memory_space<vmem>>, vector<1x1x80xf32>,
    %c7_88 = arith.constant 7 : index
    %c0_89 = arith.constant 0 : index
    %102 = vector.load %arg8[%c7_88, %c0_89] : memref<8x80xf32, #tpu.memory_space<vmem>>, vector<1x80xf32>
    %103 = vector.shape_cast %102 : vector<1x80xf32> to vector<80xf32>
    %c0_90 = arith.constant 0 : index
    %c15 = arith.constant 15 : index
    %c0_91 = arith.constant 0 : index
    %104 = vector.load %arg6[%c0_90, %c15, %c0_91] : memref<1x16x80xf32, #tpu.memory_space<vmem>>, vector<1x1x80xf32>
    %105 = vector.shape_cast %104 : vector<1x1x80xf32> to vector<80xf32>
    %106 = vector.shape_cast %103 : vector<80xf32> to vector<1x1x80xf32>
    tpu.vector_store %arg6[%c0_90, %c15, %c0_91], %106 {strides = array<i32>} : memref<1x16x80xf32, #tpu.memory_space<vmem>>, vector<1x1x80xf32>,
    return
  }
  func.func @transform_0(%arg0: i32) -> (i32, i32, i32) {
    %c0_i32 = arith.constant 0 : i32
    %c0_i32_0 = arith.constant 0 : i32
    %c0_i32_1 = arith.constant 0 : i32
    return %arg0, %c0_i32, %c0_i32_0 : i32, i32, i32
  }
  func.func @transform_1(%arg0: i32) -> (i32, i32, i32) {
    %c0_i32 = arith.constant 0 : i32
    %c0_i32_0 = arith.constant 0 : i32
    %c0_i32_1 = arith.constant 0 : i32
    return %arg0, %c0_i32, %c0_i32_0 : i32, i32, i32
  }
  func.func @transform_2(%arg0: i32) -> (i32, i32, i32) {
    %c0_i32 = arith.constant 0 : i32
    %c0_i32_0 = arith.constant 0 : i32
    %c0_i32_1 = arith.constant 0 : i32
    %c0_i32_2 = arith.constant 0 : i32
    return %c0_i32, %c0_i32_0, %c0_i32_1 : i32, i32, i32
  }
  func.func @transform_3(%arg0: i32) -> (i32, i32, i32) {
    %c0_i32 = arith.constant 0 : i32
    %c0_i32_0 = arith.constant 0 : i32
    %c0_i32_1 = arith.constant 0 : i32
    %c0_i32_2 = arith.constant 0 : i32
    return %c0_i32, %c0_i32_0, %c0_i32_1 : i32, i32, i32
  }
  func.func @transform_4(%arg0: i32) -> (i32, i32) {
    %c0_i32 = arith.constant 0 : i32
    %c0_i32_0 = arith.constant 0 : i32
    %c0_i32_1 = arith.constant 0 : i32
    return %c0_i32, %c0_i32_0 : i32, i32
  }
  func.func @transform_5(%arg0: i32) -> (i32, i32, i32) {
    %c0_i32 = arith.constant 0 : i32
    %c0_i32_0 = arith.constant 0 : i32
    %c0_i32_1 = arith.constant 0 : i32
    return %arg0, %c0_i32, %c0_i32_0 : i32, i32, i32
  }
}

</mosaic_0001>

<llo_original>
// kernel: tile.33
$region0: #{tile.33}
  #allocation0 [shape = 's32[1]{0}', space=sflag, size = 0x4, scoped, tag = 'scoped memory for tile.33']
  %s0 = inlined_call_operand.vmem [shape: f32[8], index: 0, kind: input, shape index: {}]
  %s1 = inlined_call_operand.vmem [shape: f32[8,8], index: 1, kind: output, shape index: {}]
  // Predicated region
  $region2: #{tile.33} parent=0 // pred_check
    _
  $region3: #{tile.33} parent=0 // pred_check_branch
    %3 = sbr.rel (0) target = $region5
  $region4: #{tile.33} parent=0 // pred_region
    _
  $region5: #{tile.33} parent=0 // pred_fallthru
    _
  %v4 = vld [vmem:[%s0] ss:$0 sm:$0xff]
  %5 = vst [vmem:[%s1] sm:$0xff] %v4

// kernel: tile.34
$region0: #{tile.34}
  %s0 = inlined_call_operand.vmem [shape: f32[8,8], index: 0, kind: input, shape index: {}]
  %s1 = inlined_call_operand.vmem [shape: f32[1,64], index: 1, kind: output, shape index: {}]
  $region1: #{tile.34} parent=0
    #allocation0 [shape = 'u8[4096]{0}', space=vmem, size = 0x1000, scoped, tag = 'scoped mem for output reshape']
    %v2 = vld [vmem:[%s0] sm:$0x1]
    %vm3 = vcmask 64512
    %4 = vst.msk [vmem:[#allocation0] sm:$0x1] %vm3, %v2
    %s5 = scalar_lea.vmem %s0, 7
    %v6 = vld [vmem:[%s5] sm:$0x1]
    %7 = vrot.lane.b32.xlu0 %v6, 56
    %v8 = vpop.permute.xlu0 %7
    %vm9 = vcmask 523712
    %10 = vst.msk [vmem:[#allocation0] sm:$0x1] %vm9, %v8
    %s11 = scalar_lea.vmem %s0, 6
    %v12 = vld [vmem:[%s11] sm:$0x1]
    %13 = vrot.lane.b32.xlu0 %v12, 48
    %v14 = vpop.permute.xlu0 %13
    %vm15 = vcmask 458112
    %16 = vst.msk [vmem:[#allocation0] sm:$0x1] %vm15, %v14
    %s17 = scalar_lea.vmem %s0, 5
    %v18 = vld [vmem:[%s17] sm:$0x1]
    %19 = vrot.lane.b32.xlu0 %v18, 40
    %v20 = vpop.permute.xlu0 %19
    %vm21 = vcmask 392512
    %22 = vst.msk [vmem:[#allocation0] sm:$0x1] %vm21, %v20
    %s23 = scalar_lea.vmem %s0, 4
    %v24 = vld [vmem:[%s23] sm:$0x1]
    %25 = vrot.lane.b32.xlu0 %v24, 32
    %v26 = vpop.permute.xlu0 %25
    %vm27 = vcmask 326912
    %28 = vst.msk [vmem:[#allocation0] sm:$0x1] %vm27, %v26
    %s29 = scalar_lea.vmem %s0, 3
    %v30 = vld [vmem:[%s29] sm:$0x1]
    %31 = vrot.lane.b32.xlu0 %v30, 24
    %v32 = vpop.permute.xlu0 %31
    %vm33 = vcmask 261312
    %34 = vst.msk [vmem:[#allocation0] sm:$0x1] %vm33, %v32
    %s35 = scalar_lea.vmem %s0, 2
    %v36 = vld [vmem:[%s35] sm:$0x1]
    %37 = vrot.lane.b32.xlu0 %v36, 16
    %v38 = vpop.permute.xlu0 %37
    %vm39 = vcmask 195712
    %40 = vst.msk [vmem:[#allocation0] sm:$0x1] %vm39, %v38
    %s41 = scalar_lea.vmem %s0, 1
    %v42 = vld [vmem:[%s41] sm:$0x1]
    %43 = vrot.lane.b32.xlu0 %v42, 8
    %v44 = vpop.permute.xlu0 %43
    %vm45 = vcmask 130112
    %46 = vst.msk [vmem:[#allocation0] sm:$0x1] %vm45, %v44
    %s48 = sshllo.u32 0, 1
    %v50 = vld [vmem:[#allocation0] sm:%s48]
    %s51 = sshllo.u32 0, 1
    %52 = vst [vmem:[%s1] sm:%s51] %v50

// kernel: unet_forward.5
$region0: #{unet_forward.5}
  #allocation0 [shape = 'u32[]', space=smem, size = 0x4, offset = 0x4, fixed_abs, tag = 'smem constant byte address 0x4 - core index']
  #allocation1 [shape = 'u32[144,128]{1,0:T(1,128)}', space=vmem, size = 0x12000, scoped, tag = 'internal scratch']
  #allocation2 [shape = 'f32[18,48]{1,0:T(8,128)}', space=vmem, size = 0x3000, scoped, tag = 'scratch operand']
  #allocation3 [shape = 'f32[16,64]{1,0:T(8,128)}', space=vmem, size = 0x2000, scoped, tag = 'scratch operand']
  %s0 = inlined_call_operand.vmem [shape: f32[2,16,48], index: 0, kind: input, shape index: {}]
  %s1 = inlined_call_operand.vmem [shape: f32[6,48,64], index: 1, kind: input, shape index: {}]
  %s2 = inlined_call_operand.vmem [shape: f32[1,64], index: 2, kind: input, shape index: {}]
  %s3 = inlined_call_operand.vmem [shape: f32[2,8,64], index: 3, kind: output, shape index: {}]
  %s4 = sld [smem:[#allocation0]]
  $region45: #{unet_forward.5} parent=0
    _
  %s6 = ssub.s32 1, %s4
  %s7 = scalar_select 0, %s6, %s4
  loop: start=0, step=1, limit=4
  $region2: #{unet_forward.5} parent=0 // loop_pre_header
    _
  $region3: #{unet_forward.5} parent=0 // loop_header
    %s9 = sphi 0, %s13
    %p10 = scmp.ge.s32.totalorder %s9, 4
    %s19 = sphi 0, %s21
    %s22 = sphi 0, %s19
    %s23 = sphi 0, %s22
    %s39 = sphi 0, %s23
    %s43 = sphi 0, %s43
    %s45 = sphi 0, %s43
    %s46 = sphi 0, %s45
    %s60 = sphi 0, %s46
    %s64 = sphi 0, %s64
    %s66 = sphi 0, %s64
    %s67 = sphi 0, %s66
    %s81 = sphi 0, %s67
    %s87 = sphi 0, %s89
    %s90 = sphi 0, %s87
    %s91 = sphi 0, %s90
    %s107 = sphi 0, %s91
  $region4: #{unet_forward.5} parent=0 // loop_header_branch
    %12 = sbr.rel (%p10) target = $region8
  $region5: #{unet_forward.5} parent=0 // loop_body
    %s14 = ssub.s32 %s9, 1
    %s15 = ssub.s32 %s9, 2
    %s16 = sadd.s32 %s9, 1
    %s17 = ssub.s32 %s9, %s16
    %p18 = scmp.eq.s32.totalorder %s17, 0
    %s20 = sadd.s32 %s19, 1
    %s21 = scalar_select %p18, %s19, %s20
    %p24 = pneg %p18
    %p25 = scmp.eq.s32.totalorder %s9, 1
    %p26 = por %p24, %p25
    %p27 = scmp.ne.s32.totalorder %s19, %s22
    %p28 = scmp.eq.s32.totalorder %s9, 0
    %p29 = por %p27, %p28
    %p30 = scmp.ne.s32.totalorder %s19, %s22
    %p31 = scmp.eq.s32.totalorder %s14, 1
    %p32 = por %p30, %p31
    %p33 = scmp.ne.s32.totalorder %s22, %s23
    %p34 = scmp.eq.s32.totalorder %s14, 0
    %p35 = por %p33, %p34
    %p36 = scmp.ne.s32.totalorder %s22, %s23
    %p37 = scmp.eq.s32.totalorder %s15, 1
    %p38 = por %p36, %p37
    %p40 = scmp.ne.s32.totalorder %s23, %s39
    %p41 = scmp.eq.s32.totalorder %s15, 0
    %p42 = por %p40, %p41
    %s44 = sadd.s32 %s43, 1
    %p47 = scmp.eq.s32.totalorder %s9, 1
    %p48 = scmp.ne.s32.totalorder %s43, %s45
    %p49 = scmp.eq.s32.totalorder %s9, 0
    %p50 = por %p48, %p49
    %p51 = scmp.ne.s32.totalorder %s43, %s45
    %p52 = scmp.eq.s32.totalorder %s14, 1
    %p53 = por %p51, %p52
    %p54 = scmp.ne.s32.totalorder %s45, %s46
    %p55 = scmp.eq.s32.totalorder %s14, 0
    %p56 = por %p54, %p55
    %p57 = scmp.ne.s32.totalorder %s45, %s46
    %p58 = scmp.eq.s32.totalorder %s15, 1
    %p59 = por %p57, %p58
    %p61 = scmp.ne.s32.totalorder %s46, %s60
    %p62 = scmp.eq.s32.totalorder %s15, 0
    %p63 = por %p61, %p62
    %s65 = sadd.s32 %s64, 1
    %p68 = scmp.eq.s32.totalorder %s9, 1
    %p69 = scmp.ne.s32.totalorder %s64, %s66
    %p70 = scmp.eq.s32.totalorder %s9, 0
    %p71 = por %p69, %p70
    %p72 = scmp.ne.s32.totalorder %s64, %s66
    %p73 = scmp.eq.s32.totalorder %s14, 1
    %p74 = por %p72, %p73
    %p75 = scmp.ne.s32.totalorder %s66, %s67
    %p76 = scmp.eq.s32.totalorder %s14, 0
    %p77 = por %p75, %p76
    %p78 = scmp.ne.s32.totalorder %s66, %s67
    %p79 = scmp.eq.s32.totalorder %s15, 1
    %p80 = por %p78, %p79
    %p82 = scmp.ne.s32.totalorder %s67, %s81
    %p83 = scmp.eq.s32.totalorder %s15, 0
    %p84 = por %p82, %p83
    %s85 = ssub.s32 %s9, %s16
    %p86 = scmp.eq.s32.totalorder %s85, 0
    %s88 = sadd.s32 %s87, 1
    %s89 = scalar_select %p86, %s87, %s88
    %p92 = pneg %p86
    %p93 = scmp.eq.s32.totalorder %s9, 1
    %p94 = por %p92, %p93
    %p95 = scmp.ne.s32.totalorder %s87, %s90
    %p96 = scmp.eq.s32.totalorder %s9, 0
    %p97 = por %p95, %p96
    %p98 = scmp.ne.s32.totalorder %s87, %s90
    %p99 = scmp.eq.s32.totalorder %s14, 1
    %p100 = por %p98, %p99
    %p101 = scmp.ne.s32.totalorder %s90, %s91
    %p102 = scmp.eq.s32.totalorder %s14, 0
    %p103 = por %p101, %p102
    %p104 = scmp.ne.s32.totalorder %s90, %s91
    %p105 = scmp.eq.s32.totalorder %s15, 1
    %p106 = por %p104, %p105
    %p108 = scmp.ne.s32.totalorder %s91, %s107
    %p109 = scmp.eq.s32.totalorder %s15, 0
    %p110 = por %p108, %p109
    %p111 = scmp.le.s32.totalorder 1, %s9
    %p112 = scmp.lt.s32.totalorder %s9, 3
    %p113 = pnand %p111, %p112
    %p114 = pneg %p113
    // Predicated region
    $region9: #{unet_forward.5} parent=5 // pred_check
      _
    $region10: #{unet_forward.5} parent=5 // pred_check_branch
      %116 = sbr.rel (%p113) target = $region12
    $region11: #{unet_forward.5} parent=5 // pred_region
      %s117 = ssub.s32 %s9, 1
      // Predicated region
      $region13: #{unet_forward.5} parent=11 // pred_check
        %p118 = pneg %p56
      $region14: #{unet_forward.5} parent=11 // pred_check_branch
        %120 = sbr.rel (%p118) target = $region16
      $region15: #{unet_forward.5} parent=11 // pred_region
        _
      $region16: #{unet_forward.5} parent=11 // pred_fallthru
        _
      // Predicated region
      $region17: #{unet_forward.5} parent=11 // pred_check
        %p121 = pneg %p77
      $region18: #{unet_forward.5} parent=11 // pred_check_branch
        %123 = sbr.rel (%p121) target = $region20
      $region19: #{unet_forward.5} parent=11 // pred_region
        _
      $region20: #{unet_forward.5} parent=11 // pred_fallthru
        _
    $region12: #{unet_forward.5} parent=5 // pred_fallthru
      _
    %p124 = scmp.lt.s32.totalorder %s9, 2
    // Predicated region
    $region21: #{unet_forward.5} parent=5 // pred_check
      %p125 = pneg %p124
    $region22: #{unet_forward.5} parent=5 // pred_check_branch
      %127 = sbr.rel (%p125) target = $region24
    $region23: #{unet_forward.5} parent=5 // pred_region
      // Predicated region
      $region25: #{unet_forward.5} parent=23 // pred_check
        %p128 = pneg %p29
      $region26: #{unet_forward.5} parent=23 // pred_check_branch
        %130 = sbr.rel (%p128) target = $region28
      $region27: #{unet_forward.5} parent=23 // pred_region
        %p131 = scmp.lt.s32.totalorder %s9, 1
        %s132 = scalar_select %p131, %s9, 1
        %s133 = smul.addr %s132, 2
        %s134 = smul.addr %s133, 8
        %s135 = scalar_lea.vmem %s0, %s134
      $region28: #{unet_forward.5} parent=23 // pred_fallthru
        _
    $region24: #{unet_forward.5} parent=5 // pred_fallthru
      _
    %p136 = scmp.le.s32.totalorder 1, %s9
    %p137 = scmp.lt.s32.totalorder %s9, 3
    %p138 = pnand %p136, %p137
    %p139 = pneg %p138
    // Predicated region
    $region29: #{unet_forward.5} parent=5 // pred_check
      _
    $region30: #{unet_forward.5} parent=5 // pred_check_branch
      %141 = sbr.rel (%p138) target = $region32
    $region31: #{unet_forward.5} parent=5 // pred_region
      %s142 = ssub.s32 %s9, 1
      %p143 = scmp.lt.s32.totalorder %s14, 1
      %s144 = scalar_select %p143, %s14, 1
      %s145 = smul.addr %s144, 2
      %s146 = smul.addr %s145, 8
      %s147 = scalar_lea.vmem %s0, %s146
      %p148 = pneg %p35
      %p149 = pneg %p32
      %p150 = pneg %p56
      %p151 = pneg %p53
      %p152 = pneg %p77
      %p153 = pneg %p74
      %p154 = pneg %p103
      %p155 = pneg %p100
      %p156 = scmp.lt.s32.totalorder %s14, 1
      %s157 = scalar_select %p156, %s14, 1
      %s158 = smul.addr %s157, 8
      %s159 = scalar_lea.vmem %s3, %s158
      %p160 = scmp.lt.s32.totalorder %s14, 1
      %s161 = scalar_select %p160, %s14, 1
      %s162 = smul.addr %s161, 2
      %s163 = smul.addr %s162, 8
      %s164 = scalar_lea.vmem %s0, %s163
      %p165 = scmp.lt.s32.totalorder %s14, 1
      %s166 = scalar_select %p165, %s14, 1
      %s167 = smul.addr %s166, 8
      %s168 = scalar_lea.vmem %s3, %s167
      %vm169 = vcmask 392192
      %170 = vst.msk [vmem:[#allocation2] sm:$0xff] %vm169, 0.0
      %171 = vst.msk [vmem:[#allocation2 + $0x8] sm:$0xff] %vm169, 0.0
      %vm172 = vcmask 386048
      %173 = vst.msk [vmem:[#allocation2 + $0x10] sm:$0x3] %vm172, 0.0
      %v174 = vld [vmem:[%s164] sm:$0xff]
      %v175 = vld [vmem:[%s164 + $0x8] sm:$0xff]
      %176 = vst.msk [vmem:[#allocation2 + $0x1] sm:$0xff] %vm169, %v174
      %177 = vst.msk [vmem:[#allocation2 + $0x9] sm:$0xff] %vm169, %v175
      %v178 = vld [vmem:[#allocation2] sm:$0xff]
      %v179 = vld [vmem:[#allocation2 + $0x8] sm:$0xff]
      %v180 = vld [vmem:[%s1] sm:$0xff]
      %v181 = vld [vmem:[%s1 + $0x8] sm:$0xff]
      %v182 = vld [vmem:[%s1 + $0x10] sm:$0xff]
      %v183 = vld [vmem:[%s1 + $0x18] sm:$0xff]
      %v184 = vld [vmem:[%s1 + $0x20] sm:$0xff]
      %v185 = vld [vmem:[%s1 + $0x28] sm:$0xff]
      %s186 = scalar_lea.vmem %s1, 48
      %v187 = vld [vmem:[%s186] sm:$0xff]
      %v188 = vld [vmem:[%s186 + $0x8] sm:$0xff]
      %v189 = vld [vmem:[%s186 + $0x10] sm:$0xff]
      %v190 = vld [vmem:[%s186 + $0x18] sm:$0xff]
      %v191 = vld [vmem:[%s186 + $0x20] sm:$0xff]
      %v192 = vld [vmem:[%s186 + $0x28] sm:$0xff]
      %v193 = vld [vmem:[#allocation2 + $0x1] sm:$0xff]
      %v194 = vld [vmem:[#allocation2 + $0x9] sm:$0xff]
      %s195 = scalar_lea.vmem %s1, 96
      %v196 = vld [vmem:[%s195] sm:$0xff]
      %v197 = vld [vmem:[%s195 + $0x8] sm:$0xff]
      %v198 = vld [vmem:[%s195 + $0x10] sm:$0xff]
      %v199 = vld [vmem:[%s195 + $0x18] sm:$0xff]
      %v200 = vld [vmem:[%s195 + $0x20] sm:$0xff]
      %v201 = vld [vmem:[%s195 + $0x28] sm:$0xff]
      %v203 = vsel %vm169, %v193, 0
      %v206 = vsel %vm169, %v194, 0
      %208 = vmatprep.subr.mxu0 0.0
      %209 = vmatpush1.msra.mxu0 %v196
      %210 = vmatprep.subr.mxu0 0.0
      %211 = vmatpush1.msra.mxu0 %v197
      %212 = vmatprep.subr.mxu0 0.0
      %213 = vmatpush1.msra.mxu0 %v198
      %214 = vmatprep.subr.mxu0 0.0
      %215 = vmatpush1.msra.mxu0 %v199
      %216 = vmatprep.subr.mxu0 0.0
      %217 = vmatpush1.msra.mxu0 %v200
      %218 = vmatprep.subr.mxu0 0.0
      %219 = vmatpush1.msra.mxu0 %v201
      %220 = vmatprep.subr.mxu0 0.0
      %221 = vmatpush1.msra.mxu0 0.0
      %222 = vmatprep.subr.mxu0 0.0
      %223 = vmatpush1.msra.mxu0 0.0
      %224 = vmatprep.subr.mxu0 0.0
      %225 = vmatpush1.msra.mxu0 0.0
      %226 = vmatprep.subr.mxu0 0.0
      %227 = vmatpush1.msra.mxu0 0.0
      %228 = vmatprep.subr.mxu0 0.0
      %229 = vmatpush1.msra.mxu0 0.0
      %230 = vmatprep.subr.mxu0 0.0
      %231 = vmatpush1.msra.mxu0 0.0
      %232 = vmatprep.subr.mxu0 0.0
      %233 = vmatpush1.msra.mxu0 0.0
      %234 = vmatprep.subr.mxu0 0.0
      %235 = vmatpush1.msra.mxu0 0.0
      %236 = vmatprep.subr.mxu0 0.0
      %237 = vmatpush1.msra.mxu0 0.0
      %238 = vmatprep.subr.mxu0 0.0
      %239 = vmatpush1.msra.mxu0 0.0
      %240 = vmatprep.subr.mxu0 0.0
      %241 = vmatpush1.msra.mxu0 0.0
      %242 = vmatprep.subr.mxu0 0.0
      %243 = vmatpush1.msra.mxu0 0.0
      %244 = vmatprep.subr.mxu0 0.0
      %245 = vmatpush1.msra.mxu0 0.0
      %246 = vmatprep.subr.mxu0 0.0
      %247 = vmatpush1.msra.mxu0 0.0
      %248 = vmatprep.subr.mxu0 0.0
      %249 = vmatpush1.msra.mxu0 0.0
      %250 = vmatprep.subr.mxu0 0.0
      %251 = vmatpush1.msra.mxu0 0.0
      %252 = vmatprep.subr.mxu0 0.0
      %253 = vmatpush1.msra.mxu0 0.0
      %254 = vmatprep.subr.mxu0 0.0
      %255 = vmatpush1.msra.mxu0 0.0
      %256 = vmatprep.subr.mxu0 0.0
      %257 = vmatpush1.msra.mxu0 0.0
      %258 = vmatprep.subr.mxu0 0.0
      %259 = vmatpush1.msra.mxu0 0.0
      %260 = vmatprep.subr.mxu0 0.0
      %261 = vmatpush1.msra.mxu0 0.0
      %262 = vmatprep.subr.mxu0 0.0
      %263 = vmatpush1.msra.mxu0 0.0
      %264 = vmatprep.subr.mxu0 0.0
      %265 = vmatpush1.msra.mxu0 0.0
      %266 = vmatprep.subr.mxu0 0.0
      %267 = vmatpush1.msra.mxu0 0.0
      %268 = vmatprep.subr.mxu0 0.0
      %269 = vmatpush1.msra.mxu0 0.0
      %270 = vmatprep.subr.mxu0 0.0
      %271 = vmatpush1.msra.mxu0 0.0
      %272 = vmatprep.mubr.f32.mxu0 0.0
      %273 = vmatmul.mubr.f32.gmra.mrb[0].mxu0 %v203
      %v274 = vpop.f32.mrb[0].mxu0
      %v275 = vadd.f32 0.0, %v274
      %v276 = vpop.f32.mrb[0].mxu0
      %277 = vmatprep.mubr.f32.mxu0 0.0
      %278 = vmatmul.mubr.f32.gmra.mrb[0].mxu0 %v206
      %v279 = vpop.f32.mrb[0].mxu0
      %v280 = vadd.f32 0.0, %v279
      %v281 = vpop.f32.mrb[0].mxu0
      %282 = vdwg.mxu0
      %v284 = vsel %vm169, %v178, 0
      %v287 = vsel %vm169, %v179, 0
      %289 = vmatprep.subr.mxu0 0.0
      %290 = vmatpush1.msra.mxu0 %v180
      %291 = vmatprep.subr.mxu0 0.0
      %292 = vmatpush1.msra.mxu0 %v181
      %293 = vmatprep.subr.mxu0 0.0
      %294 = vmatpush1.msra.mxu0 %v182
      %295 = vmatprep.subr.mxu0 0.0
      %296 = vmatpush1.msra.mxu0 %v183
      %297 = vmatprep.subr.mxu0 0.0
      %298 = vmatpush1.msra.mxu0 %v184
      %299 = vmatprep.subr.mxu0 0.0
      %300 = vmatpush1.msra.mxu0 %v185
      %301 = vmatprep.subr.mxu0 0.0
      %302 = vmatpush1.msra.mxu0 0.0
      %303 = vmatprep.subr.mxu0 0.0
      %304 = vmatpush1.msra.mxu0 0.0
      %305 = vmatprep.subr.mxu0 0.0
      %306 = vmatpush1.msra.mxu0 0.0
      %307 = vmatprep.subr.mxu0 0.0
      %308 = vmatpush1.msra.mxu0 0.0
      %309 = vmatprep.subr.mxu0 0.0
      %310 = vmatpush1.msra.mxu0 0.0
      %311 = vmatprep.subr.mxu0 0.0
      %312 = vmatpush1.msra.mxu0 0.0
      %313 = vmatprep.subr.mxu0 0.0
      %314 = vmatpush1.msra.mxu0 0.0
      %315 = vmatprep.subr.mxu0 0.0
      %316 = vmatpush1.msra.mxu0 0.0
      %317 = vmatprep.subr.mxu0 0.0
      %318 = vmatpush1.msra.mxu0 0.0
      %319 = vmatprep.subr.mxu0 0.0
      %320 = vmatpush1.msra.mxu0 0.0
      %321 = vmatprep.subr.mxu0 0.0
      %322 = vmatpush1.msra.mxu0 0.0
      %323 = vmatprep.subr.mxu0 0.0
      %324 = vmatpush1.msra.mxu0 0.0
      %325 = vmatprep.subr.mxu0 0.0
      %326 = vmatpush1.msra.mxu0 0.0
      %327 = vmatprep.subr.mxu0 0.0
      %328 = vmatpush1.msra.mxu0 0.0
      %329 = vmatprep.subr.mxu0 0.0
      %330 = vmatpush1.msra.mxu0 0.0
      %331 = vmatprep.subr.mxu0 0.0
      %332 = vmatpush1.msra.mxu0 0.0
      %333 = vmatprep.subr.mxu0 0.0
      %334 = vmatpush1.msra.mxu0 0.0
      %335 = vmatprep.subr.mxu0 0.0
      %336 = vmatpush1.msra.mxu0 0.0
      %337 = vmatprep.subr.mxu0 0.0
      %338 = vmatpush1.msra.mxu0 0.0
      %339 = vmatprep.subr.mxu0 0.0
      %340 = vmatpush1.msra.mxu0 0.0
      %341 = vmatprep.subr.mxu0 0.0
      %342 = vmatpush1.msra.mxu0 0.0
      %343 = vmatprep.subr.mxu0 0.0
      %344 = vmatpush1.msra.mxu0 0.0
      %345 = vmatprep.subr.mxu0 0.0
      %346 = vmatpush1.msra.mxu0 0.0
      %347 = vmatprep.subr.mxu0 0.0
      %348 = vmatpush1.msra.mxu0 0.0
      %349 = vmatprep.subr.mxu0 0.0
      %350 = vmatpush1.msra.mxu0 0.0
      %351 = vmatprep.subr.mxu0 0.0
      %352 = vmatpush1.msra.mxu0 0.0
      %353 = vmatprep.mubr.f32.mxu0 0.0
      %354 = vmatmul.mubr.f32.gmra.mrb[0].mxu0 %v284
      %v355 = vpop.f32.mrb[0].mxu0
      %v356 = vadd.f32 %v275, %v355
      %v357 = vpop.f32.mrb[0].mxu0
      %358 = vmatprep.mubr.f32.mxu0 0.0
      %359 = vmatmul.mubr.f32.gmra.mrb[0].mxu0 %v287
      %v360 = vpop.f32.mrb[0].mxu0
      %v361 = vadd.f32 %v280, %v360
      %v362 = vpop.f32.mrb[0].mxu0
      %363 = vdwg.mxu0
      %s364 = scalar_lea.vmem %s1, 144
      %v365 = vld [vmem:[%s364] sm:$0xff]
      %v366 = vld [vmem:[%s364 + $0x8] sm:$0xff]
      %v367 = vld [vmem:[%s364 + $0x10] sm:$0xff]
      %v368 = vld [vmem:[%s364 + $0x18] sm:$0xff]
      %v369 = vld [vmem:[%s364 + $0x20] sm:$0xff]
      %v370 = vld [vmem:[%s364 + $0x28] sm:$0xff]
      %371 = vmatprep.subr.mxu0 0.0
      %372 = vmatpush1.msra.mxu0 %v365
      %373 = vmatprep.subr.mxu0 0.0
      %374 = vmatpush1.msra.mxu0 %v366
      %375 = vmatprep.subr.mxu0 0.0
      %376 = vmatpush1.msra.mxu0 %v367
      %377 = vmatprep.subr.mxu0 0.0
      %378 = vmatpush1.msra.mxu0 %v368
      %379 = vmatprep.subr.mxu0 0.0
      %380 = vmatpush1.msra.mxu0 %v369
      %381 = vmatprep.subr.mxu0 0.0
      %382 = vmatpush1.msra.mxu0 %v370
      %383 = vmatprep.subr.mxu0 0.0
      %384 = vmatpush1.msra.mxu0 0.0
      %385 = vmatprep.subr.mxu0 0.0
      %386 = vmatpush1.msra.mxu0 0.0
      %387 = vmatprep.subr.mxu0 0.0
      %388 = vmatpush1.msra.mxu0 0.0
      %389 = vmatprep.subr.mxu0 0.0
      %390 = vmatpush1.msra.mxu0 0.0
      %391 = vmatprep.subr.mxu0 0.0
      %392 = vmatpush1.msra.mxu0 0.0
      %393 = vmatprep.subr.mxu0 0.0
      %394 = vmatpush1.msra.mxu0 0.0
      %395 = vmatprep.subr.mxu0 0.0
      %396 = vmatpush1.msra.mxu0 0.0
      %397 = vmatprep.subr.mxu0 0.0
      %398 = vmatpush1.msra.mxu0 0.0
      %399 = vmatprep.subr.mxu0 0.0
      %400 = vmatpush1.msra.mxu0 0.0
      %401 = vmatprep.subr.mxu0 0.0
      %402 = vmatpush1.msra.mxu0 0.0
      %403 = vmatprep.subr.mxu0 0.0
      %404 = vmatpush1.msra.mxu0 0.0
      %405 = vmatprep.subr.mxu0 0.0
      %406 = vmatpush1.msra.mxu0 0.0
      %407 = vmatprep.subr.mxu0 0.0
      %408 = vmatpush1.msra.mxu0 0.0
      %409 = vmatprep.subr.mxu0 0.0
      %410 = vmatpush1.msra.mxu0 0.0
      %411 = vmatprep.subr.mxu0 0.0
      %412 = vmatpush1.msra.mxu0 0.0
      %413 = vmatprep.subr.mxu0 0.0
      %414 = vmatpush1.msra.mxu0 0.0
      %415 = vmatprep.subr.mxu0 0.0
      %416 = vmatpush1.msra.mxu0 0.0
      %417 = vmatprep.subr.mxu0 0.0
      %418 = vmatpush1.msra.mxu0 0.0
      %419 = vmatprep.subr.mxu0 0.0
      %420 = vmatpush1.msra.mxu0 0.0
      %421 = vmatprep.subr.mxu0 0.0
      %422 = vmatpush1.msra.mxu0 0.0
      %423 = vmatprep.subr.mxu0 0.0
      %424 = vmatpush1.msra.mxu0 0.0
      %425 = vmatprep.subr.mxu0 0.0
      %426 = vmatpush1.msra.mxu0 0.0
      %427 = vmatprep.subr.mxu0 0.0
      %428 = vmatpush1.msra.mxu0 0.0
      %429 = vmatprep.subr.mxu0 0.0
      %430 = vmatpush1.msra.mxu0 0.0
      %431 = vmatprep.subr.mxu0 0.0
      %432 = vmatpush1.msra.mxu0 0.0
      %433 = vmatprep.subr.mxu0 0.0
      %434 = vmatpush1.msra.mxu0 0.0
      %435 = vmatprep.mubr.f32.mxu0 0.0
      %436 = vmatmul.mubr.f32.gmra.mrb[0].mxu0 %v203
      %v437 = vpop.f32.mrb[0].mxu0
      %v438 = vadd.f32 0.0, %v437
      %v439 = vpop.f32.mrb[0].mxu0
      %440 = vmatprep.mubr.f32.mxu0 0.0
      %441 = vmatmul.mubr.f32.gmra.mrb[0].mxu0 %v206
      %v442 = vpop.f32.mrb[0].mxu0
      %v443 = vadd.f32 0.0, %v442
      %v444 = vpop.f32.mrb[0].mxu0
      %445 = vdwg.mxu0
      %446 = vmatprep.subr.mxu0 0.0
      %447 = vmatpush1.msra.mxu0 %v187
      %448 = vmatprep.subr.mxu0 0.0
      %449 = vmatpush1.msra.mxu0 %v188
      %450 = vmatprep.subr.mxu0 0.0
      %451 = vmatpush1.msra.mxu0 %v189
      %452 = vmatprep.subr.mxu0 0.0
      %453 = vmatpush1.msra.mxu0 %v190
      %454 = vmatprep.subr.mxu0 0.0
      %455 = vmatpush1.msra.mxu0 %v191
      %456 = vmatprep.subr.mxu0 0.0
      %457 = vmatpush1.msra.mxu0 %v192
      %458 = vmatprep.subr.mxu0 0.0
      %459 = vmatpush1.msra.mxu0 0.0
      %460 = vmatprep.subr.mxu0 0.0
      %461 = vmatpush1.msra.mxu0 0.0
      %462 = vmatprep.subr.mxu0 0.0
      %463 = vmatpush1.msra.mxu0 0.0
      %464 = vmatprep.subr.mxu0 0.0
      %465 = vmatpush1.msra.mxu0 0.0
      %466 = vmatprep.subr.mxu0 0.0
      %467 = vmatpush1.msra.mxu0 0.0
      %468 = vmatprep.subr.mxu0 0.0
      %469 = vmatpush1.msra.mxu0 0.0
      %470 = vmatprep.subr.mxu0 0.0
      %471 = vmatpush1.msra.mxu0 0.0
      %472 = vmatprep.subr.mxu0 0.0
      %473 = vmatpush1.msra.mxu0 0.0
      %474 = vmatprep.subr.mxu0 0.0
      %475 = vmatpush1.msra.mxu0 0.0
      %476 = vmatprep.subr.mxu0 0.0
      %477 = vmatpush1.msra.mxu0 0.0
      %478 = vmatprep.subr.mxu0 0.0
      %479 = vmatpush1.msra.mxu0 0.0
      %480 = vmatprep.subr.mxu0 0.0
      %481 = vmatpush1.msra.mxu0 0.0
      %482 = vmatprep.subr.mxu0 0.0
      %483 = vmatpush1.msra.mxu0 0.0
      %484 = vmatprep.subr.mxu0 0.0
      %485 = vmatpush1.msra.mxu0 0.0
      %486 = vmatprep.subr.mxu0 0.0
      %487 = vmatpush1.msra.mxu0 0.0
      %488 = vmatprep.subr.mxu0 0.0
      %489 = vmatpush1.msra.mxu0 0.0
      %490 = vmatprep.subr.mxu0 0.0
      %491 = vmatpush1.msra.mxu0 0.0
      %492 = vmatprep.subr.mxu0 0.0
      %493 = vmatpush1.msra.mxu0 0.0
      %494 = vmatprep.subr.mxu0 0.0
      %495 = vmatpush1.msra.mxu0 0.0
      %496 = vmatprep.subr.mxu0 0.0
      %497 = vmatpush1.msra.mxu0 0.0
      %498 = vmatprep.subr.mxu0 0.0
      %499 = vmatpush1.msra.mxu0 0.0
      %500 = vmatprep.subr.mxu0 0.0
      %501 = vmatpush1.msra.mxu0 0.0
      %502 = vmatprep.subr.mxu0 0.0
      %503 = vmatpush1.msra.mxu0 0.0
      %504 = vmatprep.subr.mxu0 0.0
      %505 = vmatpush1.msra.mxu0 0.0
      %506 = vmatprep.subr.mxu0 0.0
      %507 = vmatpush1.msra.mxu0 0.0
      %508 = vmatprep.subr.mxu0 0.0
      %509 = vmatpush1.msra.mxu0 0.0
      %510 = vmatprep.mubr.f32.mxu0 0.0
      %511 = vmatmul.mubr.f32.gmra.mrb[0].mxu0 %v284
      %v512 = vpop.f32.mrb[0].mxu0
      %v513 = vadd.f32 %v438, %v512
      %v514 = vpop.f32.mrb[0].mxu0
      %515 = vmatprep.mubr.f32.mxu0 0.0
      %516 = vmatmul.mubr.f32.gmra.mrb[0].mxu0 %v287
      %v517 = vpop.f32.mrb[0].mxu0
      %v518 = vadd.f32 %v443, %v517
      %v519 = vpop.f32.mrb[0].mxu0
      %520 = vdwg.mxu0
      %v521 = vld [vmem:[#allocation2 + $0x2] sm:$0xff]
      %v522 = vld [vmem:[#allocation2 + $0xa] sm:$0xff]
      %s523 = scalar_lea.vmem %s1, 192
      %v524 = vld [vmem:[%s523] sm:$0xff]
      %v525 = vld [vmem:[%s523 + $0x8] sm:$0xff]
      %v526 = vld [vmem:[%s523 + $0x10] sm:$0xff]
      %v527 = vld [vmem:[%s523 + $0x18] sm:$0xff]
      %v528 = vld [vmem:[%s523 + $0x20] sm:$0xff]
      %v529 = vld [vmem:[%s523 + $0x28] sm:$0xff]
      %v531 = vsel %vm169, %v521, 0
      %v534 = vsel %vm169, %v522, 0
      %536 = vmatprep.subr.mxu0 0.0
      %537 = vmatpush1.msra.mxu0 %v524
      %538 = vmatprep.subr.mxu0 0.0
      %539 = vmatpush1.msra.mxu0 %v525
      %540 = vmatprep.subr.mxu0 0.0
      %541 = vmatpush1.msra.mxu0 %v526
      %542 = vmatprep.subr.mxu0 0.0
      %543 = vmatpush1.msra.mxu0 %v527
      %544 = vmatprep.subr.mxu0 0.0
      %545 = vmatpush1.msra.mxu0 %v528
      %546 = vmatprep.subr.mxu0 0.0
      %547 = vmatpush1.msra.mxu0 %v529
      %548 = vmatprep.subr.mxu0 0.0
      %549 = vmatpush1.msra.mxu0 0.0
      %550 = vmatprep.subr.mxu0 0.0
      %551 = vmatpush1.msra.mxu0 0.0
      %552 = vmatprep.subr.mxu0 0.0
      %553 = vmatpush1.msra.mxu0 0.0
      %554 = vmatprep.subr.mxu0 0.0
      %555 = vmatpush1.msra.mxu0 0.0
      %556 = vmatprep.subr.mxu0 0.0
      %557 = vmatpush1.msra.mxu0 0.0
      %558 = vmatprep.subr.mxu0 0.0
      %559 = vmatpush1.msra.mxu0 0.0
      %560 = vmatprep.subr.mxu0 0.0
      %561 = vmatpush1.msra.mxu0 0.0
      %562 = vmatprep.subr.mxu0 0.0
      %563 = vmatpush1.msra.mxu0 0.0
      %564 = vmatprep.subr.mxu0 0.0
      %565 = vmatpush1.msra.mxu0 0.0
      %566 = vmatprep.subr.mxu0 0.0
      %567 = vmatpush1.msra.mxu0 0.0
      %568 = vmatprep.subr.mxu0 0.0
      %569 = vmatpush1.msra.mxu0 0.0
      %570 = vmatprep.subr.mxu0 0.0
      %571 = vmatpush1.msra.mxu0 0.0
      %572 = vmatprep.subr.mxu0 0.0
      %573 = vmatpush1.msra.mxu0 0.0
      %574 = vmatprep.subr.mxu0 0.0
      %575 = vmatpush1.msra.mxu0 0.0
      %576 = vmatprep.subr.mxu0 0.0
      %577 = vmatpush1.msra.mxu0 0.0
      %578 = vmatprep.subr.mxu0 0.0
      %579 = vmatpush1.msra.mxu0 0.0
      %580 = vmatprep.subr.mxu0 0.0
      %581 = vmatpush1.msra.mxu0 0.0
      %582 = vmatprep.subr.mxu0 0.0
      %583 = vmatpush1.msra.mxu0 0.0
      %584 = vmatprep.subr.mxu0 0.0
      %585 = vmatpush1.msra.mxu0 0.0
      %586 = vmatprep.subr.mxu0 0.0
      %587 = vmatpush1.msra.mxu0 0.0
      %588 = vmatprep.subr.mxu0 0.0
      %589 = vmatpush1.msra.mxu0 0.0
      %590 = vmatprep.subr.mxu0 0.0
      %591 = vmatpush1.msra.mxu0 0.0
      %592 = vmatprep.subr.mxu0 0.0
      %593 = vmatpush1.msra.mxu0 0.0
      %594 = vmatprep.subr.mxu0 0.0
      %595 = vmatpush1.msra.mxu0 0.0
      %596 = vmatprep.subr.mxu0 0.0
      %597 = vmatpush1.msra.mxu0 0.0
      %598 = vmatprep.subr.mxu0 0.0
      %599 = vmatpush1.msra.mxu0 0.0
      %600 = vmatprep.mubr.f32.mxu0 0.0
      %601 = vmatmul.mubr.f32.gmra.mrb[0].mxu0 %v531
      %v602 = vpop.f32.mrb[0].mxu0
      %v603 = vadd.f32 0.0, %v602
      %v604 = vpop.f32.mrb[0].mxu0
      %605 = vmatprep.mubr.f32.mxu0 0.0
      %606 = vmatmul.mubr.f32.gmra.mrb[0].mxu0 %v534
      %v607 = vpop.f32.mrb[0].mxu0
      %v608 = vadd.f32 0.0, %v607
      %v609 = vpop.f32.mrb[0].mxu0
      %610 = vdwg.mxu0
      %v611 = vadd.f32 %v356, %v603
      %v612 = vadd.f32 %v361, %v608
      %s613 = scalar_lea.vmem %s1, 240
      %v614 = vld [vmem:[%s613] sm:$0xff]
      %v615 = vld [vmem:[%s613 + $0x8] sm:$0xff]
      %v616 = vld [vmem:[%s613 + $0x10] sm:$0xff]
      %v617 = vld [vmem:[%s613 + $0x18] sm:$0xff]
      %v618 = vld [vmem:[%s613 + $0x20] sm:$0xff]
      %v619 = vld [vmem:[%s613 + $0x28] sm:$0xff]
      %620 = vmatprep.subr.mxu0 0.0
      %621 = vmatpush1.msra.mxu0 %v614
      %622 = vmatprep.subr.mxu0 0.0
      %623 = vmatpush1.msra.mxu0 %v615
      %624 = vmatprep.subr.mxu0 0.0
      %625 = vmatpush1.msra.mxu0 %v616
      %626 = vmatprep.subr.mxu0 0.0
      %627 = vmatpush1.msra.mxu0 %v617
      %628 = vmatprep.subr.mxu0 0.0
      %629 = vmatpush1.msra.mxu0 %v618
      %630 = vmatprep.subr.mxu0 0.0
      %631 = vmatpush1.msra.mxu0 %v619
      %632 = vmatprep.subr.mxu0 0.0
      %633 = vmatpush1.msra.mxu0 0.0
      %634 = vmatprep.subr.mxu0 0.0
      %635 = vmatpush1.msra.mxu0 0.0
      %636 = vmatprep.subr.mxu0 0.0
      %637 = vmatpush1.msra.mxu0 0.0
      %638 = vmatprep.subr.mxu0 0.0
      %639 = vmatpush1.msra.mxu0 0.0
      %640 = vmatprep.subr.mxu0 0.0
      %641 = vmatpush1.msra.mxu0 0.0
      %642 = vmatprep.subr.mxu0 0.0
      %643 = vmatpush1.msra.mxu0 0.0
      %644 = vmatprep.subr.mxu0 0.0
      %645 = vmatpush1.msra.mxu0 0.0
      %646 = vmatprep.subr.mxu0 0.0
      %647 = vmatpush1.msra.mxu0 0.0
      %648 = vmatprep.subr.mxu0 0.0
      %649 = vmatpush1.msra.mxu0 0.0
      %650 = vmatprep.subr.mxu0 0.0
      %651 = vmatpush1.msra.mxu0 0.0
      %652 = vmatprep.subr.mxu0 0.0
      %653 = vmatpush1.msra.mxu0 0.0
      %654 = vmatprep.subr.mxu0 0.0
      %655 = vmatpush1.msra.mxu0 0.0
      %656 = vmatprep.subr.mxu0 0.0
      %657 = vmatpush1.msra.mxu0 0.0
      %658 = vmatprep.subr.mxu0 0.0
      %659 = vmatpush1.msra.mxu0 0.0
      %660 = vmatprep.subr.mxu0 0.0
      %661 = vmatpush1.msra.mxu0 0.0
      %662 = vmatprep.subr.mxu0 0.0
      %663 = vmatpush1.msra.mxu0 0.0
      %664 = vmatprep.subr.mxu0 0.0
      %665 = vmatpush1.msra.mxu0 0.0
      %666 = vmatprep.subr.mxu0 0.0
      %667 = vmatpush1.msra.mxu0 0.0
      %668 = vmatprep.subr.mxu0 0.0
      %669 = vmatpush1.msra.mxu0 0.0
      %670 = vmatprep.subr.mxu0 0.0
      %671 = vmatpush1.msra.mxu0 0.0
      %672 = vmatprep.subr.mxu0 0.0
      %673 = vmatpush1.msra.mxu0 0.0
      %674 = vmatprep.subr.mxu0 0.0
      %675 = vmatpush1.msra.mxu0 0.0
      %676 = vmatprep.subr.mxu0 0.0
      %677 = vmatpush1.msra.mxu0 0.0
      %678 = vmatprep.subr.mxu0 0.0
      %679 = vmatpush1.msra.mxu0 0.0
      %680 = vmatprep.subr.mxu0 0.0
      %681 = vmatpush1.msra.mxu0 0.0
      %682 = vmatprep.subr.mxu0 0.0
      %683 = vmatpush1.msra.mxu0 0.0
      %684 = vmatprep.mubr.f32.mxu0 0.0
      %685 = vmatmul.mubr.f32.gmra.mrb[0].mxu0 %v531
      %v686 = vpop.f32.mrb[0].mxu0
      %v687 = vadd.f32 0.0, %v686
      %v688 = vpop.f32.mrb[0].mxu0
      %689 = vmatprep.mubr.f32.mxu0 0.0
      %690 = vmatmul.mubr.f32.gmra.mrb[0].mxu0 %v534
      %v691 = vpop.f32.mrb[0].mxu0
      %v692 = vadd.f32 0.0, %v691
      %v693 = vpop.f32.mrb[0].mxu0
      %694 = vdwg.mxu0
      %v695 = vadd.f32 %v513, %v687
      %v696 = vadd.f32 %v518, %v692
      %v697 = vld [vmem:[%s2] sm:$0x1]
      %v699 = vlaneseq
      %v700 = vshrl.u32 %v699, 7
      %v701 = vsub.s32 0, %v700
      %v702 = vrot.slane %v697, %v701
      %v704 = vadd.f32 %v611, %v702
      %v705 = vadd.f32 %v612, %v702
      %v706 = vmax.f32 %v704, 0.0
      %v707 = vmax.f32 %v705, 0.0
      %v708 = vadd.f32 %v695, %v702
      %v709 = vadd.f32 %v696, %v702
      %v710 = vmax.f32 %v708, 0.0
      %v711 = vmax.f32 %v709, 0.0
      %v712 = vmax.f32 %v706, %v710
      %v713 = vmax.f32 %v707, %v711
      %vm714 = vcmask 523264
      %715 = vst.msk [vmem:[#allocation3] sm:$0xff] %vm714, %v712
      %716 = vst.msk [vmem:[#allocation3 + $0x8] sm:$0xff] %vm714, %v713
      %v717 = vld [vmem:[#allocation3] sm:$0x1]
      %v718 = vld [vmem:[#allocation3 + $0x1] sm:$0x1]
      %v719 = vmax.f32 %v717, %v718
      %vm720 = vcmask 516096
      %721 = vst.msk [vmem:[%s168] sm:$0x1] %vm720, %v719
      %v722 = vld [vmem:[#allocation3 + $0x2] sm:$0x1]
      %v723 = vld [vmem:[#allocation3 + $0x3] sm:$0x1]
      %v724 = vmax.f32 %v722, %v723
      %725 = vst.msk [vmem:[%s168 + $0x1] sm:$0x1] %vm720, %v724
      %v726 = vld [vmem:[#allocation3 + $0x4] sm:$0x1]
      %v727 = vld [vmem:[#allocation3 + $0x5] sm:$0x1]
      %v728 = vmax.f32 %v726, %v727
      %729 = vst.msk [vmem:[%s168 + $0x2] sm:$0x1] %vm720, %v728
      %v730 = vld [vmem:[#allocation3 + $0x6] sm:$0x1]
      %v731 = vld [vmem:[#allocation3 + $0x7] sm:$0x1]
      %v732 = vmax.f32 %v730, %v731
      %733 = vst.msk [vmem:[%s168 + $0x3] sm:$0x1] %vm720, %v732
      %v734 = vld [vmem:[#allocation3 + $0x8] sm:$0x1]
      %v735 = vld [vmem:[#allocation3 + $0x9] sm:$0x1]
      %v736 = vmax.f32 %v734, %v735
      %737 = vst.msk [vmem:[%s168 + $0x4] sm:$0x1] %vm720, %v736
      %v738 = vld [vmem:[#allocation3 + $0xa] sm:$0x1]
      %v739 = vld [vmem:[#allocation3 + $0xb] sm:$0x1]
      %v740 = vmax.f32 %v738, %v739
      %741 = vst.msk [vmem:[%s168 + $0x5] sm:$0x1] %vm720, %v740
      %v742 = vld [vmem:[#allocation3 + $0xc] sm:$0x1]
      %v743 = vld [vmem:[#allocation3 + $0xd] sm:$0x1]
      %v744 = vmax.f32 %v742, %v743
      %745 = vst.msk [vmem:[%s168 + $0x6] sm:$0x1] %vm720, %v744
      %v746 = vld [vmem:[#allocation3 + $0xe] sm:$0x1]
      %v747 = vld [vmem:[#allocation3 + $0xf] sm:$0x1]
      %v748 = vmax.f32 %v746, %v747
      %749 = vst.msk [vmem:[%s168 + $0x7] sm:$0x1] %vm720, %v748
      %p750 = scmp.lt.s32.totalorder %s14, 1
      %s751 = scalar_select %p750, %s14, 1
      %s752 = smul.addr %s751, 8
      %s753 = scalar_lea.vmem %s3, %s752
      // Predicated region
      $region33: #{unet_forward.5} parent=31 // pred_check
        %p754 = pneg %p100
      $region34: #{unet_forward.5} parent=31 // pred_check_branch
        %756 = sbr.rel (%p754) target = $region36
      $region35: #{unet_forward.5} parent=31 // pred_region
        _
      $region36: #{unet_forward.5} parent=31 // pred_fallthru
        _
    $region32: #{unet_forward.5} parent=5 // pred_fallthru
      _
    %p757 = scmp.le.s32.totalorder 2, %s9
    // Predicated region
    $region37: #{unet_forward.5} parent=5 // pred_check
      %p758 = pneg %p757
    $region38: #{unet_forward.5} parent=5 // pred_check_branch
      %760 = sbr.rel (%p758) target = $region40
    $region39: #{unet_forward.5} parent=5 // pred_region
      %s761 = ssub.s32 %s9, 2
      // Predicated region
      $region41: #{unet_forward.5} parent=39 // pred_check
        %p762 = pneg %p106
      $region42: #{unet_forward.5} parent=39 // pred_check_branch
        %764 = sbr.rel (%p762) target = $region44
      $region43: #{unet_forward.5} parent=39 // pred_region
        %p765 = scmp.lt.s32.totalorder %s15, 1
        %s766 = scalar_select %p765, %s15, 1
        %s767 = smul.addr %s766, 8
        %s768 = scalar_lea.vmem %s3, %s767
      $region44: #{unet_forward.5} parent=39 // pred_fallthru
        _
    $region40: #{unet_forward.5} parent=5 // pred_fallthru
      _
  $region6: #{unet_forward.5} parent=0 // loop_footer
    %s13 = sadd.s32 1, %s9
  $region7: #{unet_forward.5} parent=0 // loop_footer_branch
    %8 = sbr.rel target = $region3
  $region8: #{unet_forward.5} parent=0 // loop_exit
    _

// kernel: tile.38
$region0: #{tile.38}
  #allocation0 [shape = 's32[1]{0}', space=sflag, size = 0x4, scoped, tag = 'scoped memory for tile.38']
  %s0 = inlined_call_operand.vmem [shape: f32[16], index: 0, kind: input, shape index: {}]
  %s1 = inlined_call_operand.vmem [shape: f32[4,16], index: 1, kind: output, shape index: {}]
  // Predicated region
  $region2: #{tile.38} parent=0 // pred_check
    _
  $region3: #{tile.38} parent=0 // pred_check_branch
    %3 = sbr.rel (0) target = $region5
  $region4: #{tile.38} parent=0 // pred_region
    _
  $region5: #{tile.38} parent=0 // pred_fallthru
    _
  %v4 = vld [vmem:[%s0] ss:$0 sm:$0xff]
  %5 = vst [vmem:[%s1] sm:$0xf] %v4

// kernel: tile.39
$region0: #{tile.39}
  %s0 = inlined_call_operand.vmem [shape: f32[4,16], index: 0, kind: input, shape index: {}]
  %s1 = inlined_call_operand.vmem [shape: f32[1,64], index: 1, kind: output, shape index: {}]
  $region1: #{tile.39} parent=0
    #allocation0 [shape = 'u8[4096]{0}', space=vmem, size = 0x1000, scoped, tag = 'scoped mem for output reshape']
    #allocation1 [shape = 'u8[4096]{0}', space=vmem, size = 0x1000, scoped, tag = 'scoped mem for input reshape']
    %s3 = sshllo.u32 0, 4
    %v4 = vld [vmem:[%s0] sm:%s3]
    %5 = vst [vmem:[#allocation1] sm:%s3] %v4
    %v6 = vld [vmem:[#allocation1] sm:$0x1]
    %vm7 = vcmask 130048
    %8 = vst.msk [vmem:[#allocation0] sm:$0x1] %vm7, %v6
    %s9 = scalar_lea.vmem [#allocation1], 3
    %v10 = vld [vmem:[%s9] sm:$0x1]
    %11 = vrot.lane.b32.xlu0 %v10, 48
    %v12 = vpop.permute.xlu0 %11
    %vm13 = vcmask 523648
    %14 = vst.msk [vmem:[#allocation0] sm:$0x1] %vm13, %v12
    %s15 = scalar_lea.vmem [#allocation1], 2
    %v16 = vld [vmem:[%s15] sm:$0x1]
    %17 = vrot.lane.b32.xlu0 %v16, 32
    %v18 = vpop.permute.xlu0 %17
    %vm19 = vcmask 392448
    %20 = vst.msk [vmem:[#allocation0] sm:$0x1] %vm19, %v18
    %s21 = scalar_lea.vmem [#allocation1], 1
    %v22 = vld [vmem:[%s21] sm:$0x1]
    %23 = vrot.lane.b32.xlu0 %v22, 16
    %v24 = vpop.permute.xlu0 %23
    %vm25 = vcmask 261248
    %26 = vst.msk [vmem:[#allocation0] sm:$0x1] %vm25, %v24
    %s28 = sshllo.u32 0, 1
    %v30 = vld [vmem:[#allocation0] sm:%s28]
    %s31 = sshllo.u32 0, 1
    %32 = vst [vmem:[%s1] sm:%s31] %v30

// kernel: tile.44
$region0: #{tile.44}
  %s0 = inlined_call_operand.vmem [shape: f32[4,16,16], index: 0, kind: input, shape index: {}]
  %s1 = inlined_call_operand.vmem [shape: f32[64,16], index: 1, kind: output, shape index: {}]
  $region1: #{tile.44} parent=0
    #allocation0 [shape = 'u8[65536]{0}', space=vmem, size = 0x10000, scoped, tag = 'scoped mem for input reshape']
    %s3 = sshllo.u32 0, 4
    %s4 = smul.addr 4, 15
    %s5 = scalar_lea.vmem %s0, %s4
    %v6 = vld [vmem:[%s5] sm:%s3]
    %s7 = scalar_lea.vmem [#allocation0], 120
    %8 = vst [vmem:[%s7] sm:%s3] %v6
    %s9 = smul.addr 4, 14
    %s10 = scalar_lea.vmem %s0, %s9
    %v11 = vld [vmem:[%s10] sm:%s3]
    %s12 = scalar_lea.vmem [#allocation0], 112
    %13 = vst [vmem:[%s12] sm:%s3] %v11
    %s14 = smul.addr 4, 13
    %s15 = scalar_lea.vmem %s0, %s14
    %v16 = vld [vmem:[%s15] sm:%s3]
    %s17 = scalar_lea.vmem [#allocation0], 104
    %18 = vst [vmem:[%s17] sm:%s3] %v16
    %s19 = smul.addr 4, 12
    %s20 = scalar_lea.vmem %s0, %s19
    %v21 = vld [vmem:[%s20] sm:%s3]
    %s22 = scalar_lea.vmem [#allocation0], 96
    %23 = vst [vmem:[%s22] sm:%s3] %v21
    %s24 = smul.addr 4, 11
    %s25 = scalar_lea.vmem %s0, %s24
    %v26 = vld [vmem:[%s25] sm:%s3]
    %s27 = scalar_lea.vmem [#allocation0], 88
    %28 = vst [vmem:[%s27] sm:%s3] %v26
    %s29 = smul.addr 4, 10
    %s30 = scalar_lea.vmem %s0, %s29
    %v31 = vld [vmem:[%s30] sm:%s3]
    %s32 = scalar_lea.vmem [#allocation0], 80
    %33 = vst [vmem:[%s32] sm:%s3] %v31
    %s34 = smul.addr 4, 9
    %s35 = scalar_lea.vmem %s0, %s34
    %v36 = vld [vmem:[%s35] sm:%s3]
    %s37 = scalar_lea.vmem [#allocation0], 72
    %38 = vst [vmem:[%s37] sm:%s3] %v36
    %s39 = smul.addr 4, 8
    %s40 = scalar_lea.vmem %s0, %s39
    %v41 = vld [vmem:[%s40] sm:%s3]
    %s42 = scalar_lea.vmem [#allocation0], 64
    %43 = vst [vmem:[%s42] sm:%s3] %v41
    %s44 = smul.addr 4, 7
    %s45 = scalar_lea.vmem %s0, %s44
    %v46 = vld [vmem:[%s45] sm:%s3]
    %s47 = scalar_lea.vmem [#allocation0], 56
    %48 = vst [vmem:[%s47] sm:%s3] %v46
    %s49 = smul.addr 4, 6
    %s50 = scalar_lea.vmem %s0, %s49
    %v51 = vld [vmem:[%s50] sm:%s3]
    %s52 = scalar_lea.vmem [#allocation0], 48
    %53 = vst [vmem:[%s52] sm:%s3] %v51
    %s54 = smul.addr 4, 5
    %s55 = scalar_lea.vmem %s0, %s54
    %v56 = vld [vmem:[%s55] sm:%s3]
    %s57 = scalar_lea.vmem [#allocation0], 40
    %58 = vst [vmem:[%s57] sm:%s3] %v56
    %s59 = smul.addr 4, 4
    %s60 = scalar_lea.vmem %s0, %s59
    %v61 = vld [vmem:[%s60] sm:%s3]
    %s62 = scalar_lea.vmem [#allocation0], 32
    %63 = vst [vmem:[%s62] sm:%s3] %v61
    %s64 = smul.addr 4, 3
    %s65 = scalar_lea.vmem %s0, %s64
    %v66 = vld [vmem:[%s65] sm:%s3]
    %s67 = scalar_lea.vmem [#allocation0], 24
    %68 = vst [vmem:[%s67] sm:%s3] %v66
    %s69 = smul.addr 4, 2
    %s70 = scalar_lea.vmem %s0, %s69
    %v71 = vld [vmem:[%s70] sm:%s3]
    %s72 = scalar_lea.vmem [#allocation0], 16
    %73 = vst [vmem:[%s72] sm:%s3] %v71
    %s74 = scalar_lea.vmem %s0, 4
    %v75 = vld [vmem:[%s74] sm:%s3]
    %s76 = scalar_lea.vmem [#allocation0], 8
    %77 = vst [vmem:[%s76] sm:%s3] %v75
    %v78 = vld [vmem:[%s0] sm:%s3]
    %79 = vst [vmem:[#allocation0] sm:%s3] %v78
    %v80 = vld [vmem:[#allocation0] ss:$8 sm:$0xf]
    %v81 = vld [vmem:[#allocation0] ss:$8 sm:$0xf0]
    %vm82 = vcmask 1047556
    %v83 = vsel %vm82, %v81, %v80
    %vm84 = vcmask 130048
    %85 = vst.msk [vmem:[%s1] sm:$0xff] %vm84, %v83
    %s86 = scalar_lea.vmem [#allocation0], 64
    %v87 = vld [vmem:[%s86] ss:$8 sm:$0xf]
    %s88 = scalar_lea.vmem [#allocation0], 64
    %v89 = vld [vmem:[%s88] ss:$8 sm:$0xf0]
    %vm90 = vcmask 1047556
    %v91 = vsel %vm90, %v89, %v87
    %vm92 = vcmask 130048
    %s93 = scalar_lea.vmem %s1, 8
    %94 = vst.msk [vmem:[%s93] sm:$0xff] %vm92, %v91
    %s95 = scalar_lea.vmem [#allocation0], 3
    %v96 = vld [vmem:[%s95] ss:$8 sm:$0xf]
    %s97 = scalar_lea.vmem [#allocation0], 3
    %v98 = vld [vmem:[%s97] ss:$8 sm:$0xf0]
    %vm99 = vcmask 1047556
    %v100 = vsel %vm99, %v98, %v96
    %101 = vrot.lane.b32.xlu0 %v100, 48
    %v102 = vpop.permute.xlu0 %101
    %vm103 = vcmask 523648
    %104 = vst.msk [vmem:[%s1] sm:$0xff] %vm103, %v102
    %s105 = scalar_lea.vmem [#allocation0], 67
    %v106 = vld [vmem:[%s105] ss:$8 sm:$0xf]
    %s107 = scalar_lea.vmem [#allocation0], 67
    %v108 = vld [vmem:[%s107] ss:$8 sm:$0xf0]
    %vm109 = vcmask 1047556
    %v110 = vsel %vm109, %v108, %v106
    %111 = vrot.lane.b32.xlu0 %v110, 48
    %v112 = vpop.permute.xlu0 %111
    %vm113 = vcmask 523648
    %s114 = scalar_lea.vmem %s1, 8
    %115 = vst.msk [vmem:[%s114] sm:$0xff] %vm113, %v112
    %s116 = scalar_lea.vmem [#allocation0], 2
    %v117 = vld [vmem:[%s116] ss:$8 sm:$0xf]
    %s118 = scalar_lea.vmem [#allocation0], 2
    %v119 = vld [vmem:[%s118] ss:$8 sm:$0xf0]
    %vm120 = vcmask 1047556
    %v121 = vsel %vm120, %v119, %v117
    %122 = vrot.lane.b32.xlu0 %v121, 32
    %v123 = vpop.permute.xlu0 %122
    %vm124 = vcmask 392448
    %125 = vst.msk [vmem:[%s1] sm:$0xff] %vm124, %v123
    %s126 = scalar_lea.vmem [#allocation0], 66
    %v127 = vld [vmem:[%s126] ss:$8 sm:$0xf]
    %s128 = scalar_lea.vmem [#allocation0], 66
    %v129 = vld [vmem:[%s128] ss:$8 sm:$0xf0]
    %vm130 = vcmask 1047556
    %v131 = vsel %vm130, %v129, %v127
    %132 = vrot.lane.b32.xlu0 %v131, 32
    %v133 = vpop.permute.xlu0 %132
    %vm134 = vcmask 392448
    %s135 = scalar_lea.vmem %s1, 8
    %136 = vst.msk [vmem:[%s135] sm:$0xff] %vm134, %v133
    %s137 = scalar_lea.vmem [#allocation0], 1
    %v138 = vld [vmem:[%s137] ss:$8 sm:$0xf]
    %s139 = scalar_lea.vmem [#allocation0], 1
    %v140 = vld [vmem:[%s139] ss:$8 sm:$0xf0]
    %vm141 = vcmask 1047556
    %v142 = vsel %vm141, %v140, %v138
    %143 = vrot.lane.b32.xlu0 %v142, 16
    %v144 = vpop.permute.xlu0 %143
    %vm145 = vcmask 261248
    %146 = vst.msk [vmem:[%s1] sm:$0xff] %vm145, %v144
    %s147 = scalar_lea.vmem [#allocation0], 65
    %v148 = vld [vmem:[%s147] ss:$8 sm:$0xf]
    %s149 = scalar_lea.vmem [#allocation0], 65
    %v150 = vld [vmem:[%s149] ss:$8 sm:$0xf0]
    %vm151 = vcmask 1047556
    %v152 = vsel %vm151, %v150, %v148
    %153 = vrot.lane.b32.xlu0 %v152, 16
    %v154 = vpop.permute.xlu0 %153
    %vm155 = vcmask 261248
    %s156 = scalar_lea.vmem %s1, 8
    %157 = vst.msk [vmem:[%s156] sm:$0xff] %vm155, %v154

// kernel: unet_forward.6
$region0: #{unet_forward.6}
  #allocation0 [shape = 'u32[]', space=smem, size = 0x4, offset = 0x4, fixed_abs, tag = 'smem constant byte address 0x4 - core index']
  #allocation1 [shape = 'u32[144,128]{1,0:T(1,128)}', space=vmem, size = 0x12000, scoped, tag = 'internal scratch']
  #allocation2 [shape = 'f32[10,64]{1,0:T(8,128)}', space=vmem, size = 0x2000, scoped, tag = 'scratch operand']
  #allocation3 [shape = 'f32[8,64]{1,0:T(8,128)}', space=vmem, size = 0x1000, scoped, tag = 'scratch operand']
  %s0 = inlined_call_operand.vmem [shape: f32[2,8,64], index: 0, kind: input, shape index: {}]
  %s1 = inlined_call_operand.vmem [shape: f32[6,64,64], index: 1, kind: input, shape index: {}]
  %s2 = inlined_call_operand.vmem [shape: f32[1,64], index: 2, kind: input, shape index: {}]
  %s3 = inlined_call_operand.vmem [shape: f32[2,4,64], index: 3, kind: output, shape index: {}]
  %s4 = sld [smem:[#allocation0]]
  $region45: #{unet_forward.6} parent=0
    _
  %s6 = ssub.s32 1, %s4
  %s7 = scalar_select 0, %s6, %s4
  loop: start=0, step=1, limit=4
  $region2: #{unet_forward.6} parent=0 // loop_pre_header
    _
  $region3: #{unet_forward.6} parent=0 // loop_header
    %s9 = sphi 0, %s13
    %p10 = scmp.ge.s32.totalorder %s9, 4
    %s19 = sphi 0, %s21
    %s22 = sphi 0, %s19
    %s23 = sphi 0, %s22
    %s39 = sphi 0, %s23
    %s43 = sphi 0, %s43
    %s45 = sphi 0, %s43
    %s46 = sphi 0, %s45
    %s60 = sphi 0, %s46
    %s64 = sphi 0, %s64
    %s66 = sphi 0, %s64
    %s67 = sphi 0, %s66
    %s81 = sphi 0, %s67
    %s87 = sphi 0, %s89
    %s90 = sphi 0, %s87
    %s91 = sphi 0, %s90
    %s107 = sphi 0, %s91
  $region4: #{unet_forward.6} parent=0 // loop_header_branch
    %12 = sbr.rel (%p10) target = $region8
  $region5: #{unet_forward.6} parent=0 // loop_body
    %s14 = ssub.s32 %s9, 1
    %s15 = ssub.s32 %s9, 2
    %s16 = sadd.s32 %s9, 1
    %s17 = ssub.s32 %s9, %s16
    %p18 = scmp.eq.s32.totalorder %s17, 0
    %s20 = sadd.s32 %s19, 1
    %s21 = scalar_select %p18, %s19, %s20
    %p24 = pneg %p18
    %p25 = scmp.eq.s32.totalorder %s9, 1
    %p26 = por %p24, %p25
    %p27 = scmp.ne.s32.totalorder %s19, %s22
    %p28 = scmp.eq.s32.totalorder %s9, 0
    %p29 = por %p27, %p28
    %p30 = scmp.ne.s32.totalorder %s19, %s22
    %p31 = scmp.eq.s32.totalorder %s14, 1
    %p32 = por %p30, %p31
    %p33 = scmp.ne.s32.totalorder %s22, %s23
    %p34 = scmp.eq.s32.totalorder %s14, 0
    %p35 = por %p33, %p34
    %p36 = scmp.ne.s32.totalorder %s22, %s23
    %p37 = scmp.eq.s32.totalorder %s15, 1
    %p38 = por %p36, %p37
    %p40 = scmp.ne.s32.totalorder %s23, %s39
    %p41 = scmp.eq.s32.totalorder %s15, 0
    %p42 = por %p40, %p41
    %s44 = sadd.s32 %s43, 1
    %p47 = scmp.eq.s32.totalorder %s9, 1
    %p48 = scmp.ne.s32.totalorder %s43, %s45
    %p49 = scmp.eq.s32.totalorder %s9, 0
    %p50 = por %p48, %p49
    %p51 = scmp.ne.s32.totalorder %s43, %s45
    %p52 = scmp.eq.s32.totalorder %s14, 1
    %p53 = por %p51, %p52
    %p54 = scmp.ne.s32.totalorder %s45, %s46
    %p55 = scmp.eq.s32.totalorder %s14, 0
    %p56 = por %p54, %p55
    %p57 = scmp.ne.s32.totalorder %s45, %s46
    %p58 = scmp.eq.s32.totalorder %s15, 1
    %p59 = por %p57, %p58
    %p61 = scmp.ne.s32.totalorder %s46, %s60
    %p62 = scmp.eq.s32.totalorder %s15, 0
    %p63 = por %p61, %p62
    %s65 = sadd.s32 %s64, 1
    %p68 = scmp.eq.s32.totalorder %s9, 1
    %p69 = scmp.ne.s32.totalorder %s64, %s66
    %p70 = scmp.eq.s32.totalorder %s9, 0
    %p71 = por %p69, %p70
    %p72 = scmp.ne.s32.totalorder %s64, %s66
    %p73 = scmp.eq.s32.totalorder %s14, 1
    %p74 = por %p72, %p73
    %p75 = scmp.ne.s32.totalorder %s66, %s67
    %p76 = scmp.eq.s32.totalorder %s14, 0
    %p77 = por %p75, %p76
    %p78 = scmp.ne.s32.totalorder %s66, %s67
    %p79 = scmp.eq.s32.totalorder %s15, 1
    %p80 = por %p78, %p79
    %p82 = scmp.ne.s32.totalorder %s67, %s81
    %p83 = scmp.eq.s32.totalorder %s15, 0
    %p84 = por %p82, %p83
    %s85 = ssub.s32 %s9, %s16
    %p86 = scmp.eq.s32.totalorder %s85, 0
    %s88 = sadd.s32 %s87, 1
    %s89 = scalar_select %p86, %s87, %s88
    %p92 = pneg %p86
    %p93 = scmp.eq.s32.totalorder %s9, 1
    %p94 = por %p92, %p93
    %p95 = scmp.ne.s32.totalorder %s87, %s90
    %p96 = scmp.eq.s32.totalorder %s9, 0
    %p97 = por %p95, %p96
    %p98 = scmp.ne.s32.totalorder %s87, %s90
    %p99 = scmp.eq.s32.totalorder %s14, 1
    %p100 = por %p98, %p99
    %p101 = scmp.ne.s32.totalorder %s90, %s91
    %p102 = scmp.eq.s32.totalorder %s14, 0
    %p103 = por %p101, %p102
    %p104 = scmp.ne.s32.totalorder %s90, %s91
    %p105 = scmp.eq.s32.totalorder %s15, 1
    %p106 = por %p104, %p105
    %p108 = scmp.ne.s32.totalorder %s91, %s107
    %p109 = scmp.eq.s32.totalorder %s15, 0
    %p110 = por %p108, %p109
    %p111 = scmp.le.s32.totalorder 1, %s9
    %p112 = scmp.lt.s32.totalorder %s9, 3
    %p113 = pnand %p111, %p112
    %p114 = pneg %p113
    // Predicated region
    $region9: #{unet_forward.6} parent=5 // pred_check
      _
    $region10: #{unet_forward.6} parent=5 // pred_check_branch
      %116 = sbr.rel (%p113) target = $region12
    $region11: #{unet_forward.6} parent=5 // pred_region
      %s117 = ssub.s32 %s9, 1
      // Predicated region
      $region13: #{unet_forward.6} parent=11 // pred_check
        %p118 = pneg %p56
      $region14: #{unet_forward.6} parent=11 // pred_check_branch
        %120 = sbr.rel (%p118) target = $region16
      $region15: #{unet_forward.6} parent=11 // pred_region
        _
      $region16: #{unet_forward.6} parent=11 // pred_fallthru
        _
      // Predicated region
      $region17: #{unet_forward.6} parent=11 // pred_check
        %p121 = pneg %p77
      $region18: #{unet_forward.6} parent=11 // pred_check_branch
        %123 = sbr.rel (%p121) target = $region20
      $region19: #{unet_forward.6} parent=11 // pred_region
        _
      $region20: #{unet_forward.6} parent=11 // pred_fallthru
        _
    $region12: #{unet_forward.6} parent=5 // pred_fallthru
      _
    %p124 = scmp.lt.s32.totalorder %s9, 2
    // Predicated region
    $region21: #{unet_forward.6} parent=5 // pred_check
      %p125 = pneg %p124
    $region22: #{unet_forward.6} parent=5 // pred_check_branch
      %127 = sbr.rel (%p125) target = $region24
    $region23: #{unet_forward.6} parent=5 // pred_region
      // Predicated region
      $region25: #{unet_forward.6} parent=23 // pred_check
        %p128 = pneg %p29
      $region26: #{unet_forward.6} parent=23 // pred_check_branch
        %130 = sbr.rel (%p128) target = $region28
      $region27: #{unet_forward.6} parent=23 // pred_region
        %p131 = scmp.lt.s32.totalorder %s9, 1
        %s132 = scalar_select %p131, %s9, 1
        %s133 = smul.addr %s132, 8
        %s134 = scalar_lea.vmem %s0, %s133
      $region28: #{unet_forward.6} parent=23 // pred_fallthru
        _
    $region24: #{unet_forward.6} parent=5 // pred_fallthru
      _
    %p135 = scmp.le.s32.totalorder 1, %s9
    %p136 = scmp.lt.s32.totalorder %s9, 3
    %p137 = pnand %p135, %p136
    %p138 = pneg %p137
    // Predicated region
    $region29: #{unet_forward.6} parent=5 // pred_check
      _
    $region30: #{unet_forward.6} parent=5 // pred_check_branch
      %140 = sbr.rel (%p137) target = $region32
    $region31: #{unet_forward.6} parent=5 // pred_region
      %s141 = ssub.s32 %s9, 1
      %p142 = scmp.lt.s32.totalorder %s14, 1
      %s143 = scalar_select %p142, %s14, 1
      %s144 = smul.addr %s143, 8
      %s145 = scalar_lea.vmem %s0, %s144
      %p146 = pneg %p35
      %p147 = pneg %p32
      %p148 = pneg %p56
      %p149 = pneg %p53
      %p150 = pneg %p77
      %p151 = pneg %p74
      %p152 = pneg %p103
      %p153 = pneg %p100
      %p154 = scmp.lt.s32.totalorder %s14, 1
      %s155 = scalar_select %p154, %s14, 1
      %s156 = smul.addr %s155, 4
      %s157 = scalar_lea.vmem %s3, %s156
      %p158 = scmp.lt.s32.totalorder %s14, 1
      %s159 = scalar_select %p158, %s14, 1
      %s160 = smul.addr %s159, 8
      %s161 = scalar_lea.vmem %s0, %s160
      %p162 = scmp.lt.s32.totalorder %s14, 1
      %s163 = scalar_select %p162, %s14, 1
      %s164 = smul.addr %s163, 4
      %s165 = scalar_lea.vmem %s3, %s164
      %vm166 = vcmask 523264
      %167 = vst.msk [vmem:[#allocation2] sm:$0xff] %vm166, 0.0
      %vm168 = vcmask 517120
      %169 = vst.msk [vmem:[#allocation2 + $0x8] sm:$0x3] %vm168, 0.0
      %v170 = vld [vmem:[%s161] sm:$0xff]
      %171 = vst.msk [vmem:[#allocation2 + $0x1] sm:$0xff] %vm166, %v170
      %v172 = vld [vmem:[#allocation2] sm:$0xff]
      %v173 = vld [vmem:[%s1] sm:$0xff]
      %v174 = vld [vmem:[%s1 + $0x8] sm:$0xff]
      %v175 = vld [vmem:[%s1 + $0x10] sm:$0xff]
      %v176 = vld [vmem:[%s1 + $0x18] sm:$0xff]
      %v177 = vld [vmem:[%s1 + $0x20] sm:$0xff]
      %v178 = vld [vmem:[%s1 + $0x28] sm:$0xff]
      %v179 = vld [vmem:[%s1 + $0x30] sm:$0xff]
      %v180 = vld [vmem:[%s1 + $0x38] sm:$0xff]
      %s181 = scalar_lea.vmem %s1, 64
      %v182 = vld [vmem:[%s181] sm:$0xff]
      %v183 = vld [vmem:[%s181 + $0x8] sm:$0xff]
      %v184 = vld [vmem:[%s181 + $0x10] sm:$0xff]
      %v185 = vld [vmem:[%s181 + $0x18] sm:$0xff]
      %v186 = vld [vmem:[%s181 + $0x20] sm:$0xff]
      %v187 = vld [vmem:[%s181 + $0x28] sm:$0xff]
      %v188 = vld [vmem:[%s181 + $0x30] sm:$0xff]
      %v189 = vld [vmem:[%s181 + $0x38] sm:$0xff]
      %v190 = vld [vmem:[#allocation2 + $0x1] sm:$0xff]
      %s191 = scalar_lea.vmem %s1, 128
      %v192 = vld [vmem:[%s191] sm:$0xff]
      %v193 = vld [vmem:[%s191 + $0x8] sm:$0xff]
      %v194 = vld [vmem:[%s191 + $0x10] sm:$0xff]
      %v195 = vld [vmem:[%s191 + $0x18] sm:$0xff]
      %v196 = vld [vmem:[%s191 + $0x20] sm:$0xff]
      %v197 = vld [vmem:[%s191 + $0x28] sm:$0xff]
      %v198 = vld [vmem:[%s191 + $0x30] sm:$0xff]
      %v199 = vld [vmem:[%s191 + $0x38] sm:$0xff]
      %v201 = vsel %vm166, %v190, 0
      %203 = vmatprep.subr.mxu0 0.0
      %204 = vmatpush1.msra.mxu0 %v192
      %205 = vmatprep.subr.mxu0 0.0
      %206 = vmatpush1.msra.mxu0 %v193
      %207 = vmatprep.subr.mxu0 0.0
      %208 = vmatpush1.msra.mxu0 %v194
      %209 = vmatprep.subr.mxu0 0.0
      %210 = vmatpush1.msra.mxu0 %v195
      %211 = vmatprep.subr.mxu0 0.0
      %212 = vmatpush1.msra.mxu0 %v196
      %213 = vmatprep.subr.mxu0 0.0
      %214 = vmatpush1.msra.mxu0 %v197
      %215 = vmatprep.subr.mxu0 0.0
      %216 = vmatpush1.msra.mxu0 %v198
      %217 = vmatprep.subr.mxu0 0.0
      %218 = vmatpush1.msra.mxu0 %v199
      %219 = vmatprep.subr.mxu0 0.0
      %220 = vmatpush1.msra.mxu0 0.0
      %221 = vmatprep.subr.mxu0 0.0
      %222 = vmatpush1.msra.mxu0 0.0
      %223 = vmatprep.subr.mxu0 0.0
      %224 = vmatpush1.msra.mxu0 0.0
      %225 = vmatprep.subr.mxu0 0.0
      %226 = vmatpush1.msra.mxu0 0.0
      %227 = vmatprep.subr.mxu0 0.0
      %228 = vmatpush1.msra.mxu0 0.0
      %229 = vmatprep.subr.mxu0 0.0
      %230 = vmatpush1.msra.mxu0 0.0
      %231 = vmatprep.subr.mxu0 0.0
      %232 = vmatpush1.msra.mxu0 0.0
      %233 = vmatprep.subr.mxu0 0.0
      %234 = vmatpush1.msra.mxu0 0.0
      %235 = vmatprep.subr.mxu0 0.0
      %236 = vmatpush1.msra.mxu0 0.0
      %237 = vmatprep.subr.mxu0 0.0
      %238 = vmatpush1.msra.mxu0 0.0
      %239 = vmatprep.subr.mxu0 0.0
      %240 = vmatpush1.msra.mxu0 0.0
      %241 = vmatprep.subr.mxu0 0.0
      %242 = vmatpush1.msra.mxu0 0.0
      %243 = vmatprep.subr.mxu0 0.0
      %244 = vmatpush1.msra.mxu0 0.0
      %245 = vmatprep.subr.mxu0 0.0
      %246 = vmatpush1.msra.mxu0 0.0
      %247 = vmatprep.subr.mxu0 0.0
      %248 = vmatpush1.msra.mxu0 0.0
      %249 = vmatprep.subr.mxu0 0.0
      %250 = vmatpush1.msra.mxu0 0.0
      %251 = vmatprep.subr.mxu0 0.0
      %252 = vmatpush1.msra.mxu0 0.0
      %253 = vmatprep.subr.mxu0 0.0
      %254 = vmatpush1.msra.mxu0 0.0
      %255 = vmatprep.subr.mxu0 0.0
      %256 = vmatpush1.msra.mxu0 0.0
      %257 = vmatprep.subr.mxu0 0.0
      %258 = vmatpush1.msra.mxu0 0.0
      %259 = vmatprep.subr.mxu0 0.0
      %260 = vmatpush1.msra.mxu0 0.0
      %261 = vmatprep.subr.mxu0 0.0
      %262 = vmatpush1.msra.mxu0 0.0
      %263 = vmatprep.subr.mxu0 0.0
      %264 = vmatpush1.msra.mxu0 0.0
      %265 = vmatprep.subr.mxu0 0.0
      %266 = vmatpush1.msra.mxu0 0.0
      %267 = vmatprep.mubr.f32.mxu0 0.0
      %268 = vmatmul.mubr.f32.gmra.mrb[0].mxu0 %v201
      %v269 = vpop.f32.mrb[0].mxu0
      %v270 = vadd.f32 0.0, %v269
      %v271 = vpop.f32.mrb[0].mxu0
      %272 = vdwg.mxu0
      %v274 = vsel %vm166, %v172, 0
      %276 = vmatprep.subr.mxu0 0.0
      %277 = vmatpush1.msra.mxu0 %v173
      %278 = vmatprep.subr.mxu0 0.0
      %279 = vmatpush1.msra.mxu0 %v174
      %280 = vmatprep.subr.mxu0 0.0
      %281 = vmatpush1.msra.mxu0 %v175
      %282 = vmatprep.subr.mxu0 0.0
      %283 = vmatpush1.msra.mxu0 %v176
      %284 = vmatprep.subr.mxu0 0.0
      %285 = vmatpush1.msra.mxu0 %v177
      %286 = vmatprep.subr.mxu0 0.0
      %287 = vmatpush1.msra.mxu0 %v178
      %288 = vmatprep.subr.mxu0 0.0
      %289 = vmatpush1.msra.mxu0 %v179
      %290 = vmatprep.subr.mxu0 0.0
      %291 = vmatpush1.msra.mxu0 %v180
      %292 = vmatprep.subr.mxu0 0.0
      %293 = vmatpush1.msra.mxu0 0.0
      %294 = vmatprep.subr.mxu0 0.0
      %295 = vmatpush1.msra.mxu0 0.0
      %296 = vmatprep.subr.mxu0 0.0
      %297 = vmatpush1.msra.mxu0 0.0
      %298 = vmatprep.subr.mxu0 0.0
      %299 = vmatpush1.msra.mxu0 0.0
      %300 = vmatprep.subr.mxu0 0.0
      %301 = vmatpush1.msra.mxu0 0.0
      %302 = vmatprep.subr.mxu0 0.0
      %303 = vmatpush1.msra.mxu0 0.0
      %304 = vmatprep.subr.mxu0 0.0
      %305 = vmatpush1.msra.mxu0 0.0
      %306 = vmatprep.subr.mxu0 0.0
      %307 = vmatpush1.msra.mxu0 0.0
      %308 = vmatprep.subr.mxu0 0.0
      %309 = vmatpush1.msra.mxu0 0.0
      %310 = vmatprep.subr.mxu0 0.0
      %311 = vmatpush1.msra.mxu0 0.0
      %312 = vmatprep.subr.mxu0 0.0
      %313 = vmatpush1.msra.mxu0 0.0
      %314 = vmatprep.subr.mxu0 0.0
      %315 = vmatpush1.msra.mxu0 0.0
      %316 = vmatprep.subr.mxu0 0.0
      %317 = vmatpush1.msra.mxu0 0.0
      %318 = vmatprep.subr.mxu0 0.0
      %319 = vmatpush1.msra.mxu0 0.0
      %320 = vmatprep.subr.mxu0 0.0
      %321 = vmatpush1.msra.mxu0 0.0
      %322 = vmatprep.subr.mxu0 0.0
      %323 = vmatpush1.msra.mxu0 0.0
      %324 = vmatprep.subr.mxu0 0.0
      %325 = vmatpush1.msra.mxu0 0.0
      %326 = vmatprep.subr.mxu0 0.0
      %327 = vmatpush1.msra.mxu0 0.0
      %328 = vmatprep.subr.mxu0 0.0
      %329 = vmatpush1.msra.mxu0 0.0
      %330 = vmatprep.subr.mxu0 0.0
      %331 = vmatpush1.msra.mxu0 0.0
      %332 = vmatprep.subr.mxu0 0.0
      %333 = vmatpush1.msra.mxu0 0.0
      %334 = vmatprep.subr.mxu0 0.0
      %335 = vmatpush1.msra.mxu0 0.0
      %336 = vmatprep.subr.mxu0 0.0
      %337 = vmatpush1.msra.mxu0 0.0
      %338 = vmatprep.subr.mxu0 0.0
      %339 = vmatpush1.msra.mxu0 0.0
      %340 = vmatprep.mubr.f32.mxu0 0.0
      %341 = vmatmul.mubr.f32.gmra.mrb[0].mxu0 %v274
      %v342 = vpop.f32.mrb[0].mxu0
      %v343 = vadd.f32 %v270, %v342
      %v344 = vpop.f32.mrb[0].mxu0
      %345 = vdwg.mxu0
      %s346 = scalar_lea.vmem %s1, 192
      %v347 = vld [vmem:[%s346] sm:$0xff]
      %v348 = vld [vmem:[%s346 + $0x8] sm:$0xff]
      %v349 = vld [vmem:[%s346 + $0x10] sm:$0xff]
      %v350 = vld [vmem:[%s346 + $0x18] sm:$0xff]
      %v351 = vld [vmem:[%s346 + $0x20] sm:$0xff]
      %v352 = vld [vmem:[%s346 + $0x28] sm:$0xff]
      %v353 = vld [vmem:[%s346 + $0x30] sm:$0xff]
      %v354 = vld [vmem:[%s346 + $0x38] sm:$0xff]
      %355 = vmatprep.subr.mxu0 0.0
      %356 = vmatpush1.msra.mxu0 %v347
      %357 = vmatprep.subr.mxu0 0.0
      %358 = vmatpush1.msra.mxu0 %v348
      %359 = vmatprep.subr.mxu0 0.0
      %360 = vmatpush1.msra.mxu0 %v349
      %361 = vmatprep.subr.mxu0 0.0
      %362 = vmatpush1.msra.mxu0 %v350
      %363 = vmatprep.subr.mxu0 0.0
      %364 = vmatpush1.msra.mxu0 %v351
      %365 = vmatprep.subr.mxu0 0.0
      %366 = vmatpush1.msra.mxu0 %v352
      %367 = vmatprep.subr.mxu0 0.0
      %368 = vmatpush1.msra.mxu0 %v353
      %369 = vmatprep.subr.mxu0 0.0
      %370 = vmatpush1.msra.mxu0 %v354
      %371 = vmatprep.subr.mxu0 0.0
      %372 = vmatpush1.msra.mxu0 0.0
      %373 = vmatprep.subr.mxu0 0.0
      %374 = vmatpush1.msra.mxu0 0.0
      %375 = vmatprep.subr.mxu0 0.0
      %376 = vmatpush1.msra.mxu0 0.0
      %377 = vmatprep.subr.mxu0 0.0
      %378 = vmatpush1.msra.mxu0 0.0
      %379 = vmatprep.subr.mxu0 0.0
      %380 = vmatpush1.msra.mxu0 0.0
      %381 = vmatprep.subr.mxu0 0.0
      %382 = vmatpush1.msra.mxu0 0.0
      %383 = vmatprep.subr.mxu0 0.0
      %384 = vmatpush1.msra.mxu0 0.0
      %385 = vmatprep.subr.mxu0 0.0
      %386 = vmatpush1.msra.mxu0 0.0
      %387 = vmatprep.subr.mxu0 0.0
      %388 = vmatpush1.msra.mxu0 0.0
      %389 = vmatprep.subr.mxu0 0.0
      %390 = vmatpush1.msra.mxu0 0.0
      %391 = vmatprep.subr.mxu0 0.0
      %392 = vmatpush1.msra.mxu0 0.0
      %393 = vmatprep.subr.mxu0 0.0
      %394 = vmatpush1.msra.mxu0 0.0
      %395 = vmatprep.subr.mxu0 0.0
      %396 = vmatpush1.msra.mxu0 0.0
      %397 = vmatprep.subr.mxu0 0.0
      %398 = vmatpush1.msra.mxu0 0.0
      %399 = vmatprep.subr.mxu0 0.0
      %400 = vmatpush1.msra.mxu0 0.0
      %401 = vmatprep.subr.mxu0 0.0
      %402 = vmatpush1.msra.mxu0 0.0
      %403 = vmatprep.subr.mxu0 0.0
      %404 = vmatpush1.msra.mxu0 0.0
      %405 = vmatprep.subr.mxu0 0.0
      %406 = vmatpush1.msra.mxu0 0.0
      %407 = vmatprep.subr.mxu0 0.0
      %408 = vmatpush1.msra.mxu0 0.0
      %409 = vmatprep.subr.mxu0 0.0
      %410 = vmatpush1.msra.mxu0 0.0
      %411 = vmatprep.subr.mxu0 0.0
      %412 = vmatpush1.msra.mxu0 0.0
      %413 = vmatprep.subr.mxu0 0.0
      %414 = vmatpush1.msra.mxu0 0.0
      %415 = vmatprep.subr.mxu0 0.0
      %416 = vmatpush1.msra.mxu0 0.0
      %417 = vmatprep.subr.mxu0 0.0
      %418 = vmatpush1.msra.mxu0 0.0
      %419 = vmatprep.mubr.f32.mxu0 0.0
      %420 = vmatmul.mubr.f32.gmra.mrb[0].mxu0 %v201
      %v421 = vpop.f32.mrb[0].mxu0
      %v422 = vadd.f32 0.0, %v421
      %v423 = vpop.f32.mrb[0].mxu0
      %424 = vdwg.mxu0
      %425 = vmatprep.subr.mxu0 0.0
      %426 = vmatpush1.msra.mxu0 %v182
      %427 = vmatprep.subr.mxu0 0.0
      %428 = vmatpush1.msra.mxu0 %v183
      %429 = vmatprep.subr.mxu0 0.0
      %430 = vmatpush1.msra.mxu0 %v184
      %431 = vmatprep.subr.mxu0 0.0
      %432 = vmatpush1.msra.mxu0 %v185
      %433 = vmatprep.subr.mxu0 0.0
      %434 = vmatpush1.msra.mxu0 %v186
      %435 = vmatprep.subr.mxu0 0.0
      %436 = vmatpush1.msra.mxu0 %v187
      %437 = vmatprep.subr.mxu0 0.0
      %438 = vmatpush1.msra.mxu0 %v188
      %439 = vmatprep.subr.mxu0 0.0
      %440 = vmatpush1.msra.mxu0 %v189
      %441 = vmatprep.subr.mxu0 0.0
      %442 = vmatpush1.msra.mxu0 0.0
      %443 = vmatprep.subr.mxu0 0.0
      %444 = vmatpush1.msra.mxu0 0.0
      %445 = vmatprep.subr.mxu0 0.0
      %446 = vmatpush1.msra.mxu0 0.0
      %447 = vmatprep.subr.mxu0 0.0
      %448 = vmatpush1.msra.mxu0 0.0
      %449 = vmatprep.subr.mxu0 0.0
      %450 = vmatpush1.msra.mxu0 0.0
      %451 = vmatprep.subr.mxu0 0.0
      %452 = vmatpush1.msra.mxu0 0.0
      %453 = vmatprep.subr.mxu0 0.0
      %454 = vmatpush1.msra.mxu0 0.0
      %455 = vmatprep.subr.mxu0 0.0
      %456 = vmatpush1.msra.mxu0 0.0
      %457 = vmatprep.subr.mxu0 0.0
      %458 = vmatpush1.msra.mxu0 0.0
      %459 = vmatprep.subr.mxu0 0.0
      %460 = vmatpush1.msra.mxu0 0.0
      %461 = vmatprep.subr.mxu0 0.0
      %462 = vmatpush1.msra.mxu0 0.0
      %463 = vmatprep.subr.mxu0 0.0
      %464 = vmatpush1.msra.mxu0 0.0
      %465 = vmatprep.subr.mxu0 0.0
      %466 = vmatpush1.msra.mxu0 0.0
      %467 = vmatprep.subr.mxu0 0.0
      %468 = vmatpush1.msra.mxu0 0.0
      %469 = vmatprep.subr.mxu0 0.0
      %470 = vmatpush1.msra.mxu0 0.0
      %471 = vmatprep.subr.mxu0 0.0
      %472 = vmatpush1.msra.mxu0 0.0
      %473 = vmatprep.subr.mxu0 0.0
      %474 = vmatpush1.msra.mxu0 0.0
      %475 = vmatprep.subr.mxu0 0.0
      %476 = vmatpush1.msra.mxu0 0.0
      %477 = vmatprep.subr.mxu0 0.0
      %478 = vmatpush1.msra.mxu0 0.0
      %479 = vmatprep.subr.mxu0 0.0
      %480 = vmatpush1.msra.mxu0 0.0
      %481 = vmatprep.subr.mxu0 0.0
      %482 = vmatpush1.msra.mxu0 0.0
      %483 = vmatprep.subr.mxu0 0.0
      %484 = vmatpush1.msra.mxu0 0.0
      %485 = vmatprep.subr.mxu0 0.0
      %486 = vmatpush1.msra.mxu0 0.0
      %487 = vmatprep.subr.mxu0 0.0
      %488 = vmatpush1.msra.mxu0 0.0
      %489 = vmatprep.mubr.f32.mxu0 0.0
      %490 = vmatmul.mubr.f32.gmra.mrb[0].mxu0 %v274
      %v491 = vpop.f32.mrb[0].mxu0
      %v492 = vadd.f32 %v422, %v491
      %v493 = vpop.f32.mrb[0].mxu0
      %494 = vdwg.mxu0
      %v495 = vld [vmem:[#allocation2 + $0x2] sm:$0xff]
      %s496 = scalar_lea.vmem %s1, 256
      %v497 = vld [vmem:[%s496] sm:$0xff]
      %v498 = vld [vmem:[%s496 + $0x8] sm:$0xff]
      %v499 = vld [vmem:[%s496 + $0x10] sm:$0xff]
      %v500 = vld [vmem:[%s496 + $0x18] sm:$0xff]
      %v501 = vld [vmem:[%s496 + $0x20] sm:$0xff]
      %v502 = vld [vmem:[%s496 + $0x28] sm:$0xff]
      %v503 = vld [vmem:[%s496 + $0x30] sm:$0xff]
      %v504 = vld [vmem:[%s496 + $0x38] sm:$0xff]
      %v506 = vsel %vm166, %v495, 0
      %508 = vmatprep.subr.mxu0 0.0
      %509 = vmatpush1.msra.mxu0 %v497
      %510 = vmatprep.subr.mxu0 0.0
      %511 = vmatpush1.msra.mxu0 %v498
      %512 = vmatprep.subr.mxu0 0.0
      %513 = vmatpush1.msra.mxu0 %v499
      %514 = vmatprep.subr.mxu0 0.0
      %515 = vmatpush1.msra.mxu0 %v500
      %516 = vmatprep.subr.mxu0 0.0
      %517 = vmatpush1.msra.mxu0 %v501
      %518 = vmatprep.subr.mxu0 0.0
      %519 = vmatpush1.msra.mxu0 %v502
      %520 = vmatprep.subr.mxu0 0.0
      %521 = vmatpush1.msra.mxu0 %v503
      %522 = vmatprep.subr.mxu0 0.0
      %523 = vmatpush1.msra.mxu0 %v504
      %524 = vmatprep.subr.mxu0 0.0
      %525 = vmatpush1.msra.mxu0 0.0
      %526 = vmatprep.subr.mxu0 0.0
      %527 = vmatpush1.msra.mxu0 0.0
      %528 = vmatprep.subr.mxu0 0.0
      %529 = vmatpush1.msra.mxu0 0.0
      %530 = vmatprep.subr.mxu0 0.0
      %531 = vmatpush1.msra.mxu0 0.0
      %532 = vmatprep.subr.mxu0 0.0
      %533 = vmatpush1.msra.mxu0 0.0
      %534 = vmatprep.subr.mxu0 0.0
      %535 = vmatpush1.msra.mxu0 0.0
      %536 = vmatprep.subr.mxu0 0.0
      %537 = vmatpush1.msra.mxu0 0.0
      %538 = vmatprep.subr.mxu0 0.0
      %539 = vmatpush1.msra.mxu0 0.0
      %540 = vmatprep.subr.mxu0 0.0
      %541 = vmatpush1.msra.mxu0 0.0
      %542 = vmatprep.subr.mxu0 0.0
      %543 = vmatpush1.msra.mxu0 0.0
      %544 = vmatprep.subr.mxu0 0.0
      %545 = vmatpush1.msra.mxu0 0.0
      %546 = vmatprep.subr.mxu0 0.0
      %547 = vmatpush1.msra.mxu0 0.0
      %548 = vmatprep.subr.mxu0 0.0
      %549 = vmatpush1.msra.mxu0 0.0
      %550 = vmatprep.subr.mxu0 0.0
      %551 = vmatpush1.msra.mxu0 0.0
      %552 = vmatprep.subr.mxu0 0.0
      %553 = vmatpush1.msra.mxu0 0.0
      %554 = vmatprep.subr.mxu0 0.0
      %555 = vmatpush1.msra.mxu0 0.0
      %556 = vmatprep.subr.mxu0 0.0
      %557 = vmatpush1.msra.mxu0 0.0
      %558 = vmatprep.subr.mxu0 0.0
      %559 = vmatpush1.msra.mxu0 0.0
      %560 = vmatprep.subr.mxu0 0.0
      %561 = vmatpush1.msra.mxu0 0.0
      %562 = vmatprep.subr.mxu0 0.0
      %563 = vmatpush1.msra.mxu0 0.0
      %564 = vmatprep.subr.mxu0 0.0
      %565 = vmatpush1.msra.mxu0 0.0
      %566 = vmatprep.subr.mxu0 0.0
      %567 = vmatpush1.msra.mxu0 0.0
      %568 = vmatprep.subr.mxu0 0.0
      %569 = vmatpush1.msra.mxu0 0.0
      %570 = vmatprep.subr.mxu0 0.0
      %571 = vmatpush1.msra.mxu0 0.0
      %572 = vmatprep.mubr.f32.mxu0 0.0
      %573 = vmatmul.mubr.f32.gmra.mrb[0].mxu0 %v506
      %v574 = vpop.f32.mrb[0].mxu0
      %v575 = vadd.f32 0.0, %v574
      %v576 = vpop.f32.mrb[0].mxu0
      %577 = vdwg.mxu0
      %v578 = vadd.f32 %v343, %v575
      %s579 = scalar_lea.vmem %s1, 320
      %v580 = vld [vmem:[%s579] sm:$0xff]
      %v581 = vld [vmem:[%s579 + $0x8] sm:$0xff]
      %v582 = vld [vmem:[%s579 + $0x10] sm:$0xff]
      %v583 = vld [vmem:[%s579 + $0x18] sm:$0xff]
      %v584 = vld [vmem:[%s579 + $0x20] sm:$0xff]
      %v585 = vld [vmem:[%s579 + $0x28] sm:$0xff]
      %v586 = vld [vmem:[%s579 + $0x30] sm:$0xff]
      %v587 = vld [vmem:[%s579 + $0x38] sm:$0xff]
      %588 = vmatprep.subr.mxu0 0.0
      %589 = vmatpush1.msra.mxu0 %v580
      %590 = vmatprep.subr.mxu0 0.0
      %591 = vmatpush1.msra.mxu0 %v581
      %592 = vmatprep.subr.mxu0 0.0
      %593 = vmatpush1.msra.mxu0 %v582
      %594 = vmatprep.subr.mxu0 0.0
      %595 = vmatpush1.msra.mxu0 %v583
      %596 = vmatprep.subr.mxu0 0.0
      %597 = vmatpush1.msra.mxu0 %v584
      %598 = vmatprep.subr.mxu0 0.0
      %599 = vmatpush1.msra.mxu0 %v585
      %600 = vmatprep.subr.mxu0 0.0
      %601 = vmatpush1.msra.mxu0 %v586
      %602 = vmatprep.subr.mxu0 0.0
      %603 = vmatpush1.msra.mxu0 %v587
      %604 = vmatprep.subr.mxu0 0.0
      %605 = vmatpush1.msra.mxu0 0.0
      %606 = vmatprep.subr.mxu0 0.0
      %607 = vmatpush1.msra.mxu0 0.0
      %608 = vmatprep.subr.mxu0 0.0
      %609 = vmatpush1.msra.mxu0 0.0
      %610 = vmatprep.subr.mxu0 0.0
      %611 = vmatpush1.msra.mxu0 0.0
      %612 = vmatprep.subr.mxu0 0.0
      %613 = vmatpush1.msra.mxu0 0.0
      %614 = vmatprep.subr.mxu0 0.0
      %615 = vmatpush1.msra.mxu0 0.0
      %616 = vmatprep.subr.mxu0 0.0
      %617 = vmatpush1.msra.mxu0 0.0
      %618 = vmatprep.subr.mxu0 0.0
      %619 = vmatpush1.msra.mxu0 0.0
      %620 = vmatprep.subr.mxu0 0.0
      %621 = vmatpush1.msra.mxu0 0.0
      %622 = vmatprep.subr.mxu0 0.0
      %623 = vmatpush1.msra.mxu0 0.0
      %624 = vmatprep.subr.mxu0 0.0
      %625 = vmatpush1.msra.mxu0 0.0
      %626 = vmatprep.subr.mxu0 0.0
      %627 = vmatpush1.msra.mxu0 0.0
      %628 = vmatprep.subr.mxu0 0.0
      %629 = vmatpush1.msra.mxu0 0.0
      %630 = vmatprep.subr.mxu0 0.0
      %631 = vmatpush1.msra.mxu0 0.0
      %632 = vmatprep.subr.mxu0 0.0
      %633 = vmatpush1.msra.mxu0 0.0
      %634 = vmatprep.subr.mxu0 0.0
      %635 = vmatpush1.msra.mxu0 0.0
      %636 = vmatprep.subr.mxu0 0.0
      %637 = vmatpush1.msra.mxu0 0.0
      %638 = vmatprep.subr.mxu0 0.0
      %639 = vmatpush1.msra.mxu0 0.0
      %640 = vmatprep.subr.mxu0 0.0
      %641 = vmatpush1.msra.mxu0 0.0
      %642 = vmatprep.subr.mxu0 0.0
      %643 = vmatpush1.msra.mxu0 0.0
      %644 = vmatprep.subr.mxu0 0.0
      %645 = vmatpush1.msra.mxu0 0.0
      %646 = vmatprep.subr.mxu0 0.0
      %647 = vmatpush1.msra.mxu0 0.0
      %648 = vmatprep.subr.mxu0 0.0
      %649 = vmatpush1.msra.mxu0 0.0
      %650 = vmatprep.subr.mxu0 0.0
      %651 = vmatpush1.msra.mxu0 0.0
      %652 = vmatprep.mubr.f32.mxu0 0.0
      %653 = vmatmul.mubr.f32.gmra.mrb[0].mxu0 %v506
      %v654 = vpop.f32.mrb[0].mxu0
      %v655 = vadd.f32 0.0, %v654
      %v656 = vpop.f32.mrb[0].mxu0
      %657 = vdwg.mxu0
      %v658 = vadd.f32 %v492, %v655
      %v659 = vld [vmem:[%s2] sm:$0x1]
      %v661 = vlaneseq
      %v662 = vshrl.u32 %v661, 7
      %v663 = vsub.s32 0, %v662
      %v664 = vrot.slane %v659, %v663
      %v666 = vadd.f32 %v578, %v664
      %v667 = vmax.f32 %v666, 0.0
      %v668 = vadd.f32 %v658, %v664
      %v669 = vmax.f32 %v668, 0.0
      %v670 = vmax.f32 %v667, %v669
      %671 = vst.msk [vmem:[#allocation3] sm:$0xff] %vm166, %v670
      %v672 = vld [vmem:[#allocation3] sm:$0x1]
      %v673 = vld [vmem:[#allocation3 + $0x1] sm:$0x1]
      %v674 = vmax.f32 %v672, %v673
      %vm675 = vcmask 516096
      %676 = vst.msk [vmem:[%s165] sm:$0x1] %vm675, %v674
      %v677 = vld [vmem:[#allocation3 + $0x2] sm:$0x1]
      %v678 = vld [vmem:[#allocation3 + $0x3] sm:$0x1]
      %v679 = vmax.f32 %v677, %v678
      %680 = vst.msk [vmem:[%s165 + $0x1] sm:$0x1] %vm675, %v679
      %v681 = vld [vmem:[#allocation3 + $0x4] sm:$0x1]
      %v682 = vld [vmem:[#allocation3 + $0x5] sm:$0x1]
      %v683 = vmax.f32 %v681, %v682
      %684 = vst.msk [vmem:[%s165 + $0x2] sm:$0x1] %vm675, %v683
      %v685 = vld [vmem:[#allocation3 + $0x6] sm:$0x1]
      %v686 = vld [vmem:[#allocation3 + $0x7] sm:$0x1]
      %v687 = vmax.f32 %v685, %v686
      %688 = vst.msk [vmem:[%s165 + $0x3] sm:$0x1] %vm675, %v687
      %p689 = scmp.lt.s32.totalorder %s14, 1
      %s690 = scalar_select %p689, %s14, 1
      %s691 = smul.addr %s690, 4
      %s692 = scalar_lea.vmem %s3, %s691
      // Predicated region
      $region33: #{unet_forward.6} parent=31 // pred_check
        %p693 = pneg %p100
      $region34: #{unet_forward.6} parent=31 // pred_check_branch
        %695 = sbr.rel (%p693) target = $region36
      $region35: #{unet_forward.6} parent=31 // pred_region
        _
      $region36: #{unet_forward.6} parent=31 // pred_fallthru
        _
    $region32: #{unet_forward.6} parent=5 // pred_fallthru
      _
    %p696 = scmp.le.s32.totalorder 2, %s9
    // Predicated region
    $region37: #{unet_forward.6} parent=5 // pred_check
      %p697 = pneg %p696
    $region38: #{unet_forward.6} parent=5 // pred_check_branch
      %699 = sbr.rel (%p697) target = $region40
    $region39: #{unet_forward.6} parent=5 // pred_region
      %s700 = ssub.s32 %s9, 2
      // Predicated region
      $region41: #{unet_forward.6} parent=39 // pred_check
        %p701 = pneg %p106
      $region42: #{unet_forward.6} parent=39 // pred_check_branch
        %703 = sbr.rel (%p701) target = $region44
      $region43: #{unet_forward.6} parent=39 // pred_region
        %p704 = scmp.lt.s32.totalorder %s15, 1
        %s705 = scalar_select %p704, %s15, 1
        %s706 = smul.addr %s705, 4
        %s707 = scalar_lea.vmem %s3, %s706
      $region44: #{unet_forward.6} parent=39 // pred_fallthru
        _
    $region40: #{unet_forward.6} parent=5 // pred_fallthru
      _
  $region6: #{unet_forward.6} parent=0 // loop_footer
    %s13 = sadd.s32 1, %s9
  $region7: #{unet_forward.6} parent=0 // loop_footer_branch
    %8 = sbr.rel target = $region3
  $region8: #{unet_forward.6} parent=0 // loop_exit
    _

// kernel: unet_forward.7
$region0: #{unet_forward.7}
  #allocation0 [shape = 'u32[]', space=smem, size = 0x4, offset = 0x4, fixed_abs, tag = 'smem constant byte address 0x4 - core index']
  #allocation1 [shape = 'u32[144,128]{1,0:T(1,128)}', space=vmem, size = 0x12000, scoped, tag = 'internal scratch']
  #allocation2 [shape = 'f32[6,64]{1,0:T(8,128)}', space=vmem, size = 0x1000, scoped, tag = 'scratch operand']
  %s0 = inlined_call_operand.vmem [shape: f32[8,64], index: 0, kind: input, shape index: {}]
  %s1 = inlined_call_operand.vmem [shape: f32[64,16], index: 1, kind: input, shape index: {}]
  %s2 = inlined_call_operand.vmem [shape: f32[16,64], index: 2, kind: input, shape index: {}]
  %s3 = inlined_call_operand.vmem [shape: f32[1,16], index: 3, kind: input, shape index: {}]
  %s4 = inlined_call_operand.vmem [shape: f32[1,16], index: 4, kind: input, shape index: {}]
  %s5 = inlined_call_operand.vmem [shape: f32[3,64,64], index: 5, kind: input, shape index: {}]
  %s6 = inlined_call_operand.vmem [shape: f32[1,64], index: 6, kind: input, shape index: {}]
  %s7 = inlined_call_operand.vmem [shape: f32[2,4,64], index: 7, kind: output, shape index: {}]
  %s8 = sld [smem:[#allocation0]]
  $region38: #{unet_forward.7} parent=0
    _
  %s10 = ssub.s32 1, %s8
  %s11 = scalar_select 0, %s10, %s8
  // Predicated region
  $region2: #{unet_forward.7} parent=0 // pred_check
    _
  $region3: #{unet_forward.7} parent=0 // pred_check_branch
    %13 = sbr.rel (0) target = $region5
  $region4: #{unet_forward.7} parent=0 // pred_region
    _
  $region5: #{unet_forward.7} parent=0 // pred_fallthru
    _
  // Predicated region
  $region6: #{unet_forward.7} parent=0 // pred_check
    _
  $region7: #{unet_forward.7} parent=0 // pred_check_branch
    %15 = sbr.rel (0) target = $region9
  $region8: #{unet_forward.7} parent=0 // pred_region
    _
  $region9: #{unet_forward.7} parent=0 // pred_fallthru
    _
  // Predicated region
  $region10: #{unet_forward.7} parent=0 // pred_check
    _
  $region11: #{unet_forward.7} parent=0 // pred_check_branch
    %17 = sbr.rel (0) target = $region13
  $region12: #{unet_forward.7} parent=0 // pred_region
    _
  $region13: #{unet_forward.7} parent=0 // pred_fallthru
    _
  // Predicated region
  $region14: #{unet_forward.7} parent=0 // pred_check
    _
  $region15: #{unet_forward.7} parent=0 // pred_check_branch
    %19 = sbr.rel (0) target = $region17
  $region16: #{unet_forward.7} parent=0 // pred_region
    _
  $region17: #{unet_forward.7} parent=0 // pred_fallthru
    _
  // Predicated region
  $region18: #{unet_forward.7} parent=0 // pred_check
    _
  $region19: #{unet_forward.7} parent=0 // pred_check_branch
    %21 = sbr.rel (0) target = $region21
  $region20: #{unet_forward.7} parent=0 // pred_region
    _
  $region21: #{unet_forward.7} parent=0 // pred_fallthru
    _
  // Predicated region
  $region22: #{unet_forward.7} parent=0 // pred_check
    _
  $region23: #{unet_forward.7} parent=0 // pred_check_branch
    %23 = sbr.rel (0) target = $region25
  $region24: #{unet_forward.7} parent=0 // pred_region
    _
  $region25: #{unet_forward.7} parent=0 // pred_fallthru
    _
  // Predicated region
  $region26: #{unet_forward.7} parent=0 // pred_check
    _
  $region27: #{unet_forward.7} parent=0 // pred_check_branch
    %25 = sbr.rel (0) target = $region29
  $region28: #{unet_forward.7} parent=0 // pred_region
    _
  $region29: #{unet_forward.7} parent=0 // pred_fallthru
    _
  %v26 = vld [vmem:[%s0] sm:$0xff]
  %vm27 = vcmask 523264
  %v28 = vsel %vm27, %v26, 0.0
  %v29 = vrot.slane %v28, 4
  %v30 = vadd.f32 %v28, %v29
  %v31 = vrot.slane %v30, 2
  %v32 = vadd.f32 %v30, %v31
  %v33 = vrot.slane %v32, 1
  %v34 = vadd.f32 %v32, %v33
  %v35 = vld [vmem:[%s1] sm:$0xff]
  %v36 = vld [vmem:[%s1 + $0x8] sm:$0xff]
  %v37 = vld [vmem:[%s1 + $0x10] sm:$0xff]
  %v38 = vld [vmem:[%s1 + $0x18] sm:$0xff]
  %v39 = vld [vmem:[%s1 + $0x20] sm:$0xff]
  %v40 = vld [vmem:[%s1 + $0x28] sm:$0xff]
  %v41 = vld [vmem:[%s1 + $0x30] sm:$0xff]
  %v42 = vld [vmem:[%s1 + $0x38] sm:$0xff]
  %v44 = vsel %vm27, %v34, 0
  %46 = vmatprep.subr.mxu0 0.0
  %47 = vmatpush1.msra.mxu0 %v35
  %48 = vmatprep.subr.mxu0 0.0
  %49 = vmatpush1.msra.mxu0 %v36
  %50 = vmatprep.subr.mxu0 0.0
  %51 = vmatpush1.msra.mxu0 %v37
  %52 = vmatprep.subr.mxu0 0.0
  %53 = vmatpush1.msra.mxu0 %v38
  %54 = vmatprep.subr.mxu0 0.0
  %55 = vmatpush1.msra.mxu0 %v39
  %56 = vmatprep.subr.mxu0 0.0
  %57 = vmatpush1.msra.mxu0 %v40
  %58 = vmatprep.subr.mxu0 0.0
  %59 = vmatpush1.msra.mxu0 %v41
  %60 = vmatprep.subr.mxu0 0.0
  %61 = vmatpush1.msra.mxu0 %v42
  %62 = vmatprep.subr.mxu0 0.0
  %63 = vmatpush1.msra.mxu0 0.0
  %64 = vmatprep.subr.mxu0 0.0
  %65 = vmatpush1.msra.mxu0 0.0
  %66 = vmatprep.subr.mxu0 0.0
  %67 = vmatpush1.msra.mxu0 0.0
  %68 = vmatprep.subr.mxu0 0.0
  %69 = vmatpush1.msra.mxu0 0.0
  %70 = vmatprep.subr.mxu0 0.0
  %71 = vmatpush1.msra.mxu0 0.0
  %72 = vmatprep.subr.mxu0 0.0
  %73 = vmatpush1.msra.mxu0 0.0
  %74 = vmatprep.subr.mxu0 0.0
  %75 = vmatpush1.msra.mxu0 0.0
  %76 = vmatprep.subr.mxu0 0.0
  %77 = vmatpush1.msra.mxu0 0.0
  %78 = vmatprep.subr.mxu0 0.0
  %79 = vmatpush1.msra.mxu0 0.0
  %80 = vmatprep.subr.mxu0 0.0
  %81 = vmatpush1.msra.mxu0 0.0
  %82 = vmatprep.subr.mxu0 0.0
  %83 = vmatpush1.msra.mxu0 0.0
  %84 = vmatprep.subr.mxu0 0.0
  %85 = vmatpush1.msra.mxu0 0.0
  %86 = vmatprep.subr.mxu0 0.0
  %87 = vmatpush1.msra.mxu0 0.0
  %88 = vmatprep.subr.mxu0 0.0
  %89 = vmatpush1.msra.mxu0 0.0
  %90 = vmatprep.subr.mxu0 0.0
  %91 = vmatpush1.msra.mxu0 0.0
  %92 = vmatprep.subr.mxu0 0.0
  %93 = vmatpush1.msra.mxu0 0.0
  %94 = vmatprep.subr.mxu0 0.0
  %95 = vmatpush1.msra.mxu0 0.0
  %96 = vmatprep.subr.mxu0 0.0
  %97 = vmatpush1.msra.mxu0 0.0
  %98 = vmatprep.subr.mxu0 0.0
  %99 = vmatpush1.msra.mxu0 0.0
  %100 = vmatprep.subr.mxu0 0.0
  %101 = vmatpush1.msra.mxu0 0.0
  %102 = vmatprep.subr.mxu0 0.0
  %103 = vmatpush1.msra.mxu0 0.0
  %104 = vmatprep.subr.mxu0 0.0
  %105 = vmatpush1.msra.mxu0 0.0
  %106 = vmatprep.subr.mxu0 0.0
  %107 = vmatpush1.msra.mxu0 0.0
  %108 = vmatprep.subr.mxu0 0.0
  %109 = vmatpush1.msra.mxu0 0.0
  %110 = vmatprep.mubr.f32.mxu0 0.0
  %111 = vmatmul.mubr.f32.gmra.mrb[0].mxu0 %v44
  %v112 = vpop.f32.mrb[0].mxu0
  %v113 = vadd.f32 0.0, %v112
  %v114 = vpop.f32.mrb[0].mxu0
  %115 = vdwg.mxu0
  %v116 = vrcp.pop 32.0
  %v117 = vmul.f32 %v113, %v116
  %v118 = vld [vmem:[%s2] sm:$0xff]
  %v119 = vld [vmem:[%s2 + $0x8] sm:$0xff]
  %vm120 = vcmask 130048
  %v122 = vsel %vm120, %v117, 0
  %124 = vmatprep.subr.mxu0 0.0
  %125 = vmatpush1.msra.mxu0 %v118
  %126 = vmatprep.subr.mxu0 0.0
  %127 = vmatpush1.msra.mxu0 %v119
  %128 = vmatprep.subr.mxu0 0.0
  %129 = vmatpush1.msra.mxu0 0.0
  %130 = vmatprep.subr.mxu0 0.0
  %131 = vmatpush1.msra.mxu0 0.0
  %132 = vmatprep.subr.mxu0 0.0
  %133 = vmatpush1.msra.mxu0 0.0
  %134 = vmatprep.subr.mxu0 0.0
  %135 = vmatpush1.msra.mxu0 0.0
  %136 = vmatprep.subr.mxu0 0.0
  %137 = vmatpush1.msra.mxu0 0.0
  %138 = vmatprep.subr.mxu0 0.0
  %139 = vmatpush1.msra.mxu0 0.0
  %140 = vmatprep.subr.mxu0 0.0
  %141 = vmatpush1.msra.mxu0 0.0
  %142 = vmatprep.subr.mxu0 0.0
  %143 = vmatpush1.msra.mxu0 0.0
  %144 = vmatprep.subr.mxu0 0.0
  %145 = vmatpush1.msra.mxu0 0.0
  %146 = vmatprep.subr.mxu0 0.0
  %147 = vmatpush1.msra.mxu0 0.0
  %148 = vmatprep.subr.mxu0 0.0
  %149 = vmatpush1.msra.mxu0 0.0
  %150 = vmatprep.subr.mxu0 0.0
  %151 = vmatpush1.msra.mxu0 0.0
  %152 = vmatprep.subr.mxu0 0.0
  %153 = vmatpush1.msra.mxu0 0.0
  %154 = vmatprep.subr.mxu0 0.0
  %155 = vmatpush1.msra.mxu0 0.0
  %156 = vmatprep.subr.mxu0 0.0
  %157 = vmatpush1.msra.mxu0 0.0
  %158 = vmatprep.subr.mxu0 0.0
  %159 = vmatpush1.msra.mxu0 0.0
  %160 = vmatprep.subr.mxu0 0.0
  %161 = vmatpush1.msra.mxu0 0.0
  %162 = vmatprep.subr.mxu0 0.0
  %163 = vmatpush1.msra.mxu0 0.0
  %164 = vmatprep.subr.mxu0 0.0
  %165 = vmatpush1.msra.mxu0 0.0
  %166 = vmatprep.subr.mxu0 0.0
  %167 = vmatpush1.msra.mxu0 0.0
  %168 = vmatprep.subr.mxu0 0.0
  %169 = vmatpush1.msra.mxu0 0.0
  %170 = vmatprep.subr.mxu0 0.0
  %171 = vmatpush1.msra.mxu0 0.0
  %172 = vmatprep.subr.mxu0 0.0
  %173 = vmatpush1.msra.mxu0 0.0
  %174 = vmatprep.subr.mxu0 0.0
  %175 = vmatpush1.msra.mxu0 0.0
  %176 = vmatprep.subr.mxu0 0.0
  %177 = vmatpush1.msra.mxu0 0.0
  %178 = vmatprep.subr.mxu0 0.0
  %179 = vmatpush1.msra.mxu0 0.0
  %180 = vmatprep.subr.mxu0 0.0
  %181 = vmatpush1.msra.mxu0 0.0
  %182 = vmatprep.subr.mxu0 0.0
  %183 = vmatpush1.msra.mxu0 0.0
  %184 = vmatprep.subr.mxu0 0.0
  %185 = vmatpush1.msra.mxu0 0.0
  %186 = vmatprep.subr.mxu0 0.0
  %187 = vmatpush1.msra.mxu0 0.0
  %188 = vmatprep.mubr.f32.mxu0 0.0
  %189 = vmatmul.mubr.f32.gmra.mrb[0].mxu0 %v122
  %v190 = vpop.f32.mrb[0].mxu0
  %v191 = vadd.f32 0.0, %v190
  %v192 = vpop.f32.mrb[0].mxu0
  %193 = vdwg.mxu0
  %v194 = vlaneseq
  %v195 = vshrl.u32 %v194, 7
  %v196 = vsub.s32 0, %v195
  %v197 = vrot.slane %v191, %v196
  %v198 = vsub.f32 %v26, %v197
  %v199 = vmul.f32 %v198, %v198
  %v200 = vsel %vm27, %v199, 0.0
  %v201 = vrot.slane %v200, 4
  %v202 = vadd.f32 %v200, %v201
  %v203 = vrot.slane %v202, 2
  %v204 = vadd.f32 %v202, %v203
  %v205 = vrot.slane %v204, 1
  %v206 = vadd.f32 %v204, %v205
  %v208 = vsel %vm27, %v206, 0
  %210 = vmatprep.subr.mxu0 0.0
  %211 = vmatpush1.msra.mxu0 %v35
  %212 = vmatprep.subr.mxu0 0.0
  %213 = vmatpush1.msra.mxu0 %v36
  %214 = vmatprep.subr.mxu0 0.0
  %215 = vmatpush1.msra.mxu0 %v37
  %216 = vmatprep.subr.mxu0 0.0
  %217 = vmatpush1.msra.mxu0 %v38
  %218 = vmatprep.subr.mxu0 0.0
  %219 = vmatpush1.msra.mxu0 %v39
  %220 = vmatprep.subr.mxu0 0.0
  %221 = vmatpush1.msra.mxu0 %v40
  %222 = vmatprep.subr.mxu0 0.0
  %223 = vmatpush1.msra.mxu0 %v41
  %224 = vmatprep.subr.mxu0 0.0
  %225 = vmatpush1.msra.mxu0 %v42
  %226 = vmatprep.subr.mxu0 0.0
  %227 = vmatpush1.msra.mxu0 0.0
  %228 = vmatprep.subr.mxu0 0.0
  %229 = vmatpush1.msra.mxu0 0.0
  %230 = vmatprep.subr.mxu0 0.0
  %231 = vmatpush1.msra.mxu0 0.0
  %232 = vmatprep.subr.mxu0 0.0
  %233 = vmatpush1.msra.mxu0 0.0
  %234 = vmatprep.subr.mxu0 0.0
  %235 = vmatpush1.msra.mxu0 0.0
  %236 = vmatprep.subr.mxu0 0.0
  %237 = vmatpush1.msra.mxu0 0.0
  %238 = vmatprep.subr.mxu0 0.0
  %239 = vmatpush1.msra.mxu0 0.0
  %240 = vmatprep.subr.mxu0 0.0
  %241 = vmatpush1.msra.mxu0 0.0
  %242 = vmatprep.subr.mxu0 0.0
  %243 = vmatpush1.msra.mxu0 0.0
  %244 = vmatprep.subr.mxu0 0.0
  %245 = vmatpush1.msra.mxu0 0.0
  %246 = vmatprep.subr.mxu0 0.0
  %247 = vmatpush1.msra.mxu0 0.0
  %248 = vmatprep.subr.mxu0 0.0
  %249 = vmatpush1.msra.mxu0 0.0
  %250 = vmatprep.subr.mxu0 0.0
  %251 = vmatpush1.msra.mxu0 0.0
  %252 = vmatprep.subr.mxu0 0.0
  %253 = vmatpush1.msra.mxu0 0.0
  %254 = vmatprep.subr.mxu0 0.0
  %255 = vmatpush1.msra.mxu0 0.0
  %256 = vmatprep.subr.mxu0 0.0
  %257 = vmatpush1.msra.mxu0 0.0
  %258 = vmatprep.subr.mxu0 0.0
  %259 = vmatpush1.msra.mxu0 0.0
  %260 = vmatprep.subr.mxu0 0.0
  %261 = vmatpush1.msra.mxu0 0.0
  %262 = vmatprep.subr.mxu0 0.0
  %263 = vmatpush1.msra.mxu0 0.0
  %264 = vmatprep.subr.mxu0 0.0
  %265 = vmatpush1.msra.mxu0 0.0
  %266 = vmatprep.subr.mxu0 0.0
  %267 = vmatpush1.msra.mxu0 0.0
  %268 = vmatprep.subr.mxu0 0.0
  %269 = vmatpush1.msra.mxu0 0.0
  %270 = vmatprep.subr.mxu0 0.0
  %271 = vmatpush1.msra.mxu0 0.0
  %272 = vmatprep.subr.mxu0 0.0
  %273 = vmatpush1.msra.mxu0 0.0
  %274 = vmatprep.mubr.f32.mxu0 0.0
  %275 = vmatmul.mubr.f32.gmra.mrb[0].mxu0 %v208
  %v276 = vpop.f32.mrb[0].mxu0
  %v277 = vadd.f32 0.0, %v276
  %v278 = vpop.f32.mrb[0].mxu0
  %279 = vdwg.mxu0
  %v280 = vmul.f32 %v277, %v116
  %v281 = vadd.f32 %v280, 1e-05
  %v282 = vrsqrt.pop %v281
  %v283 = vld [vmem:[%s3] sm:$0x1]
  %v284 = vmul.f32 %v283, %v282
  %v285 = vld [vmem:[%s4] sm:$0x1]
  %v286 = vmul.f32 %v117, %v284
  %v287 = vsub.f32 %v285, %v286
  %v289 = vsel %vm120, %v284, 0
  %291 = vmatprep.subr.mxu0 0.0
  %292 = vmatpush1.msra.mxu0 %v118
  %293 = vmatprep.subr.mxu0 0.0
  %294 = vmatpush1.msra.mxu0 %v119
  %295 = vmatprep.subr.mxu0 0.0
  %296 = vmatpush1.msra.mxu0 0.0
  %297 = vmatprep.subr.mxu0 0.0
  %298 = vmatpush1.msra.mxu0 0.0
  %299 = vmatprep.subr.mxu0 0.0
  %300 = vmatpush1.msra.mxu0 0.0
  %301 = vmatprep.subr.mxu0 0.0
  %302 = vmatpush1.msra.mxu0 0.0
  %303 = vmatprep.subr.mxu0 0.0
  %304 = vmatpush1.msra.mxu0 0.0
  %305 = vmatprep.subr.mxu0 0.0
  %306 = vmatpush1.msra.mxu0 0.0
  %307 = vmatprep.subr.mxu0 0.0
  %308 = vmatpush1.msra.mxu0 0.0
  %309 = vmatprep.subr.mxu0 0.0
  %310 = vmatpush1.msra.mxu0 0.0
  %311 = vmatprep.subr.mxu0 0.0
  %312 = vmatpush1.msra.mxu0 0.0
  %313 = vmatprep.subr.mxu0 0.0
  %314 = vmatpush1.msra.mxu0 0.0
  %315 = vmatprep.subr.mxu0 0.0
  %316 = vmatpush1.msra.mxu0 0.0
  %317 = vmatprep.subr.mxu0 0.0
  %318 = vmatpush1.msra.mxu0 0.0
  %319 = vmatprep.subr.mxu0 0.0
  %320 = vmatpush1.msra.mxu0 0.0
  %321 = vmatprep.subr.mxu0 0.0
  %322 = vmatpush1.msra.mxu0 0.0
  %323 = vmatprep.subr.mxu0 0.0
  %324 = vmatpush1.msra.mxu0 0.0
  %325 = vmatprep.subr.mxu0 0.0
  %326 = vmatpush1.msra.mxu0 0.0
  %327 = vmatprep.subr.mxu0 0.0
  %328 = vmatpush1.msra.mxu0 0.0
  %329 = vmatprep.subr.mxu0 0.0
  %330 = vmatpush1.msra.mxu0 0.0
  %331 = vmatprep.subr.mxu0 0.0
  %332 = vmatpush1.msra.mxu0 0.0
  %333 = vmatprep.subr.mxu0 0.0
  %334 = vmatpush1.msra.mxu0 0.0
  %335 = vmatprep.subr.mxu0 0.0
  %336 = vmatpush1.msra.mxu0 0.0
  %337 = vmatprep.subr.mxu0 0.0
  %338 = vmatpush1.msra.mxu0 0.0
  %339 = vmatprep.subr.mxu0 0.0
  %340 = vmatpush1.msra.mxu0 0.0
  %341 = vmatprep.subr.mxu0 0.0
  %342 = vmatpush1.msra.mxu0 0.0
  %343 = vmatprep.subr.mxu0 0.0
  %344 = vmatpush1.msra.mxu0 0.0
  %345 = vmatprep.subr.mxu0 0.0
  %346 = vmatpush1.msra.mxu0 0.0
  %347 = vmatprep.subr.mxu0 0.0
  %348 = vmatpush1.msra.mxu0 0.0
  %349 = vmatprep.subr.mxu0 0.0
  %350 = vmatpush1.msra.mxu0 0.0
  %351 = vmatprep.subr.mxu0 0.0
  %352 = vmatpush1.msra.mxu0 0.0
  %353 = vmatprep.subr.mxu0 0.0
  %354 = vmatpush1.msra.mxu0 0.0
  %355 = vmatprep.mubr.f32.mxu0 0.0
  %356 = vmatmul.mubr.f32.gmra.mrb[0].mxu0 %v289
  %v357 = vpop.f32.mrb[0].mxu0
  %v358 = vadd.f32 0.0, %v357
  %v359 = vpop.f32.mrb[0].mxu0
  %360 = vdwg.mxu0
  %v362 = vsel %vm120, %v287, 0
  %364 = vmatprep.subr.mxu0 0.0
  %365 = vmatpush1.msra.mxu0 %v118
  %366 = vmatprep.subr.mxu0 0.0
  %367 = vmatpush1.msra.mxu0 %v119
  %368 = vmatprep.subr.mxu0 0.0
  %369 = vmatpush1.msra.mxu0 0.0
  %370 = vmatprep.subr.mxu0 0.0
  %371 = vmatpush1.msra.mxu0 0.0
  %372 = vmatprep.subr.mxu0 0.0
  %373 = vmatpush1.msra.mxu0 0.0
  %374 = vmatprep.subr.mxu0 0.0
  %375 = vmatpush1.msra.mxu0 0.0
  %376 = vmatprep.subr.mxu0 0.0
  %377 = vmatpush1.msra.mxu0 0.0
  %378 = vmatprep.subr.mxu0 0.0
  %379 = vmatpush1.msra.mxu0 0.0
  %380 = vmatprep.subr.mxu0 0.0
  %381 = vmatpush1.msra.mxu0 0.0
  %382 = vmatprep.subr.mxu0 0.0
  %383 = vmatpush1.msra.mxu0 0.0
  %384 = vmatprep.subr.mxu0 0.0
  %385 = vmatpush1.msra.mxu0 0.0
  %386 = vmatprep.subr.mxu0 0.0
  %387 = vmatpush1.msra.mxu0 0.0
  %388 = vmatprep.subr.mxu0 0.0
  %389 = vmatpush1.msra.mxu0 0.0
  %390 = vmatprep.subr.mxu0 0.0
  %391 = vmatpush1.msra.mxu0 0.0
  %392 = vmatprep.subr.mxu0 0.0
  %393 = vmatpush1.msra.mxu0 0.0
  %394 = vmatprep.subr.mxu0 0.0
  %395 = vmatpush1.msra.mxu0 0.0
  %396 = vmatprep.subr.mxu0 0.0
  %397 = vmatpush1.msra.mxu0 0.0
  %398 = vmatprep.subr.mxu0 0.0
  %399 = vmatpush1.msra.mxu0 0.0
  %400 = vmatprep.subr.mxu0 0.0
  %401 = vmatpush1.msra.mxu0 0.0
  %402 = vmatprep.subr.mxu0 0.0
  %403 = vmatpush1.msra.mxu0 0.0
  %404 = vmatprep.subr.mxu0 0.0
  %405 = vmatpush1.msra.mxu0 0.0
  %406 = vmatprep.subr.mxu0 0.0
  %407 = vmatpush1.msra.mxu0 0.0
  %408 = vmatprep.subr.mxu0 0.0
  %409 = vmatpush1.msra.mxu0 0.0
  %410 = vmatprep.subr.mxu0 0.0
  %411 = vmatpush1.msra.mxu0 0.0
  %412 = vmatprep.subr.mxu0 0.0
  %413 = vmatpush1.msra.mxu0 0.0
  %414 = vmatprep.subr.mxu0 0.0
  %415 = vmatpush1.msra.mxu0 0.0
  %416 = vmatprep.subr.mxu0 0.0
  %417 = vmatpush1.msra.mxu0 0.0
  %418 = vmatprep.subr.mxu0 0.0
  %419 = vmatpush1.msra.mxu0 0.0
  %420 = vmatprep.subr.mxu0 0.0
  %421 = vmatpush1.msra.mxu0 0.0
  %422 = vmatprep.subr.mxu0 0.0
  %423 = vmatpush1.msra.mxu0 0.0
  %424 = vmatprep.subr.mxu0 0.0
  %425 = vmatpush1.msra.mxu0 0.0
  %426 = vmatprep.subr.mxu0 0.0
  %427 = vmatpush1.msra.mxu0 0.0
  %428 = vmatprep.mubr.f32.mxu0 0.0
  %429 = vmatmul.mubr.f32.gmra.mrb[0].mxu0 %v362
  %v430 = vpop.f32.mrb[0].mxu0
  %v431 = vadd.f32 0.0, %v430
  %v432 = vpop.f32.mrb[0].mxu0
  %433 = vdwg.mxu0
  %v434 = vld [vmem:[%s6] sm:$0x1]
  %v435 = vld [vmem:[%s0] sm:$0xf]
  %v436 = vlaneseq
  %v437 = vshrl.u32 %v436, 7
  %v438 = vsub.s32 0, %v437
  %v439 = vrot.slane %v358, %v438
  %v440 = vmul.f32 %v435, %v439
  %v441 = vlaneseq
  %v442 = vshrl.u32 %v441, 7
  %v443 = vsub.s32 0, %v442
  %v444 = vrot.slane %v431, %v443
  %v445 = vadd.f32 %v440, %v444
  %vm446 = vcmask 521216
  %447 = vst.msk [vmem:[#allocation2] sm:$0x3f] %vm446, 0.0
  %vm448 = vcmask 519168
  %449 = vst.msk [vmem:[#allocation2 + $0x1] sm:$0xf] %vm448, %v445
  %v450 = vld [vmem:[#allocation2] sm:$0xf]
  %v451 = vld [vmem:[%s5] sm:$0xff]
  %v452 = vld [vmem:[%s5 + $0x8] sm:$0xff]
  %v453 = vld [vmem:[%s5 + $0x10] sm:$0xff]
  %v454 = vld [vmem:[%s5 + $0x18] sm:$0xff]
  %v455 = vld [vmem:[%s5 + $0x20] sm:$0xff]
  %v456 = vld [vmem:[%s5 + $0x28] sm:$0xff]
  %v457 = vld [vmem:[%s5 + $0x30] sm:$0xff]
  %v458 = vld [vmem:[%s5 + $0x38] sm:$0xff]
  %v459 = vld [vmem:[#allocation2 + $0x1] sm:$0xf]
  %s460 = scalar_lea.vmem %s5, 64
  %v461 = vld [vmem:[%s460] sm:$0xff]
  %v462 = vld [vmem:[%s460 + $0x8] sm:$0xff]
  %v463 = vld [vmem:[%s460 + $0x10] sm:$0xff]
  %v464 = vld [vmem:[%s460 + $0x18] sm:$0xff]
  %v465 = vld [vmem:[%s460 + $0x20] sm:$0xff]
  %v466 = vld [vmem:[%s460 + $0x28] sm:$0xff]
  %v467 = vld [vmem:[%s460 + $0x30] sm:$0xff]
  %v468 = vld [vmem:[%s460 + $0x38] sm:$0xff]
  %v470 = vsel %vm27, %v459, 0
  %472 = vmatprep.subr.mxu0 0.0
  %473 = vmatpush1.msra.mxu0 %v461
  %474 = vmatprep.subr.mxu0 0.0
  %475 = vmatpush1.msra.mxu0 %v462
  %476 = vmatprep.subr.mxu0 0.0
  %477 = vmatpush1.msra.mxu0 %v463
  %478 = vmatprep.subr.mxu0 0.0
  %479 = vmatpush1.msra.mxu0 %v464
  %480 = vmatprep.subr.mxu0 0.0
  %481 = vmatpush1.msra.mxu0 %v465
  %482 = vmatprep.subr.mxu0 0.0
  %483 = vmatpush1.msra.mxu0 %v466
  %484 = vmatprep.subr.mxu0 0.0
  %485 = vmatpush1.msra.mxu0 %v467
  %486 = vmatprep.subr.mxu0 0.0
  %487 = vmatpush1.msra.mxu0 %v468
  %488 = vmatprep.subr.mxu0 0.0
  %489 = vmatpush1.msra.mxu0 0.0
  %490 = vmatprep.subr.mxu0 0.0
  %491 = vmatpush1.msra.mxu0 0.0
  %492 = vmatprep.subr.mxu0 0.0
  %493 = vmatpush1.msra.mxu0 0.0
  %494 = vmatprep.subr.mxu0 0.0
  %495 = vmatpush1.msra.mxu0 0.0
  %496 = vmatprep.subr.mxu0 0.0
  %497 = vmatpush1.msra.mxu0 0.0
  %498 = vmatprep.subr.mxu0 0.0
  %499 = vmatpush1.msra.mxu0 0.0
  %500 = vmatprep.subr.mxu0 0.0
  %501 = vmatpush1.msra.mxu0 0.0
  %502 = vmatprep.subr.mxu0 0.0
  %503 = vmatpush1.msra.mxu0 0.0
  %504 = vmatprep.subr.mxu0 0.0
  %505 = vmatpush1.msra.mxu0 0.0
  %506 = vmatprep.subr.mxu0 0.0
  %507 = vmatpush1.msra.mxu0 0.0
  %508 = vmatprep.subr.mxu0 0.0
  %509 = vmatpush1.msra.mxu0 0.0
  %510 = vmatprep.subr.mxu0 0.0
  %511 = vmatpush1.msra.mxu0 0.0
  %512 = vmatprep.subr.mxu0 0.0
  %513 = vmatpush1.msra.mxu0 0.0
  %514 = vmatprep.subr.mxu0 0.0
  %515 = vmatpush1.msra.mxu0 0.0
  %516 = vmatprep.subr.mxu0 0.0
  %517 = vmatpush1.msra.mxu0 0.0
  %518 = vmatprep.subr.mxu0 0.0
  %519 = vmatpush1.msra.mxu0 0.0
  %520 = vmatprep.subr.mxu0 0.0
  %521 = vmatpush1.msra.mxu0 0.0
  %522 = vmatprep.subr.mxu0 0.0
  %523 = vmatpush1.msra.mxu0 0.0
  %524 = vmatprep.subr.mxu0 0.0
  %525 = vmatpush1.msra.mxu0 0.0
  %526 = vmatprep.subr.mxu0 0.0
  %527 = vmatpush1.msra.mxu0 0.0
  %528 = vmatprep.subr.mxu0 0.0
  %529 = vmatpush1.msra.mxu0 0.0
  %530 = vmatprep.subr.mxu0 0.0
  %531 = vmatpush1.msra.mxu0 0.0
  %532 = vmatprep.subr.mxu0 0.0
  %533 = vmatpush1.msra.mxu0 0.0
  %534 = vmatprep.subr.mxu0 0.0
  %535 = vmatpush1.msra.mxu0 0.0
  %536 = vmatprep.mubr.f32.mxu0 0.0
  %537 = vmatmul.mubr.f32.gmra.mrb[0].mxu0 %v470
  %v538 = vpop.f32.mrb[0].mxu0
  %v539 = vadd.f32 0.0, %v538
  %v540 = vpop.f32.mrb[0].mxu0
  %541 = vdwg.mxu0
  %v543 = vsel %vm27, %v450, 0
  %545 = vmatprep.subr.mxu0 0.0
  %546 = vmatpush1.msra.mxu0 %v451
  %547 = vmatprep.subr.mxu0 0.0
  %548 = vmatpush1.msra.mxu0 %v452
  %549 = vmatprep.subr.mxu0 0.0
  %550 = vmatpush1.msra.mxu0 %v453
  %551 = vmatprep.subr.mxu0 0.0
  %552 = vmatpush1.msra.mxu0 %v454
  %553 = vmatprep.subr.mxu0 0.0
  %554 = vmatpush1.msra.mxu0 %v455
  %555 = vmatprep.subr.mxu0 0.0
  %556 = vmatpush1.msra.mxu0 %v456
  %557 = vmatprep.subr.mxu0 0.0
  %558 = vmatpush1.msra.mxu0 %v457
  %559 = vmatprep.subr.mxu0 0.0
  %560 = vmatpush1.msra.mxu0 %v458
  %561 = vmatprep.subr.mxu0 0.0
  %562 = vmatpush1.msra.mxu0 0.0
  %563 = vmatprep.subr.mxu0 0.0
  %564 = vmatpush1.msra.mxu0 0.0
  %565 = vmatprep.subr.mxu0 0.0
  %566 = vmatpush1.msra.mxu0 0.0
  %567 = vmatprep.subr.mxu0 0.0
  %568 = vmatpush1.msra.mxu0 0.0
  %569 = vmatprep.subr.mxu0 0.0
  %570 = vmatpush1.msra.mxu0 0.0
  %571 = vmatprep.subr.mxu0 0.0
  %572 = vmatpush1.msra.mxu0 0.0
  %573 = vmatprep.subr.mxu0 0.0
  %574 = vmatpush1.msra.mxu0 0.0
  %575 = vmatprep.subr.mxu0 0.0
  %576 = vmatpush1.msra.mxu0 0.0
  %577 = vmatprep.subr.mxu0 0.0
  %578 = vmatpush1.msra.mxu0 0.0
  %579 = vmatprep.subr.mxu0 0.0
  %580 = vmatpush1.msra.mxu0 0.0
  %581 = vmatprep.subr.mxu0 0.0
  %582 = vmatpush1.msra.mxu0 0.0
  %583 = vmatprep.subr.mxu0 0.0
  %584 = vmatpush1.msra.mxu0 0.0
  %585 = vmatprep.subr.mxu0 0.0
  %586 = vmatpush1.msra.mxu0 0.0
  %587 = vmatprep.subr.mxu0 0.0
  %588 = vmatpush1.msra.mxu0 0.0
  %589 = vmatprep.subr.mxu0 0.0
  %590 = vmatpush1.msra.mxu0 0.0
  %591 = vmatprep.subr.mxu0 0.0
  %592 = vmatpush1.msra.mxu0 0.0
  %593 = vmatprep.subr.mxu0 0.0
  %594 = vmatpush1.msra.mxu0 0.0
  %595 = vmatprep.subr.mxu0 0.0
  %596 = vmatpush1.msra.mxu0 0.0
  %597 = vmatprep.subr.mxu0 0.0
  %598 = vmatpush1.msra.mxu0 0.0
  %599 = vmatprep.subr.mxu0 0.0
  %600 = vmatpush1.msra.mxu0 0.0
  %601 = vmatprep.subr.mxu0 0.0
  %602 = vmatpush1.msra.mxu0 0.0
  %603 = vmatprep.subr.mxu0 0.0
  %604 = vmatpush1.msra.mxu0 0.0
  %605 = vmatprep.subr.mxu0 0.0
  %606 = vmatpush1.msra.mxu0 0.0
  %607 = vmatprep.subr.mxu0 0.0
  %608 = vmatpush1.msra.mxu0 0.0
  %609 = vmatprep.mubr.f32.mxu0 0.0
  %610 = vmatmul.mubr.f32.gmra.mrb[0].mxu0 %v543
  %v611 = vpop.f32.mrb[0].mxu0
  %v612 = vadd.f32 %v539, %v611
  %v613 = vpop.f32.mrb[0].mxu0
  %614 = vdwg.mxu0
  %v615 = vld [vmem:[#allocation2 + $0x2] sm:$0xf]
  %s616 = scalar_lea.vmem %s5, 128
  %v617 = vld [vmem:[%s616] sm:$0xff]
  %v618 = vld [vmem:[%s616 + $0x8] sm:$0xff]
  %v619 = vld [vmem:[%s616 + $0x10] sm:$0xff]
  %v620 = vld [vmem:[%s616 + $0x18] sm:$0xff]
  %v621 = vld [vmem:[%s616 + $0x20] sm:$0xff]
  %v622 = vld [vmem:[%s616 + $0x28] sm:$0xff]
  %v623 = vld [vmem:[%s616 + $0x30] sm:$0xff]
  %v624 = vld [vmem:[%s616 + $0x38] sm:$0xff]
  %v626 = vsel %vm27, %v615, 0
  %628 = vmatprep.subr.mxu0 0.0
  %629 = vmatpush1.msra.mxu0 %v617
  %630 = vmatprep.subr.mxu0 0.0
  %631 = vmatpush1.msra.mxu0 %v618
  %632 = vmatprep.subr.mxu0 0.0
  %633 = vmatpush1.msra.mxu0 %v619
  %634 = vmatprep.subr.mxu0 0.0
  %635 = vmatpush1.msra.mxu0 %v620
  %636 = vmatprep.subr.mxu0 0.0
  %637 = vmatpush1.msra.mxu0 %v621
  %638 = vmatprep.subr.mxu0 0.0
  %639 = vmatpush1.msra.mxu0 %v622
  %640 = vmatprep.subr.mxu0 0.0
  %641 = vmatpush1.msra.mxu0 %v623
  %642 = vmatprep.subr.mxu0 0.0
  %643 = vmatpush1.msra.mxu0 %v624
  %644 = vmatprep.subr.mxu0 0.0
  %645 = vmatpush1.msra.mxu0 0.0
  %646 = vmatprep.subr.mxu0 0.0
  %647 = vmatpush1.msra.mxu0 0.0
  %648 = vmatprep.subr.mxu0 0.0
  %649 = vmatpush1.msra.mxu0 0.0
  %650 = vmatprep.subr.mxu0 0.0
  %651 = vmatpush1.msra.mxu0 0.0
  %652 = vmatprep.subr.mxu0 0.0
  %653 = vmatpush1.msra.mxu0 0.0
  %654 = vmatprep.subr.mxu0 0.0
  %655 = vmatpush1.msra.mxu0 0.0
  %656 = vmatprep.subr.mxu0 0.0
  %657 = vmatpush1.msra.mxu0 0.0
  %658 = vmatprep.subr.mxu0 0.0
  %659 = vmatpush1.msra.mxu0 0.0
  %660 = vmatprep.subr.mxu0 0.0
  %661 = vmatpush1.msra.mxu0 0.0
  %662 = vmatprep.subr.mxu0 0.0
  %663 = vmatpush1.msra.mxu0 0.0
  %664 = vmatprep.subr.mxu0 0.0
  %665 = vmatpush1.msra.mxu0 0.0
  %666 = vmatprep.subr.mxu0 0.0
  %667 = vmatpush1.msra.mxu0 0.0
  %668 = vmatprep.subr.mxu0 0.0
  %669 = vmatpush1.msra.mxu0 0.0
  %670 = vmatprep.subr.mxu0 0.0
  %671 = vmatpush1.msra.mxu0 0.0
  %672 = vmatprep.subr.mxu0 0.0
  %673 = vmatpush1.msra.mxu0 0.0
  %674 = vmatprep.subr.mxu0 0.0
  %675 = vmatpush1.msra.mxu0 0.0
  %676 = vmatprep.subr.mxu0 0.0
  %677 = vmatpush1.msra.mxu0 0.0
  %678 = vmatprep.subr.mxu0 0.0
  %679 = vmatpush1.msra.mxu0 0.0
  %680 = vmatprep.subr.mxu0 0.0
  %681 = vmatpush1.msra.mxu0 0.0
  %682 = vmatprep.subr.mxu0 0.0
  %683 = vmatpush1.msra.mxu0 0.0
  %684 = vmatprep.subr.mxu0 0.0
  %685 = vmatpush1.msra.mxu0 0.0
  %686 = vmatprep.subr.mxu0 0.0
  %687 = vmatpush1.msra.mxu0 0.0
  %688 = vmatprep.subr.mxu0 0.0
  %689 = vmatpush1.msra.mxu0 0.0
  %690 = vmatprep.subr.mxu0 0.0
  %691 = vmatpush1.msra.mxu0 0.0
  %692 = vmatprep.mubr.f32.mxu0 0.0
  %693 = vmatmul.mubr.f32.gmra.mrb[0].mxu0 %v626
  %v694 = vpop.f32.mrb[0].mxu0
  %v695 = vadd.f32 0.0, %v694
  %v696 = vpop.f32.mrb[0].mxu0
  %697 = vdwg.mxu0
  %v698 = vadd.f32 %v612, %v695
  %v700 = vlaneseq
  %v701 = vshrl.u32 %v700, 7
  %v702 = vsub.s32 0, %v701
  %v703 = vrot.slane %v434, %v702
  %v705 = vadd.f32 %v698, %v703
  %706 = vst.msk [vmem:[%s7] sm:$0xf] %vm448, %v705
  %v707 = vld [vmem:[%s0 + $0x4] sm:$0xf]
  %v708 = vmul.f32 %v707, %v439
  %v709 = vadd.f32 %v708, %v444
  %710 = vst.msk [vmem:[#allocation2] sm:$0x3f] %vm446, 0.0
  %711 = vst.msk [vmem:[#allocation2 + $0x1] sm:$0xf] %vm448, %v709
  %v712 = vld [vmem:[#allocation2] sm:$0xf]
  %v713 = vld [vmem:[%s5] sm:$0xff]
  %v714 = vld [vmem:[%s5 + $0x8] sm:$0xff]
  %v715 = vld [vmem:[%s5 + $0x10] sm:$0xff]
  %v716 = vld [vmem:[%s5 + $0x18] sm:$0xff]
  %v717 = vld [vmem:[%s5 + $0x20] sm:$0xff]
  %v718 = vld [vmem:[%s5 + $0x28] sm:$0xff]
  %v719 = vld [vmem:[%s5 + $0x30] sm:$0xff]
  %v720 = vld [vmem:[%s5 + $0x38] sm:$0xff]
  %v721 = vld [vmem:[#allocation2 + $0x1] sm:$0xf]
  %v722 = vld [vmem:[%s460] sm:$0xff]
  %v723 = vld [vmem:[%s460 + $0x8] sm:$0xff]
  %v724 = vld [vmem:[%s460 + $0x10] sm:$0xff]
  %v725 = vld [vmem:[%s460 + $0x18] sm:$0xff]
  %v726 = vld [vmem:[%s460 + $0x20] sm:$0xff]
  %v727 = vld [vmem:[%s460 + $0x28] sm:$0xff]
  %v728 = vld [vmem:[%s460 + $0x30] sm:$0xff]
  %v729 = vld [vmem:[%s460 + $0x38] sm:$0xff]
  %v731 = vsel %vm27, %v721, 0
  %733 = vmatprep.subr.mxu0 0.0
  %734 = vmatpush1.msra.mxu0 %v722
  %735 = vmatprep.subr.mxu0 0.0
  %736 = vmatpush1.msra.mxu0 %v723
  %737 = vmatprep.subr.mxu0 0.0
  %738 = vmatpush1.msra.mxu0 %v724
  %739 = vmatprep.subr.mxu0 0.0
  %740 = vmatpush1.msra.mxu0 %v725
  %741 = vmatprep.subr.mxu0 0.0
  %742 = vmatpush1.msra.mxu0 %v726
  %743 = vmatprep.subr.mxu0 0.0
  %744 = vmatpush1.msra.mxu0 %v727
  %745 = vmatprep.subr.mxu0 0.0
  %746 = vmatpush1.msra.mxu0 %v728
  %747 = vmatprep.subr.mxu0 0.0
  %748 = vmatpush1.msra.mxu0 %v729
  %749 = vmatprep.subr.mxu0 0.0
  %750 = vmatpush1.msra.mxu0 0.0
  %751 = vmatprep.subr.mxu0 0.0
  %752 = vmatpush1.msra.mxu0 0.0
  %753 = vmatprep.subr.mxu0 0.0
  %754 = vmatpush1.msra.mxu0 0.0
  %755 = vmatprep.subr.mxu0 0.0
  %756 = vmatpush1.msra.mxu0 0.0
  %757 = vmatprep.subr.mxu0 0.0
  %758 = vmatpush1.msra.mxu0 0.0
  %759 = vmatprep.subr.mxu0 0.0
  %760 = vmatpush1.msra.mxu0 0.0
  %761 = vmatprep.subr.mxu0 0.0
  %762 = vmatpush1.msra.mxu0 0.0
  %763 = vmatprep.subr.mxu0 0.0
  %764 = vmatpush1.msra.mxu0 0.0
  %765 = vmatprep.subr.mxu0 0.0
  %766 = vmatpush1.msra.mxu0 0.0
  %767 = vmatprep.subr.mxu0 0.0
  %768 = vmatpush1.msra.mxu0 0.0
  %769 = vmatprep.subr.mxu0 0.0
  %770 = vmatpush1.msra.mxu0 0.0
  %771 = vmatprep.subr.mxu0 0.0
  %772 = vmatpush1.msra.mxu0 0.0
  %773 = vmatprep.subr.mxu0 0.0
  %774 = vmatpush1.msra.mxu0 0.0
  %775 = vmatprep.subr.mxu0 0.0
  %776 = vmatpush1.msra.mxu0 0.0
  %777 = vmatprep.subr.mxu0 0.0
  %778 = vmatpush1.msra.mxu0 0.0
  %779 = vmatprep.subr.mxu0 0.0
  %780 = vmatpush1.msra.mxu0 0.0
  %781 = vmatprep.subr.mxu0 0.0
  %782 = vmatpush1.msra.mxu0 0.0
  %783 = vmatprep.subr.mxu0 0.0
  %784 = vmatpush1.msra.mxu0 0.0
  %785 = vmatprep.subr.mxu0 0.0
  %786 = vmatpush1.msra.mxu0 0.0
  %787 = vmatprep.subr.mxu0 0.0
  %788 = vmatpush1.msra.mxu0 0.0
  %789 = vmatprep.subr.mxu0 0.0
  %790 = vmatpush1.msra.mxu0 0.0
  %791 = vmatprep.subr.mxu0 0.0
  %792 = vmatpush1.msra.mxu0 0.0
  %793 = vmatprep.subr.mxu0 0.0
  %794 = vmatpush1.msra.mxu0 0.0
  %795 = vmatprep.subr.mxu0 0.0
  %796 = vmatpush1.msra.mxu0 0.0
  %797 = vmatprep.mubr.f32.mxu0 0.0
  %798 = vmatmul.mubr.f32.gmra.mrb[0].mxu0 %v731
  %v799 = vpop.f32.mrb[0].mxu0
  %v800 = vadd.f32 0.0, %v799
  %v801 = vpop.f32.mrb[0].mxu0
  %802 = vdwg.mxu0
  %v804 = vsel %vm27, %v712, 0
  %806 = vmatprep.subr.mxu0 0.0
  %807 = vmatpush1.msra.mxu0 %v713
  %808 = vmatprep.subr.mxu0 0.0
  %809 = vmatpush1.msra.mxu0 %v714
  %810 = vmatprep.subr.mxu0 0.0
  %811 = vmatpush1.msra.mxu0 %v715
  %812 = vmatprep.subr.mxu0 0.0
  %813 = vmatpush1.msra.mxu0 %v716
  %814 = vmatprep.subr.mxu0 0.0
  %815 = vmatpush1.msra.mxu0 %v717
  %816 = vmatprep.subr.mxu0 0.0
  %817 = vmatpush1.msra.mxu0 %v718
  %818 = vmatprep.subr.mxu0 0.0
  %819 = vmatpush1.msra.mxu0 %v719
  %820 = vmatprep.subr.mxu0 0.0
  %821 = vmatpush1.msra.mxu0 %v720
  %822 = vmatprep.subr.mxu0 0.0
  %823 = vmatpush1.msra.mxu0 0.0
  %824 = vmatprep.subr.mxu0 0.0
  %825 = vmatpush1.msra.mxu0 0.0
  %826 = vmatprep.subr.mxu0 0.0
  %827 = vmatpush1.msra.mxu0 0.0
  %828 = vmatprep.subr.mxu0 0.0
  %829 = vmatpush1.msra.mxu0 0.0
  %830 = vmatprep.subr.mxu0 0.0
  %831 = vmatpush1.msra.mxu0 0.0
  %832 = vmatprep.subr.mxu0 0.0
  %833 = vmatpush1.msra.mxu0 0.0
  %834 = vmatprep.subr.mxu0 0.0
  %835 = vmatpush1.msra.mxu0 0.0
  %836 = vmatprep.subr.mxu0 0.0
  %837 = vmatpush1.msra.mxu0 0.0
  %838 = vmatprep.subr.mxu0 0.0
  %839 = vmatpush1.msra.mxu0 0.0
  %840 = vmatprep.subr.mxu0 0.0
  %841 = vmatpush1.msra.mxu0 0.0
  %842 = vmatprep.subr.mxu0 0.0
  %843 = vmatpush1.msra.mxu0 0.0
  %844 = vmatprep.subr.mxu0 0.0
  %845 = vmatpush1.msra.mxu0 0.0
  %846 = vmatprep.subr.mxu0 0.0
  %847 = vmatpush1.msra.mxu0 0.0
  %848 = vmatprep.subr.mxu0 0.0
  %849 = vmatpush1.msra.mxu0 0.0
  %850 = vmatprep.subr.mxu0 0.0
  %851 = vmatpush1.msra.mxu0 0.0
  %852 = vmatprep.subr.mxu0 0.0
  %853 = vmatpush1.msra.mxu0 0.0
  %854 = vmatprep.subr.mxu0 0.0
  %855 = vmatpush1.msra.mxu0 0.0
  %856 = vmatprep.subr.mxu0 0.0
  %857 = vmatpush1.msra.mxu0 0.0
  %858 = vmatprep.subr.mxu0 0.0
  %859 = vmatpush1.msra.mxu0 0.0
  %860 = vmatprep.subr.mxu0 0.0
  %861 = vmatpush1.msra.mxu0 0.0
  %862 = vmatprep.subr.mxu0 0.0
  %863 = vmatpush1.msra.mxu0 0.0
  %864 = vmatprep.subr.mxu0 0.0
  %865 = vmatpush1.msra.mxu0 0.0
  %866 = vmatprep.subr.mxu0 0.0
  %867 = vmatpush1.msra.mxu0 0.0
  %868 = vmatprep.subr.mxu0 0.0
  %869 = vmatpush1.msra.mxu0 0.0
  %870 = vmatprep.mubr.f32.mxu0 0.0
  %871 = vmatmul.mubr.f32.gmra.mrb[0].mxu0 %v804
  %v872 = vpop.f32.mrb[0].mxu0
  %v873 = vadd.f32 %v800, %v872
  %v874 = vpop.f32.mrb[0].mxu0
  %875 = vdwg.mxu0
  %v876 = vld [vmem:[#allocation2 + $0x2] sm:$0xf]
  %v877 = vld [vmem:[%s616] sm:$0xff]
  %v878 = vld [vmem:[%s616 + $0x8] sm:$0xff]
  %v879 = vld [vmem:[%s616 + $0x10] sm:$0xff]
  %v880 = vld [vmem:[%s616 + $0x18] sm:$0xff]
  %v881 = vld [vmem:[%s616 + $0x20] sm:$0xff]
  %v882 = vld [vmem:[%s616 + $0x28] sm:$0xff]
  %v883 = vld [vmem:[%s616 + $0x30] sm:$0xff]
  %v884 = vld [vmem:[%s616 + $0x38] sm:$0xff]
  %v886 = vsel %vm27, %v876, 0
  %888 = vmatprep.subr.mxu0 0.0
  %889 = vmatpush1.msra.mxu0 %v877
  %890 = vmatprep.subr.mxu0 0.0
  %891 = vmatpush1.msra.mxu0 %v878
  %892 = vmatprep.subr.mxu0 0.0
  %893 = vmatpush1.msra.mxu0 %v879
  %894 = vmatprep.subr.mxu0 0.0
  %895 = vmatpush1.msra.mxu0 %v880
  %896 = vmatprep.subr.mxu0 0.0
  %897 = vmatpush1.msra.mxu0 %v881
  %898 = vmatprep.subr.mxu0 0.0
  %899 = vmatpush1.msra.mxu0 %v882
  %900 = vmatprep.subr.mxu0 0.0
  %901 = vmatpush1.msra.mxu0 %v883
  %902 = vmatprep.subr.mxu0 0.0
  %903 = vmatpush1.msra.mxu0 %v884
  %904 = vmatprep.subr.mxu0 0.0
  %905 = vmatpush1.msra.mxu0 0.0
  %906 = vmatprep.subr.mxu0 0.0
  %907 = vmatpush1.msra.mxu0 0.0
  %908 = vmatprep.subr.mxu0 0.0
  %909 = vmatpush1.msra.mxu0 0.0
  %910 = vmatprep.subr.mxu0 0.0
  %911 = vmatpush1.msra.mxu0 0.0
  %912 = vmatprep.subr.mxu0 0.0
  %913 = vmatpush1.msra.mxu0 0.0
  %914 = vmatprep.subr.mxu0 0.0
  %915 = vmatpush1.msra.mxu0 0.0
  %916 = vmatprep.subr.mxu0 0.0
  %917 = vmatpush1.msra.mxu0 0.0
  %918 = vmatprep.subr.mxu0 0.0
  %919 = vmatpush1.msra.mxu0 0.0
  %920 = vmatprep.subr.mxu0 0.0
  %921 = vmatpush1.msra.mxu0 0.0
  %922 = vmatprep.subr.mxu0 0.0
  %923 = vmatpush1.msra.mxu0 0.0
  %924 = vmatprep.subr.mxu0 0.0
  %925 = vmatpush1.msra.mxu0 0.0
  %926 = vmatprep.subr.mxu0 0.0
  %927 = vmatpush1.msra.mxu0 0.0
  %928 = vmatprep.subr.mxu0 0.0
  %929 = vmatpush1.msra.mxu0 0.0
  %930 = vmatprep.subr.mxu0 0.0
  %931 = vmatpush1.msra.mxu0 0.0
  %932 = vmatprep.subr.mxu0 0.0
  %933 = vmatpush1.msra.mxu0 0.0
  %934 = vmatprep.subr.mxu0 0.0
  %935 = vmatpush1.msra.mxu0 0.0
  %936 = vmatprep.subr.mxu0 0.0
  %937 = vmatpush1.msra.mxu0 0.0
  %938 = vmatprep.subr.mxu0 0.0
  %939 = vmatpush1.msra.mxu0 0.0
  %940 = vmatprep.subr.mxu0 0.0
  %941 = vmatpush1.msra.mxu0 0.0
  %942 = vmatprep.subr.mxu0 0.0
  %943 = vmatpush1.msra.mxu0 0.0
  %944 = vmatprep.subr.mxu0 0.0
  %945 = vmatpush1.msra.mxu0 0.0
  %946 = vmatprep.subr.mxu0 0.0
  %947 = vmatpush1.msra.mxu0 0.0
  %948 = vmatprep.subr.mxu0 0.0
  %949 = vmatpush1.msra.mxu0 0.0
  %950 = vmatprep.subr.mxu0 0.0
  %951 = vmatpush1.msra.mxu0 0.0
  %952 = vmatprep.mubr.f32.mxu0 0.0
  %953 = vmatmul.mubr.f32.gmra.mrb[0].mxu0 %v886
  %v954 = vpop.f32.mrb[0].mxu0
  %v955 = vadd.f32 0.0, %v954
  %v956 = vpop.f32.mrb[0].mxu0
  %957 = vdwg.mxu0
  %v958 = vadd.f32 %v873, %v955
  %v959 = vadd.f32 %v958, %v703
  %s960 = scalar_lea.vmem %s7, 4
  %961 = vst.msk [vmem:[%s960] sm:$0xf] %vm448, %v959
  // Predicated region
  $region30: #{unet_forward.7} parent=0 // pred_check
    _
  $region31: #{unet_forward.7} parent=0 // pred_check_branch
    %963 = sbr.rel (0) target = $region33
  $region32: #{unet_forward.7} parent=0 // pred_region
    _
  $region33: #{unet_forward.7} parent=0 // pred_fallthru
    _
  // Predicated region
  $region34: #{unet_forward.7} parent=0 // pred_check
    _
  $region35: #{unet_forward.7} parent=0 // pred_check_branch
    %965 = sbr.rel (0) target = $region37
  $region36: #{unet_forward.7} parent=0 // pred_region
    _
  $region37: #{unet_forward.7} parent=0 // pred_fallthru
    _

// kernel: unet_forward.8
$region0: #{unet_forward.8}
  #allocation0 [shape = 'u32[]', space=smem, size = 0x4, offset = 0x4, fixed_abs, tag = 'smem constant byte address 0x4 - core index']
  #allocation1 [shape = 'u32[144,128]{1,0:T(1,128)}', space=vmem, size = 0x12000, scoped, tag = 'internal scratch']
  #allocation2 [shape = 'f32[4,64]{1,0:T(4,128)}', space=vmem, size = 0x800, scoped, tag = 'scratch operand']
  #allocation3 [shape = 'f32[4,64]{1,0:T(4,128)}', space=vmem, size = 0x800, scoped, tag = 'scratch operand']
  %s0 = inlined_call_operand.vmem [shape: f32[2,4,64], index: 0, kind: input, shape index: {}]
  %s1 = inlined_call_operand.vmem [shape: f32[2,4,64], index: 1, kind: input, shape index: {}]
  %s2 = inlined_call_operand.vmem [shape: f32[2,64,64], index: 2, kind: input, shape index: {}]
  %s3 = inlined_call_operand.vmem [shape: f32[2,64,64], index: 3, kind: input, shape index: {}]
  %s4 = inlined_call_operand.vmem [shape: f32[1,64], index: 4, kind: input, shape index: {}]
  %s5 = inlined_call_operand.vmem [shape: f32[2,8,64], index: 5, kind: output, shape index: {}]
  %s6 = sld [smem:[#allocation0]]
  $region53: #{unet_forward.8} parent=0
    _
  %s8 = ssub.s32 1, %s6
  %s9 = scalar_select 0, %s8, %s6
  loop: start=0, step=1, limit=4
  $region2: #{unet_forward.8} parent=0 // loop_pre_header
    _
  $region3: #{unet_forward.8} parent=0 // loop_header
    %s11 = sphi 0, %s15
    %p12 = scmp.ge.s32.totalorder %s11, 4
    %s21 = sphi 0, %s23
    %s24 = sphi 0, %s21
    %s25 = sphi 0, %s24
    %s41 = sphi 0, %s25
    %s47 = sphi 0, %s49
    %s50 = sphi 0, %s47
    %s51 = sphi 0, %s50
    %s67 = sphi 0, %s51
    %s71 = sphi 0, %s71
    %s73 = sphi 0, %s71
    %s74 = sphi 0, %s73
    %s88 = sphi 0, %s74
    %s92 = sphi 0, %s92
    %s94 = sphi 0, %s92
    %s95 = sphi 0, %s94
    %s109 = sphi 0, %s95
    %s113 = sphi 0, %s113
    %s115 = sphi 0, %s113
    %s116 = sphi 0, %s115
    %s130 = sphi 0, %s116
    %s136 = sphi 0, %s138
    %s139 = sphi 0, %s136
    %s140 = sphi 0, %s139
    %s156 = sphi 0, %s140
  $region4: #{unet_forward.8} parent=0 // loop_header_branch
    %14 = sbr.rel (%p12) target = $region8
  $region5: #{unet_forward.8} parent=0 // loop_body
    %s16 = ssub.s32 %s11, 1
    %s17 = ssub.s32 %s11, 2
    %s18 = sadd.s32 %s11, 1
    %s19 = ssub.s32 %s11, %s18
    %p20 = scmp.eq.s32.totalorder %s19, 0
    %s22 = sadd.s32 %s21, 1
    %s23 = scalar_select %p20, %s21, %s22
    %p26 = pneg %p20
    %p27 = scmp.eq.s32.totalorder %s11, 1
    %p28 = por %p26, %p27
    %p29 = scmp.ne.s32.totalorder %s21, %s24
    %p30 = scmp.eq.s32.totalorder %s11, 0
    %p31 = por %p29, %p30
    %p32 = scmp.ne.s32.totalorder %s21, %s24
    %p33 = scmp.eq.s32.totalorder %s16, 1
    %p34 = por %p32, %p33
    %p35 = scmp.ne.s32.totalorder %s24, %s25
    %p36 = scmp.eq.s32.totalorder %s16, 0
    %p37 = por %p35, %p36
    %p38 = scmp.ne.s32.totalorder %s24, %s25
    %p39 = scmp.eq.s32.totalorder %s17, 1
    %p40 = por %p38, %p39
    %p42 = scmp.ne.s32.totalorder %s25, %s41
    %p43 = scmp.eq.s32.totalorder %s17, 0
    %p44 = por %p42, %p43
    %s45 = ssub.s32 %s11, %s18
    %p46 = scmp.eq.s32.totalorder %s45, 0
    %s48 = sadd.s32 %s47, 1
    %s49 = scalar_select %p46, %s47, %s48
    %p52 = pneg %p46
    %p53 = scmp.eq.s32.totalorder %s11, 1
    %p54 = por %p52, %p53
    %p55 = scmp.ne.s32.totalorder %s47, %s50
    %p56 = scmp.eq.s32.totalorder %s11, 0
    %p57 = por %p55, %p56
    %p58 = scmp.ne.s32.totalorder %s47, %s50
    %p59 = scmp.eq.s32.totalorder %s16, 1
    %p60 = por %p58, %p59
    %p61 = scmp.ne.s32.totalorder %s50, %s51
    %p62 = scmp.eq.s32.totalorder %s16, 0
    %p63 = por %p61, %p62
    %p64 = scmp.ne.s32.totalorder %s50, %s51
    %p65 = scmp.eq.s32.totalorder %s17, 1
    %p66 = por %p64, %p65
    %p68 = scmp.ne.s32.totalorder %s51, %s67
    %p69 = scmp.eq.s32.totalorder %s17, 0
    %p70 = por %p68, %p69
    %s72 = sadd.s32 %s71, 1
    %p75 = scmp.eq.s32.totalorder %s11, 1
    %p76 = scmp.ne.s32.totalorder %s71, %s73
    %p77 = scmp.eq.s32.totalorder %s11, 0
    %p78 = por %p76, %p77
    %p79 = scmp.ne.s32.totalorder %s71, %s73
    %p80 = scmp.eq.s32.totalorder %s16, 1
    %p81 = por %p79, %p80
    %p82 = scmp.ne.s32.totalorder %s73, %s74
    %p83 = scmp.eq.s32.totalorder %s16, 0
    %p84 = por %p82, %p83
    %p85 = scmp.ne.s32.totalorder %s73, %s74
    %p86 = scmp.eq.s32.totalorder %s17, 1
    %p87 = por %p85, %p86
    %p89 = scmp.ne.s32.totalorder %s74, %s88
    %p90 = scmp.eq.s32.totalorder %s17, 0
    %p91 = por %p89, %p90
    %s93 = sadd.s32 %s92, 1
    %p96 = scmp.eq.s32.totalorder %s11, 1
    %p97 = scmp.ne.s32.totalorder %s92, %s94
    %p98 = scmp.eq.s32.totalorder %s11, 0
    %p99 = por %p97, %p98
    %p100 = scmp.ne.s32.totalorder %s92, %s94
    %p101 = scmp.eq.s32.totalorder %s16, 1
    %p102 = por %p100, %p101
    %p103 = scmp.ne.s32.totalorder %s94, %s95
    %p104 = scmp.eq.s32.totalorder %s16, 0
    %p105 = por %p103, %p104
    %p106 = scmp.ne.s32.totalorder %s94, %s95
    %p107 = scmp.eq.s32.totalorder %s17, 1
    %p108 = por %p106, %p107
    %p110 = scmp.ne.s32.totalorder %s95, %s109
    %p111 = scmp.eq.s32.totalorder %s17, 0
    %p112 = por %p110, %p111
    %s114 = sadd.s32 %s113, 1
    %p117 = scmp.eq.s32.totalorder %s11, 1
    %p118 = scmp.ne.s32.totalorder %s113, %s115
    %p119 = scmp.eq.s32.totalorder %s11, 0
    %p120 = por %p118, %p119
    %p121 = scmp.ne.s32.totalorder %s113, %s115
    %p122 = scmp.eq.s32.totalorder %s16, 1
    %p123 = por %p121, %p122
    %p124 = scmp.ne.s32.totalorder %s115, %s116
    %p125 = scmp.eq.s32.totalorder %s16, 0
    %p126 = por %p124, %p125
    %p127 = scmp.ne.s32.totalorder %s115, %s116
    %p128 = scmp.eq.s32.totalorder %s17, 1
    %p129 = por %p127, %p128
    %p131 = scmp.ne.s32.totalorder %s116, %s130
    %p132 = scmp.eq.s32.totalorder %s17, 0
    %p133 = por %p131, %p132
    %s134 = ssub.s32 %s11, %s18
    %p135 = scmp.eq.s32.totalorder %s134, 0
    %s137 = sadd.s32 %s136, 1
    %s138 = scalar_select %p135, %s136, %s137
    %p141 = pneg %p135
    %p142 = scmp.eq.s32.totalorder %s11, 1
    %p143 = por %p141, %p142
    %p144 = scmp.ne.s32.totalorder %s136, %s139
    %p145 = scmp.eq.s32.totalorder %s11, 0
    %p146 = por %p144, %p145
    %p147 = scmp.ne.s32.totalorder %s136, %s139
    %p148 = scmp.eq.s32.totalorder %s16, 1
    %p149 = por %p147, %p148
    %p150 = scmp.ne.s32.totalorder %s139, %s140
    %p151 = scmp.eq.s32.totalorder %s16, 0
    %p152 = por %p150, %p151
    %p153 = scmp.ne.s32.totalorder %s139, %s140
    %p154 = scmp.eq.s32.totalorder %s17, 1
    %p155 = por %p153, %p154
    %p157 = scmp.ne.s32.totalorder %s140, %s156
    %p158 = scmp.eq.s32.totalorder %s17, 0
    %p159 = por %p157, %p158
    %p160 = scmp.le.s32.totalorder 1, %s11
    %p161 = scmp.lt.s32.totalorder %s11, 3
    %p162 = pnand %p160, %p161
    %p163 = pneg %p162
    // Predicated region
    $region9: #{unet_forward.8} parent=5 // pred_check
      _
    $region10: #{unet_forward.8} parent=5 // pred_check_branch
      %165 = sbr.rel (%p162) target = $region12
    $region11: #{unet_forward.8} parent=5 // pred_region
      %s166 = ssub.s32 %s11, 1
      // Predicated region
      $region13: #{unet_forward.8} parent=11 // pred_check
        %p167 = pneg %p84
      $region14: #{unet_forward.8} parent=11 // pred_check_branch
        %169 = sbr.rel (%p167) target = $region16
      $region15: #{unet_forward.8} parent=11 // pred_region
        _
      $region16: #{unet_forward.8} parent=11 // pred_fallthru
        _
      // Predicated region
      $region17: #{unet_forward.8} parent=11 // pred_check
        %p170 = pneg %p105
      $region18: #{unet_forward.8} parent=11 // pred_check_branch
        %172 = sbr.rel (%p170) target = $region20
      $region19: #{unet_forward.8} parent=11 // pred_region
        _
      $region20: #{unet_forward.8} parent=11 // pred_fallthru
        _
      // Predicated region
      $region21: #{unet_forward.8} parent=11 // pred_check
        %p173 = pneg %p126
      $region22: #{unet_forward.8} parent=11 // pred_check_branch
        %175 = sbr.rel (%p173) target = $region24
      $region23: #{unet_forward.8} parent=11 // pred_region
        _
      $region24: #{unet_forward.8} parent=11 // pred_fallthru
        _
    $region12: #{unet_forward.8} parent=5 // pred_fallthru
      _
    %p176 = scmp.lt.s32.totalorder %s11, 2
    // Predicated region
    $region25: #{unet_forward.8} parent=5 // pred_check
      %p177 = pneg %p176
    $region26: #{unet_forward.8} parent=5 // pred_check_branch
      %179 = sbr.rel (%p177) target = $region28
    $region27: #{unet_forward.8} parent=5 // pred_region
      // Predicated region
      $region29: #{unet_forward.8} parent=27 // pred_check
        %p180 = pneg %p31
      $region30: #{unet_forward.8} parent=27 // pred_check_branch
        %182 = sbr.rel (%p180) target = $region32
      $region31: #{unet_forward.8} parent=27 // pred_region
        %p183 = scmp.lt.s32.totalorder %s11, 1
        %s184 = scalar_select %p183, %s11, 1
        %s185 = smul.addr %s184, 4
        %s186 = scalar_lea.vmem %s0, %s185
      $region32: #{unet_forward.8} parent=27 // pred_fallthru
        _
      // Predicated region
      $region33: #{unet_forward.8} parent=27 // pred_check
        %p187 = pneg %p57
      $region34: #{unet_forward.8} parent=27 // pred_check_branch
        %189 = sbr.rel (%p187) target = $region36
      $region35: #{unet_forward.8} parent=27 // pred_region
        %p190 = scmp.lt.s32.totalorder %s11, 1
        %s191 = scalar_select %p190, %s11, 1
        %s192 = smul.addr %s191, 4
        %s193 = scalar_lea.vmem %s1, %s192
      $region36: #{unet_forward.8} parent=27 // pred_fallthru
        _
    $region28: #{unet_forward.8} parent=5 // pred_fallthru
      _
    %p194 = scmp.le.s32.totalorder 1, %s11
    %p195 = scmp.lt.s32.totalorder %s11, 3
    %p196 = pnand %p194, %p195
    %p197 = pneg %p196
    // Predicated region
    $region37: #{unet_forward.8} parent=5 // pred_check
      _
    $region38: #{unet_forward.8} parent=5 // pred_check_branch
      %199 = sbr.rel (%p196) target = $region40
    $region39: #{unet_forward.8} parent=5 // pred_region
      %s200 = ssub.s32 %s11, 1
      %p201 = scmp.lt.s32.totalorder %s16, 1
      %s202 = scalar_select %p201, %s16, 1
      %s203 = smul.addr %s202, 4
      %s204 = scalar_lea.vmem %s0, %s203
      %p205 = pneg %p37
      %p206 = pneg %p34
      %p207 = scmp.lt.s32.totalorder %s16, 1
      %s208 = scalar_select %p207, %s16, 1
      %s209 = smul.addr %s208, 4
      %s210 = scalar_lea.vmem %s1, %s209
      %p211 = pneg %p63
      %p212 = pneg %p60
      %p213 = pneg %p84
      %p214 = pneg %p81
      %p215 = pneg %p105
      %p216 = pneg %p102
      %p217 = pneg %p126
      %p218 = pneg %p123
      %p219 = pneg %p152
      %p220 = pneg %p149
      %p221 = scmp.lt.s32.totalorder %s16, 1
      %s222 = scalar_select %p221, %s16, 1
      %s223 = smul.addr %s222, 8
      %s224 = scalar_lea.vmem %s5, %s223
      %p225 = scmp.lt.s32.totalorder %s16, 1
      %s226 = scalar_select %p225, %s16, 1
      %s227 = smul.addr %s226, 4
      %s228 = scalar_lea.vmem %s0, %s227
      %p229 = scmp.lt.s32.totalorder %s16, 1
      %s230 = scalar_select %p229, %s16, 1
      %s231 = smul.addr %s230, 4
      %s232 = scalar_lea.vmem %s1, %s231
      %p233 = scmp.lt.s32.totalorder %s16, 1
      %s234 = scalar_select %p233, %s16, 1
      %s235 = smul.addr %s234, 8
      %s236 = scalar_lea.vmem %s5, %s235
      %v237 = vld [vmem:[%s228] sm:$0xf]
      %v238 = vmax.f32 %v237, 0.0
      %v239 = vld [vmem:[%s232] sm:$0xf]
      %v240 = vld [vmem:[%s4] sm:$0x1]
      %v241 = vld [vmem:[%s2] sm:$0xff]
      %v242 = vld [vmem:[%s2 + $0x8] sm:$0xff]
      %v243 = vld [vmem:[%s2 + $0x10] sm:$0xff]
      %v244 = vld [vmem:[%s2 + $0x18] sm:$0xff]
      %v245 = vld [vmem:[%s2 + $0x20] sm:$0xff]
      %v246 = vld [vmem:[%s2 + $0x28] sm:$0xff]
      %v247 = vld [vmem:[%s2 + $0x30] sm:$0xff]
      %v248 = vld [vmem:[%s2 + $0x38] sm:$0xff]
      %v249 = vld [vmem:[%s3] sm:$0xff]
      %v250 = vld [vmem:[%s3 + $0x8] sm:$0xff]
      %v251 = vld [vmem:[%s3 + $0x10] sm:$0xff]
      %v252 = vld [vmem:[%s3 + $0x18] sm:$0xff]
      %v253 = vld [vmem:[%s3 + $0x20] sm:$0xff]
      %v254 = vld [vmem:[%s3 + $0x28] sm:$0xff]
      %v255 = vld [vmem:[%s3 + $0x30] sm:$0xff]
      %v256 = vld [vmem:[%s3 + $0x38] sm:$0xff]
      %vm257 = vcmask 523264
      %v259 = vsel %vm257, %v239, 0
      %261 = vmatprep.subr.mxu0 0.0
      %262 = vmatpush1.msra.mxu0 %v249
      %263 = vmatprep.subr.mxu0 0.0
      %264 = vmatpush1.msra.mxu0 %v250
      %265 = vmatprep.subr.mxu0 0.0
      %266 = vmatpush1.msra.mxu0 %v251
      %267 = vmatprep.subr.mxu0 0.0
      %268 = vmatpush1.msra.mxu0 %v252
      %269 = vmatprep.subr.mxu0 0.0
      %270 = vmatpush1.msra.mxu0 %v253
      %271 = vmatprep.subr.mxu0 0.0
      %272 = vmatpush1.msra.mxu0 %v254
      %273 = vmatprep.subr.mxu0 0.0
      %274 = vmatpush1.msra.mxu0 %v255
      %275 = vmatprep.subr.mxu0 0.0
      %276 = vmatpush1.msra.mxu0 %v256
      %277 = vmatprep.subr.mxu0 0.0
      %278 = vmatpush1.msra.mxu0 0.0
      %279 = vmatprep.subr.mxu0 0.0
      %280 = vmatpush1.msra.mxu0 0.0
      %281 = vmatprep.subr.mxu0 0.0
      %282 = vmatpush1.msra.mxu0 0.0
      %283 = vmatprep.subr.mxu0 0.0
      %284 = vmatpush1.msra.mxu0 0.0
      %285 = vmatprep.subr.mxu0 0.0
      %286 = vmatpush1.msra.mxu0 0.0
      %287 = vmatprep.subr.mxu0 0.0
      %288 = vmatpush1.msra.mxu0 0.0
      %289 = vmatprep.subr.mxu0 0.0
      %290 = vmatpush1.msra.mxu0 0.0
      %291 = vmatprep.subr.mxu0 0.0
      %292 = vmatpush1.msra.mxu0 0.0
      %293 = vmatprep.subr.mxu0 0.0
      %294 = vmatpush1.msra.mxu0 0.0
      %295 = vmatprep.subr.mxu0 0.0
      %296 = vmatpush1.msra.mxu0 0.0
      %297 = vmatprep.subr.mxu0 0.0
      %298 = vmatpush1.msra.mxu0 0.0
      %299 = vmatprep.subr.mxu0 0.0
      %300 = vmatpush1.msra.mxu0 0.0
      %301 = vmatprep.subr.mxu0 0.0
      %302 = vmatpush1.msra.mxu0 0.0
      %303 = vmatprep.subr.mxu0 0.0
      %304 = vmatpush1.msra.mxu0 0.0
      %305 = vmatprep.subr.mxu0 0.0
      %306 = vmatpush1.msra.mxu0 0.0
      %307 = vmatprep.subr.mxu0 0.0
      %308 = vmatpush1.msra.mxu0 0.0
      %309 = vmatprep.subr.mxu0 0.0
      %310 = vmatpush1.msra.mxu0 0.0
      %311 = vmatprep.subr.mxu0 0.0
      %312 = vmatpush1.msra.mxu0 0.0
      %313 = vmatprep.subr.mxu0 0.0
      %314 = vmatpush1.msra.mxu0 0.0
      %315 = vmatprep.subr.mxu0 0.0
      %316 = vmatpush1.msra.mxu0 0.0
      %317 = vmatprep.subr.mxu0 0.0
      %318 = vmatpush1.msra.mxu0 0.0
      %319 = vmatprep.subr.mxu0 0.0
      %320 = vmatpush1.msra.mxu0 0.0
      %321 = vmatprep.subr.mxu0 0.0
      %322 = vmatpush1.msra.mxu0 0.0
      %323 = vmatprep.subr.mxu0 0.0
      %324 = vmatpush1.msra.mxu0 0.0
      %325 = vmatprep.mubr.f32.mxu0 0.0
      %326 = vmatmul.mubr.f32.gmra.mrb[0].mxu0 %v259
      %v327 = vpop.f32.mrb[0].mxu0
      %v328 = vadd.f32 0.0, %v327
      %v329 = vpop.f32.mrb[0].mxu0
      %330 = vdwg.mxu0
      %v332 = vsel %vm257, %v238, 0
      %334 = vmatprep.subr.mxu0 0.0
      %335 = vmatpush1.msra.mxu0 %v241
      %336 = vmatprep.subr.mxu0 0.0
      %337 = vmatpush1.msra.mxu0 %v242
      %338 = vmatprep.subr.mxu0 0.0
      %339 = vmatpush1.msra.mxu0 %v243
      %340 = vmatprep.subr.mxu0 0.0
      %341 = vmatpush1.msra.mxu0 %v244
      %342 = vmatprep.subr.mxu0 0.0
      %343 = vmatpush1.msra.mxu0 %v245
      %344 = vmatprep.subr.mxu0 0.0
      %345 = vmatpush1.msra.mxu0 %v246
      %346 = vmatprep.subr.mxu0 0.0
      %347 = vmatpush1.msra.mxu0 %v247
      %348 = vmatprep.subr.mxu0 0.0
      %349 = vmatpush1.msra.mxu0 %v248
      %350 = vmatprep.subr.mxu0 0.0
      %351 = vmatpush1.msra.mxu0 0.0
      %352 = vmatprep.subr.mxu0 0.0
      %353 = vmatpush1.msra.mxu0 0.0
      %354 = vmatprep.subr.mxu0 0.0
      %355 = vmatpush1.msra.mxu0 0.0
      %356 = vmatprep.subr.mxu0 0.0
      %357 = vmatpush1.msra.mxu0 0.0
      %358 = vmatprep.subr.mxu0 0.0
      %359 = vmatpush1.msra.mxu0 0.0
      %360 = vmatprep.subr.mxu0 0.0
      %361 = vmatpush1.msra.mxu0 0.0
      %362 = vmatprep.subr.mxu0 0.0
      %363 = vmatpush1.msra.mxu0 0.0
      %364 = vmatprep.subr.mxu0 0.0
      %365 = vmatpush1.msra.mxu0 0.0
      %366 = vmatprep.subr.mxu0 0.0
      %367 = vmatpush1.msra.mxu0 0.0
      %368 = vmatprep.subr.mxu0 0.0
      %369 = vmatpush1.msra.mxu0 0.0
      %370 = vmatprep.subr.mxu0 0.0
      %371 = vmatpush1.msra.mxu0 0.0
      %372 = vmatprep.subr.mxu0 0.0
      %373 = vmatpush1.msra.mxu0 0.0
      %374 = vmatprep.subr.mxu0 0.0
      %375 = vmatpush1.msra.mxu0 0.0
      %376 = vmatprep.subr.mxu0 0.0
      %377 = vmatpush1.msra.mxu0 0.0
      %378 = vmatprep.subr.mxu0 0.0
      %379 = vmatpush1.msra.mxu0 0.0
      %380 = vmatprep.subr.mxu0 0.0
      %381 = vmatpush1.msra.mxu0 0.0
      %382 = vmatprep.subr.mxu0 0.0
      %383 = vmatpush1.msra.mxu0 0.0
      %384 = vmatprep.subr.mxu0 0.0
      %385 = vmatpush1.msra.mxu0 0.0
      %386 = vmatprep.subr.mxu0 0.0
      %387 = vmatpush1.msra.mxu0 0.0
      %388 = vmatprep.subr.mxu0 0.0
      %389 = vmatpush1.msra.mxu0 0.0
      %390 = vmatprep.subr.mxu0 0.0
      %391 = vmatpush1.msra.mxu0 0.0
      %392 = vmatprep.subr.mxu0 0.0
      %393 = vmatpush1.msra.mxu0 0.0
      %394 = vmatprep.subr.mxu0 0.0
      %395 = vmatpush1.msra.mxu0 0.0
      %396 = vmatprep.subr.mxu0 0.0
      %397 = vmatpush1.msra.mxu0 0.0
      %398 = vmatprep.mubr.f32.mxu0 0.0
      %399 = vmatmul.mubr.f32.gmra.mrb[0].mxu0 %v332
      %v400 = vpop.f32.mrb[0].mxu0
      %v401 = vadd.f32 %v328, %v400
      %v402 = vpop.f32.mrb[0].mxu0
      %403 = vdwg.mxu0
      %v405 = vlaneseq
      %v406 = vshrl.u32 %v405, 7
      %v407 = vsub.s32 0, %v406
      %v408 = vrot.slane %v240, %v407
      %v410 = vadd.f32 %v401, %v408
      %vm411 = vcmask 519168
      %412 = vst.msk [vmem:[#allocation2] sm:$0xf] %vm411, %v410
      %s413 = scalar_lea.vmem %s2, 64
      %v414 = vld [vmem:[%s413] sm:$0xff]
      %v415 = vld [vmem:[%s413 + $0x8] sm:$0xff]
      %v416 = vld [vmem:[%s413 + $0x10] sm:$0xff]
      %v417 = vld [vmem:[%s413 + $0x18] sm:$0xff]
      %v418 = vld [vmem:[%s413 + $0x20] sm:$0xff]
      %v419 = vld [vmem:[%s413 + $0x28] sm:$0xff]
      %v420 = vld [vmem:[%s413 + $0x30] sm:$0xff]
      %v421 = vld [vmem:[%s413 + $0x38] sm:$0xff]
      %s422 = scalar_lea.vmem %s3, 64
      %v423 = vld [vmem:[%s422] sm:$0xff]
      %v424 = vld [vmem:[%s422 + $0x8] sm:$0xff]
      %v425 = vld [vmem:[%s422 + $0x10] sm:$0xff]
      %v426 = vld [vmem:[%s422 + $0x18] sm:$0xff]
      %v427 = vld [vmem:[%s422 + $0x20] sm:$0xff]
      %v428 = vld [vmem:[%s422 + $0x28] sm:$0xff]
      %v429 = vld [vmem:[%s422 + $0x30] sm:$0xff]
      %v430 = vld [vmem:[%s422 + $0x38] sm:$0xff]
      %431 = vmatprep.subr.mxu0 0.0
      %432 = vmatpush1.msra.mxu0 %v423
      %433 = vmatprep.subr.mxu0 0.0
      %434 = vmatpush1.msra.mxu0 %v424
      %435 = vmatprep.subr.mxu0 0.0
      %436 = vmatpush1.msra.mxu0 %v425
      %437 = vmatprep.subr.mxu0 0.0
      %438 = vmatpush1.msra.mxu0 %v426
      %439 = vmatprep.subr.mxu0 0.0
      %440 = vmatpush1.msra.mxu0 %v427
      %441 = vmatprep.subr.mxu0 0.0
      %442 = vmatpush1.msra.mxu0 %v428
      %443 = vmatprep.subr.mxu0 0.0
      %444 = vmatpush1.msra.mxu0 %v429
      %445 = vmatprep.subr.mxu0 0.0
      %446 = vmatpush1.msra.mxu0 %v430
      %447 = vmatprep.subr.mxu0 0.0
      %448 = vmatpush1.msra.mxu0 0.0
      %449 = vmatprep.subr.mxu0 0.0
      %450 = vmatpush1.msra.mxu0 0.0
      %451 = vmatprep.subr.mxu0 0.0
      %452 = vmatpush1.msra.mxu0 0.0
      %453 = vmatprep.subr.mxu0 0.0
      %454 = vmatpush1.msra.mxu0 0.0
      %455 = vmatprep.subr.mxu0 0.0
      %456 = vmatpush1.msra.mxu0 0.0
      %457 = vmatprep.subr.mxu0 0.0
      %458 = vmatpush1.msra.mxu0 0.0
      %459 = vmatprep.subr.mxu0 0.0
      %460 = vmatpush1.msra.mxu0 0.0
      %461 = vmatprep.subr.mxu0 0.0
      %462 = vmatpush1.msra.mxu0 0.0
      %463 = vmatprep.subr.mxu0 0.0
      %464 = vmatpush1.msra.mxu0 0.0
      %465 = vmatprep.subr.mxu0 0.0
      %466 = vmatpush1.msra.mxu0 0.0
      %467 = vmatprep.subr.mxu0 0.0
      %468 = vmatpush1.msra.mxu0 0.0
      %469 = vmatprep.subr.mxu0 0.0
      %470 = vmatpush1.msra.mxu0 0.0
      %471 = vmatprep.subr.mxu0 0.0
      %472 = vmatpush1.msra.mxu0 0.0
      %473 = vmatprep.subr.mxu0 0.0
      %474 = vmatpush1.msra.mxu0 0.0
      %475 = vmatprep.subr.mxu0 0.0
      %476 = vmatpush1.msra.mxu0 0.0
      %477 = vmatprep.subr.mxu0 0.0
      %478 = vmatpush1.msra.mxu0 0.0
      %479 = vmatprep.subr.mxu0 0.0
      %480 = vmatpush1.msra.mxu0 0.0
      %481 = vmatprep.subr.mxu0 0.0
      %482 = vmatpush1.msra.mxu0 0.0
      %483 = vmatprep.subr.mxu0 0.0
      %484 = vmatpush1.msra.mxu0 0.0
      %485 = vmatprep.subr.mxu0 0.0
      %486 = vmatpush1.msra.mxu0 0.0
      %487 = vmatprep.subr.mxu0 0.0
      %488 = vmatpush1.msra.mxu0 0.0
      %489 = vmatprep.subr.mxu0 0.0
      %490 = vmatpush1.msra.mxu0 0.0
      %491 = vmatprep.subr.mxu0 0.0
      %492 = vmatpush1.msra.mxu0 0.0
      %493 = vmatprep.subr.mxu0 0.0
      %494 = vmatpush1.msra.mxu0 0.0
      %495 = vmatprep.mubr.f32.mxu0 0.0
      %496 = vmatmul.mubr.f32.gmra.mrb[0].mxu0 %v259
      %v497 = vpop.f32.mrb[0].mxu0
      %v498 = vadd.f32 0.0, %v497
      %v499 = vpop.f32.mrb[0].mxu0
      %500 = vdwg.mxu0
      %501 = vmatprep.subr.mxu0 0.0
      %502 = vmatpush1.msra.mxu0 %v414
      %503 = vmatprep.subr.mxu0 0.0
      %504 = vmatpush1.msra.mxu0 %v415
      %505 = vmatprep.subr.mxu0 0.0
      %506 = vmatpush1.msra.mxu0 %v416
      %507 = vmatprep.subr.mxu0 0.0
      %508 = vmatpush1.msra.mxu0 %v417
      %509 = vmatprep.subr.mxu0 0.0
      %510 = vmatpush1.msra.mxu0 %v418
      %511 = vmatprep.subr.mxu0 0.0
      %512 = vmatpush1.msra.mxu0 %v419
      %513 = vmatprep.subr.mxu0 0.0
      %514 = vmatpush1.msra.mxu0 %v420
      %515 = vmatprep.subr.mxu0 0.0
      %516 = vmatpush1.msra.mxu0 %v421
      %517 = vmatprep.subr.mxu0 0.0
      %518 = vmatpush1.msra.mxu0 0.0
      %519 = vmatprep.subr.mxu0 0.0
      %520 = vmatpush1.msra.mxu0 0.0
      %521 = vmatprep.subr.mxu0 0.0
      %522 = vmatpush1.msra.mxu0 0.0
      %523 = vmatprep.subr.mxu0 0.0
      %524 = vmatpush1.msra.mxu0 0.0
      %525 = vmatprep.subr.mxu0 0.0
      %526 = vmatpush1.msra.mxu0 0.0
      %527 = vmatprep.subr.mxu0 0.0
      %528 = vmatpush1.msra.mxu0 0.0
      %529 = vmatprep.subr.mxu0 0.0
      %530 = vmatpush1.msra.mxu0 0.0
      %531 = vmatprep.subr.mxu0 0.0
      %532 = vmatpush1.msra.mxu0 0.0
      %533 = vmatprep.subr.mxu0 0.0
      %534 = vmatpush1.msra.mxu0 0.0
      %535 = vmatprep.subr.mxu0 0.0
      %536 = vmatpush1.msra.mxu0 0.0
      %537 = vmatprep.subr.mxu0 0.0
      %538 = vmatpush1.msra.mxu0 0.0
      %539 = vmatprep.subr.mxu0 0.0
      %540 = vmatpush1.msra.mxu0 0.0
      %541 = vmatprep.subr.mxu0 0.0
      %542 = vmatpush1.msra.mxu0 0.0
      %543 = vmatprep.subr.mxu0 0.0
      %544 = vmatpush1.msra.mxu0 0.0
      %545 = vmatprep.subr.mxu0 0.0
      %546 = vmatpush1.msra.mxu0 0.0
      %547 = vmatprep.subr.mxu0 0.0
      %548 = vmatpush1.msra.mxu0 0.0
      %549 = vmatprep.subr.mxu0 0.0
      %550 = vmatpush1.msra.mxu0 0.0
      %551 = vmatprep.subr.mxu0 0.0
      %552 = vmatpush1.msra.mxu0 0.0
      %553 = vmatprep.subr.mxu0 0.0
      %554 = vmatpush1.msra.mxu0 0.0
      %555 = vmatprep.subr.mxu0 0.0
      %556 = vmatpush1.msra.mxu0 0.0
      %557 = vmatprep.subr.mxu0 0.0
      %558 = vmatpush1.msra.mxu0 0.0
      %559 = vmatprep.subr.mxu0 0.0
      %560 = vmatpush1.msra.mxu0 0.0
      %561 = vmatprep.subr.mxu0 0.0
      %562 = vmatpush1.msra.mxu0 0.0
      %563 = vmatprep.subr.mxu0 0.0
      %564 = vmatpush1.msra.mxu0 0.0
      %565 = vmatprep.mubr.f32.mxu0 0.0
      %566 = vmatmul.mubr.f32.gmra.mrb[0].mxu0 %v332
      %v567 = vpop.f32.mrb[0].mxu0
      %v568 = vadd.f32 %v498, %v567
      %v569 = vpop.f32.mrb[0].mxu0
      %570 = vdwg.mxu0
      %v571 = vadd.f32 %v568, %v408
      %572 = vst.msk [vmem:[#allocation3] sm:$0xf] %vm411, %v571
      %v573 = vld [vmem:[#allocation2] sm:$0x1]
      %vm574 = vcmask 516096
      %575 = vst.msk [vmem:[%s236] sm:$0x1] %vm574, %v573
      %v576 = vld [vmem:[#allocation3] sm:$0x1]
      %577 = vst.msk [vmem:[%s236 + $0x1] sm:$0x1] %vm574, %v576
      %v578 = vld [vmem:[#allocation2 + $0x1] sm:$0x1]
      %579 = vst.msk [vmem:[%s236 + $0x2] sm:$0x1] %vm574, %v578
      %v580 = vld [vmem:[#allocation3 + $0x1] sm:$0x1]
      %581 = vst.msk [vmem:[%s236 + $0x3] sm:$0x1] %vm574, %v580
      %v582 = vld [vmem:[#allocation2 + $0x2] sm:$0x1]
      %583 = vst.msk [vmem:[%s236 + $0x4] sm:$0x1] %vm574, %v582
      %v584 = vld [vmem:[#allocation3 + $0x2] sm:$0x1]
      %585 = vst.msk [vmem:[%s236 + $0x5] sm:$0x1] %vm574, %v584
      %v586 = vld [vmem:[#allocation2 + $0x3] sm:$0x1]
      %587 = vst.msk [vmem:[%s236 + $0x6] sm:$0x1] %vm574, %v586
      %v588 = vld [vmem:[#allocation3 + $0x3] sm:$0x1]
      %589 = vst.msk [vmem:[%s236 + $0x7] sm:$0x1] %vm574, %v588
      %p590 = scmp.lt.s32.totalorder %s16, 1
      %s591 = scalar_select %p590, %s16, 1
      %s592 = smul.addr %s591, 8
      %s593 = scalar_lea.vmem %s5, %s592
      // Predicated region
      $region41: #{unet_forward.8} parent=39 // pred_check
        %p594 = pneg %p149
      $region42: #{unet_forward.8} parent=39 // pred_check_branch
        %596 = sbr.rel (%p594) target = $region44
      $region43: #{unet_forward.8} parent=39 // pred_region
        _
      $region44: #{unet_forward.8} parent=39 // pred_fallthru
        _
    $region40: #{unet_forward.8} parent=5 // pred_fallthru
      _
    %p597 = scmp.le.s32.totalorder 2, %s11
    // Predicated region
    $region45: #{unet_forward.8} parent=5 // pred_check
      %p598 = pneg %p597
    $region46: #{unet_forward.8} parent=5 // pred_check_branch
      %600 = sbr.rel (%p598) target = $region48
    $region47: #{unet_forward.8} parent=5 // pred_region
      %s601 = ssub.s32 %s11, 2
      // Predicated region
      $region49: #{unet_forward.8} parent=47 // pred_check
        %p602 = pneg %p155
      $region50: #{unet_forward.8} parent=47 // pred_check_branch
        %604 = sbr.rel (%p602) target = $region52
      $region51: #{unet_forward.8} parent=47 // pred_region
        %p605 = scmp.lt.s32.totalorder %s17, 1
        %s606 = scalar_select %p605, %s17, 1
        %s607 = smul.addr %s606, 8
        %s608 = scalar_lea.vmem %s5, %s607
      $region52: #{unet_forward.8} parent=47 // pred_fallthru
        _
    $region48: #{unet_forward.8} parent=5 // pred_fallthru
      _
  $region6: #{unet_forward.8} parent=0 // loop_footer
    %s15 = sadd.s32 1, %s11
  $region7: #{unet_forward.8} parent=0 // loop_footer_branch
    %10 = sbr.rel target = $region3
  $region8: #{unet_forward.8} parent=0 // loop_exit
    _

// kernel: tile.58
$region0: #{tile.58}
  #allocation0 [shape = 's32[1]{0}', space=sflag, size = 0x4, scoped, tag = 'scoped memory for tile.58']
  %s0 = inlined_call_operand.vmem [shape: f32[5], index: 0, kind: input, shape index: {}]
  %s1 = inlined_call_operand.vmem [shape: f32[16,5], index: 1, kind: output, shape index: {}]
  // Predicated region
  $region2: #{tile.58} parent=0 // pred_check
    _
  $region3: #{tile.58} parent=0 // pred_check_branch
    %3 = sbr.rel (0) target = $region5
  $region4: #{tile.58} parent=0 // pred_region
    _
  $region5: #{tile.58} parent=0 // pred_fallthru
    _
  %v4 = vld [vmem:[%s0] ss:$0 sm:$0xff]
  %5 = vst [vmem:[%s1] sm:$0xff] %v4
  %s6 = scalar_lea.vmem %s1, 8
  %7 = vst [vmem:[%s6] sm:$0xff] %v4

// kernel: tile.59
$region0: #{tile.59}
  %s0 = inlined_call_operand.vmem [shape: f32[16,5], index: 0, kind: input, shape index: {}]
  %s1 = inlined_call_operand.vmem [shape: f32[1,80], index: 1, kind: output, shape index: {}]
  $region1: #{tile.59} parent=0
    #allocation0 [shape = 'u8[4096]{0}', space=vmem, size = 0x1000, scoped, tag = 'scoped mem for output reshape']
    %v2 = vld [vmem:[%s0] sm:$0x1]
    %vm3 = vcmask 39936
    %4 = vst.msk [vmem:[#allocation0] sm:$0x1] %vm3, %v2
    %s5 = scalar_lea.vmem %s0, 15
    %v6 = vld [vmem:[%s5] sm:$0x1]
    %7 = vrot.lane.b32.xlu0 %v6, 75
    %v8 = vpop.permute.xlu0 %7
    %vm9 = vcmask 654936
    %10 = vst.msk [vmem:[#allocation0] sm:$0x1] %vm9, %v8
    %s11 = scalar_lea.vmem %s0, 14
    %v12 = vld [vmem:[%s11] sm:$0x1]
    %13 = vrot.lane.b32.xlu0 %v12, 70
    %v14 = vpop.permute.xlu0 %13
    %vm15 = vcmask 613936
    %16 = vst.msk [vmem:[#allocation0] sm:$0x1] %vm15, %v14
    %s17 = scalar_lea.vmem %s0, 13
    %v18 = vld [vmem:[%s17] sm:$0x1]
    %19 = vrot.lane.b32.xlu0 %v18, 65
    %v20 = vpop.permute.xlu0 %19
    %vm21 = vcmask 572936
    %22 = vst.msk [vmem:[#allocation0] sm:$0x1] %vm21, %v20
    %s23 = scalar_lea.vmem %s0, 12
    %v24 = vld [vmem:[%s23] sm:$0x1]
    %25 = vrot.lane.b32.xlu0 %v24, 60
    %v26 = vpop.permute.xlu0 %25
    %vm27 = vcmask 531936
    %28 = vst.msk [vmem:[#allocation0] sm:$0x1] %vm27, %v26
    %s29 = scalar_lea.vmem %s0, 11
    %v30 = vld [vmem:[%s29] sm:$0x1]
    %31 = vrot.lane.b32.xlu0 %v30, 55
    %v32 = vpop.permute.xlu0 %31
    %vm33 = vcmask 490936
    %34 = vst.msk [vmem:[#allocation0] sm:$0x1] %vm33, %v32
    %s35 = scalar_lea.vmem %s0, 10
    %v36 = vld [vmem:[%s35] sm:$0x1]
    %37 = vrot.lane.b32.xlu0 %v36, 50
    %v38 = vpop.permute.xlu0 %37
    %vm39 = vcmask 449936
    %40 = vst.msk [vmem:[#allocation0] sm:$0x1] %vm39, %v38
    %s41 = scalar_lea.vmem %s0, 9
    %v42 = vld [vmem:[%s41] sm:$0x1]
    %43 = vrot.lane.b32.xlu0 %v42, 45
    %v44 = vpop.permute.xlu0 %43
    %vm45 = vcmask 408936
    %46 = vst.msk [vmem:[#allocation0] sm:$0x1] %vm45, %v44
    %s47 = scalar_lea.vmem %s0, 8
    %v48 = vld [vmem:[%s47] sm:$0x1]
    %49 = vrot.lane.b32.xlu0 %v48, 40
    %v50 = vpop.permute.xlu0 %49
    %vm51 = vcmask 367936
    %52 = vst.msk [vmem:[#allocation0] sm:$0x1] %vm51, %v50
    %s53 = scalar_lea.vmem %s0, 7
    %v54 = vld [vmem:[%s53] sm:$0x1]
    %55 = vrot.lane.b32.xlu0 %v54, 35
    %v56 = vpop.permute.xlu0 %55
    %vm57 = vcmask 326936
    %58 = vst.msk [vmem:[#allocation0] sm:$0x1] %vm57, %v56
    %s59 = scalar_lea.vmem %s0, 6
    %v60 = vld [vmem:[%s59] sm:$0x1]
    %61 = vrot.lane.b32.xlu0 %v60, 30
    %v62 = vpop.permute.xlu0 %61
    %vm63 = vcmask 285936
    %64 = vst.msk [vmem:[#allocation0] sm:$0x1] %vm63, %v62
    %s65 = scalar_lea.vmem %s0, 5
    %v66 = vld [vmem:[%s65] sm:$0x1]
    %67 = vrot.lane.b32.xlu0 %v66, 25
    %v68 = vpop.permute.xlu0 %67
    %vm69 = vcmask 244936
    %70 = vst.msk [vmem:[#allocation0] sm:$0x1] %vm69, %v68
    %s71 = scalar_lea.vmem %s0, 4
    %v72 = vld [vmem:[%s71] sm:$0x1]
    %73 = vrot.lane.b32.xlu0 %v72, 20
    %v74 = vpop.permute.xlu0 %73
    %vm75 = vcmask 203936
    %76 = vst.msk [vmem:[#allocation0] sm:$0x1] %vm75, %v74
    %s77 = scalar_lea.vmem %s0, 3
    %v78 = vld [vmem:[%s77] sm:$0x1]
    %79 = vrot.lane.b32.xlu0 %v78, 15
    %v80 = vpop.permute.xlu0 %79
    %vm81 = vcmask 162936
    %82 = vst.msk [vmem:[#allocation0] sm:$0x1] %vm81, %v80
    %s83 = scalar_lea.vmem %s0, 2
    %v84 = vld [vmem:[%s83] sm:$0x1]
    %85 = vrot.lane.b32.xlu0 %v84, 10
    %v86 = vpop.permute.xlu0 %85
    %vm87 = vcmask 121936
    %88 = vst.msk [vmem:[#allocation0] sm:$0x1] %vm87, %v86
    %s89 = scalar_lea.vmem %s0, 1
    %v90 = vld [vmem:[%s89] sm:$0x1]
    %91 = vrot.lane.b32.xlu0 %v90, 5
    %v92 = vpop.permute.xlu0 %91
    %vm93 = vcmask 80936
    %94 = vst.msk [vmem:[#allocation0] sm:$0x1] %vm93, %v92
    %s96 = sshllo.u32 0, 1
    %v98 = vld [vmem:[#allocation0] sm:%s96]
    %s99 = sshllo.u32 0, 1
    %100 = vst [vmem:[%s1] sm:%s99] %v98

// kernel: unet_forward.9
$region0: #{unet_forward.9}
  #allocation0 [shape = 'u32[]', space=smem, size = 0x4, offset = 0x4, fixed_abs, tag = 'smem constant byte address 0x4 - core index']
  #allocation1 [shape = 'u32[144,128]{1,0:T(1,128)}', space=vmem, size = 0x12000, scoped, tag = 'internal scratch']
  #allocation2 [shape = 'f32[8,80]{1,0:T(8,128)}', space=vmem, size = 0x1000, scoped, tag = 'scratch operand']
  #allocation3 [shape = 'f32[8,80]{1,0:T(8,128)}', space=vmem, size = 0x1000, scoped, tag = 'scratch operand']
  %s0 = inlined_call_operand.vmem [shape: f32[2,8,64], index: 0, kind: input, shape index: {}]
  %s1 = inlined_call_operand.vmem [shape: f32[2,8,64], index: 1, kind: input, shape index: {}]
  %s2 = inlined_call_operand.vmem [shape: f32[2,64,80], index: 2, kind: input, shape index: {}]
  %s3 = inlined_call_operand.vmem [shape: f32[2,64,80], index: 3, kind: input, shape index: {}]
  %s4 = inlined_call_operand.vmem [shape: f32[1,80], index: 4, kind: input, shape index: {}]
  %s5 = inlined_call_operand.vmem [shape: f32[2,16,80], index: 5, kind: output, shape index: {}]
  %s6 = sld [smem:[#allocation0]]
  $region53: #{unet_forward.9} parent=0
    _
  %s8 = ssub.s32 1, %s6
  %s9 = scalar_select 0, %s8, %s6
  loop: start=0, step=1, limit=4
  $region2: #{unet_forward.9} parent=0 // loop_pre_header
    _
  $region3: #{unet_forward.9} parent=0 // loop_header
    %s11 = sphi 0, %s15
    %p12 = scmp.ge.s32.totalorder %s11, 4
    %s21 = sphi 0, %s23
    %s24 = sphi 0, %s21
    %s25 = sphi 0, %s24
    %s41 = sphi 0, %s25
    %s47 = sphi 0, %s49
    %s50 = sphi 0, %s47
    %s51 = sphi 0, %s50
    %s67 = sphi 0, %s51
    %s71 = sphi 0, %s71
    %s73 = sphi 0, %s71
    %s74 = sphi 0, %s73
    %s88 = sphi 0, %s74
    %s92 = sphi 0, %s92
    %s94 = sphi 0, %s92
    %s95 = sphi 0, %s94
    %s109 = sphi 0, %s95
    %s113 = sphi 0, %s113
    %s115 = sphi 0, %s113
    %s116 = sphi 0, %s115
    %s130 = sphi 0, %s116
    %s136 = sphi 0, %s138
    %s139 = sphi 0, %s136
    %s140 = sphi 0, %s139
    %s156 = sphi 0, %s140
  $region4: #{unet_forward.9} parent=0 // loop_header_branch
    %14 = sbr.rel (%p12) target = $region8
  $region5: #{unet_forward.9} parent=0 // loop_body
    %s16 = ssub.s32 %s11, 1
    %s17 = ssub.s32 %s11, 2
    %s18 = sadd.s32 %s11, 1
    %s19 = ssub.s32 %s11, %s18
    %p20 = scmp.eq.s32.totalorder %s19, 0
    %s22 = sadd.s32 %s21, 1
    %s23 = scalar_select %p20, %s21, %s22
    %p26 = pneg %p20
    %p27 = scmp.eq.s32.totalorder %s11, 1
    %p28 = por %p26, %p27
    %p29 = scmp.ne.s32.totalorder %s21, %s24
    %p30 = scmp.eq.s32.totalorder %s11, 0
    %p31 = por %p29, %p30
    %p32 = scmp.ne.s32.totalorder %s21, %s24
    %p33 = scmp.eq.s32.totalorder %s16, 1
    %p34 = por %p32, %p33
    %p35 = scmp.ne.s32.totalorder %s24, %s25
    %p36 = scmp.eq.s32.totalorder %s16, 0
    %p37 = por %p35, %p36
    %p38 = scmp.ne.s32.totalorder %s24, %s25
    %p39 = scmp.eq.s32.totalorder %s17, 1
    %p40 = por %p38, %p39
    %p42 = scmp.ne.s32.totalorder %s25, %s41
    %p43 = scmp.eq.s32.totalorder %s17, 0
    %p44 = por %p42, %p43
    %s45 = ssub.s32 %s11, %s18
    %p46 = scmp.eq.s32.totalorder %s45, 0
    %s48 = sadd.s32 %s47, 1
    %s49 = scalar_select %p46, %s47, %s48
    %p52 = pneg %p46
    %p53 = scmp.eq.s32.totalorder %s11, 1
    %p54 = por %p52, %p53
    %p55 = scmp.ne.s32.totalorder %s47, %s50
    %p56 = scmp.eq.s32.totalorder %s11, 0
    %p57 = por %p55, %p56
    %p58 = scmp.ne.s32.totalorder %s47, %s50
    %p59 = scmp.eq.s32.totalorder %s16, 1
    %p60 = por %p58, %p59
    %p61 = scmp.ne.s32.totalorder %s50, %s51
    %p62 = scmp.eq.s32.totalorder %s16, 0
    %p63 = por %p61, %p62
    %p64 = scmp.ne.s32.totalorder %s50, %s51
    %p65 = scmp.eq.s32.totalorder %s17, 1
    %p66 = por %p64, %p65
    %p68 = scmp.ne.s32.totalorder %s51, %s67
    %p69 = scmp.eq.s32.totalorder %s17, 0
    %p70 = por %p68, %p69
    %s72 = sadd.s32 %s71, 1
    %p75 = scmp.eq.s32.totalorder %s11, 1
    %p76 = scmp.ne.s32.totalorder %s71, %s73
    %p77 = scmp.eq.s32.totalorder %s11, 0
    %p78 = por %p76, %p77
    %p79 = scmp.ne.s32.totalorder %s71, %s73
    %p80 = scmp.eq.s32.totalorder %s16, 1
    %p81 = por %p79, %p80
    %p82 = scmp.ne.s32.totalorder %s73, %s74
    %p83 = scmp.eq.s32.totalorder %s16, 0
    %p84 = por %p82, %p83
    %p85 = scmp.ne.s32.totalorder %s73, %s74
    %p86 = scmp.eq.s32.totalorder %s17, 1
    %p87 = por %p85, %p86
    %p89 = scmp.ne.s32.totalorder %s74, %s88
    %p90 = scmp.eq.s32.totalorder %s17, 0
    %p91 = por %p89, %p90
    %s93 = sadd.s32 %s92, 1
    %p96 = scmp.eq.s32.totalorder %s11, 1
    %p97 = scmp.ne.s32.totalorder %s92, %s94
    %p98 = scmp.eq.s32.totalorder %s11, 0
    %p99 = por %p97, %p98
    %p100 = scmp.ne.s32.totalorder %s92, %s94
    %p101 = scmp.eq.s32.totalorder %s16, 1
    %p102 = por %p100, %p101
    %p103 = scmp.ne.s32.totalorder %s94, %s95
    %p104 = scmp.eq.s32.totalorder %s16, 0
    %p105 = por %p103, %p104
    %p106 = scmp.ne.s32.totalorder %s94, %s95
    %p107 = scmp.eq.s32.totalorder %s17, 1
    %p108 = por %p106, %p107
    %p110 = scmp.ne.s32.totalorder %s95, %s109
    %p111 = scmp.eq.s32.totalorder %s17, 0
    %p112 = por %p110, %p111
    %s114 = sadd.s32 %s113, 1
    %p117 = scmp.eq.s32.totalorder %s11, 1
    %p118 = scmp.ne.s32.totalorder %s113, %s115
    %p119 = scmp.eq.s32.totalorder %s11, 0
    %p120 = por %p118, %p119
    %p121 = scmp.ne.s32.totalorder %s113, %s115
    %p122 = scmp.eq.s32.totalorder %s16, 1
    %p123 = por %p121, %p122
    %p124 = scmp.ne.s32.totalorder %s115, %s116
    %p125 = scmp.eq.s32.totalorder %s16, 0
    %p126 = por %p124, %p125
    %p127 = scmp.ne.s32.totalorder %s115, %s116
    %p128 = scmp.eq.s32.totalorder %s17, 1
    %p129 = por %p127, %p128
    %p131 = scmp.ne.s32.totalorder %s116, %s130
    %p132 = scmp.eq.s32.totalorder %s17, 0
    %p133 = por %p131, %p132
    %s134 = ssub.s32 %s11, %s18
    %p135 = scmp.eq.s32.totalorder %s134, 0
    %s137 = sadd.s32 %s136, 1
    %s138 = scalar_select %p135, %s136, %s137
    %p141 = pneg %p135
    %p142 = scmp.eq.s32.totalorder %s11, 1
    %p143 = por %p141, %p142
    %p144 = scmp.ne.s32.totalorder %s136, %s139
    %p145 = scmp.eq.s32.totalorder %s11, 0
    %p146 = por %p144, %p145
    %p147 = scmp.ne.s32.totalorder %s136, %s139
    %p148 = scmp.eq.s32.totalorder %s16, 1
    %p149 = por %p147, %p148
    %p150 = scmp.ne.s32.totalorder %s139, %s140
    %p151 = scmp.eq.s32.totalorder %s16, 0
    %p152 = por %p150, %p151
    %p153 = scmp.ne.s32.totalorder %s139, %s140
    %p154 = scmp.eq.s32.totalorder %s17, 1
    %p155 = por %p153, %p154
    %p157 = scmp.ne.s32.totalorder %s140, %s156
    %p158 = scmp.eq.s32.totalorder %s17, 0
    %p159 = por %p157, %p158
    %p160 = scmp.le.s32.totalorder 1, %s11
    %p161 = scmp.lt.s32.totalorder %s11, 3
    %p162 = pnand %p160, %p161
    %p163 = pneg %p162
    // Predicated region
    $region9: #{unet_forward.9} parent=5 // pred_check
      _
    $region10: #{unet_forward.9} parent=5 // pred_check_branch
      %165 = sbr.rel (%p162) target = $region12
    $region11: #{unet_forward.9} parent=5 // pred_region
      %s166 = ssub.s32 %s11, 1
      // Predicated region
      $region13: #{unet_forward.9} parent=11 // pred_check
        %p167 = pneg %p84
      $region14: #{unet_forward.9} parent=11 // pred_check_branch
        %169 = sbr.rel (%p167) target = $region16
      $region15: #{unet_forward.9} parent=11 // pred_region
        _
      $region16: #{unet_forward.9} parent=11 // pred_fallthru
        _
      // Predicated region
      $region17: #{unet_forward.9} parent=11 // pred_check
        %p170 = pneg %p105
      $region18: #{unet_forward.9} parent=11 // pred_check_branch
        %172 = sbr.rel (%p170) target = $region20
      $region19: #{unet_forward.9} parent=11 // pred_region
        _
      $region20: #{unet_forward.9} parent=11 // pred_fallthru
        _
      // Predicated region
      $region21: #{unet_forward.9} parent=11 // pred_check
        %p173 = pneg %p126
      $region22: #{unet_forward.9} parent=11 // pred_check_branch
        %175 = sbr.rel (%p173) target = $region24
      $region23: #{unet_forward.9} parent=11 // pred_region
        _
      $region24: #{unet_forward.9} parent=11 // pred_fallthru
        _
    $region12: #{unet_forward.9} parent=5 // pred_fallthru
      _
    %p176 = scmp.lt.s32.totalorder %s11, 2
    // Predicated region
    $region25: #{unet_forward.9} parent=5 // pred_check
      %p177 = pneg %p176
    $region26: #{unet_forward.9} parent=5 // pred_check_branch
      %179 = sbr.rel (%p177) target = $region28
    $region27: #{unet_forward.9} parent=5 // pred_region
      // Predicated region
      $region29: #{unet_forward.9} parent=27 // pred_check
        %p180 = pneg %p31
      $region30: #{unet_forward.9} parent=27 // pred_check_branch
        %182 = sbr.rel (%p180) target = $region32
      $region31: #{unet_forward.9} parent=27 // pred_region
        %p183 = scmp.lt.s32.totalorder %s11, 1
        %s184 = scalar_select %p183, %s11, 1
        %s185 = smul.addr %s184, 8
        %s186 = scalar_lea.vmem %s0, %s185
      $region32: #{unet_forward.9} parent=27 // pred_fallthru
        _
      // Predicated region
      $region33: #{unet_forward.9} parent=27 // pred_check
        %p187 = pneg %p57
      $region34: #{unet_forward.9} parent=27 // pred_check_branch
        %189 = sbr.rel (%p187) target = $region36
      $region35: #{unet_forward.9} parent=27 // pred_region
        %p190 = scmp.lt.s32.totalorder %s11, 1
        %s191 = scalar_select %p190, %s11, 1
        %s192 = smul.addr %s191, 8
        %s193 = scalar_lea.vmem %s1, %s192
      $region36: #{unet_forward.9} parent=27 // pred_fallthru
        _
    $region28: #{unet_forward.9} parent=5 // pred_fallthru
      _
    %p194 = scmp.le.s32.totalorder 1, %s11
    %p195 = scmp.lt.s32.totalorder %s11, 3
    %p196 = pnand %p194, %p195
    %p197 = pneg %p196
    // Predicated region
    $region37: #{unet_forward.9} parent=5 // pred_check
      _
    $region38: #{unet_forward.9} parent=5 // pred_check_branch
      %199 = sbr.rel (%p196) target = $region40
    $region39: #{unet_forward.9} parent=5 // pred_region
      %s200 = ssub.s32 %s11, 1
      %p201 = scmp.lt.s32.totalorder %s16, 1
      %s202 = scalar_select %p201, %s16, 1
      %s203 = smul.addr %s202, 8
      %s204 = scalar_lea.vmem %s0, %s203
      %p205 = pneg %p37
      %p206 = pneg %p34
      %p207 = scmp.lt.s32.totalorder %s16, 1
      %s208 = scalar_select %p207, %s16, 1
      %s209 = smul.addr %s208, 8
      %s210 = scalar_lea.vmem %s1, %s209
      %p211 = pneg %p63
      %p212 = pneg %p60
      %p213 = pneg %p84
      %p214 = pneg %p81
      %p215 = pneg %p105
      %p216 = pneg %p102
      %p217 = pneg %p126
      %p218 = pneg %p123
      %p219 = pneg %p152
      %p220 = pneg %p149
      %p221 = scmp.lt.s32.totalorder %s16, 1
      %s222 = scalar_select %p221, %s16, 1
      %s223 = smul.addr %s222, 2
      %s224 = smul.addr %s223, 8
      %s225 = scalar_lea.vmem %s5, %s224
      %p226 = scmp.lt.s32.totalorder %s16, 1
      %s227 = scalar_select %p226, %s16, 1
      %s228 = smul.addr %s227, 8
      %s229 = scalar_lea.vmem %s0, %s228
      %p230 = scmp.lt.s32.totalorder %s16, 1
      %s231 = scalar_select %p230, %s16, 1
      %s232 = smul.addr %s231, 8
      %s233 = scalar_lea.vmem %s1, %s232
      %p234 = scmp.lt.s32.totalorder %s16, 1
      %s235 = scalar_select %p234, %s16, 1
      %s236 = smul.addr %s235, 2
      %s237 = smul.addr %s236, 8
      %s238 = scalar_lea.vmem %s5, %s237
      %v239 = vld [vmem:[%s229] sm:$0xff]
      %v240 = vmax.f32 %v239, 0.0
      %v241 = vld [vmem:[%s233] sm:$0xff]
      %v242 = vld [vmem:[%s4] sm:$0x1]
      %v243 = vld [vmem:[%s2] sm:$0xff]
      %v244 = vld [vmem:[%s2 + $0x8] sm:$0xff]
      %v245 = vld [vmem:[%s2 + $0x10] sm:$0xff]
      %v246 = vld [vmem:[%s2 + $0x18] sm:$0xff]
      %v247 = vld [vmem:[%s2 + $0x20] sm:$0xff]
      %v248 = vld [vmem:[%s2 + $0x28] sm:$0xff]
      %v249 = vld [vmem:[%s2 + $0x30] sm:$0xff]
      %v250 = vld [vmem:[%s2 + $0x38] sm:$0xff]
      %v251 = vld [vmem:[%s3] sm:$0xff]
      %v252 = vld [vmem:[%s3 + $0x8] sm:$0xff]
      %v253 = vld [vmem:[%s3 + $0x10] sm:$0xff]
      %v254 = vld [vmem:[%s3 + $0x18] sm:$0xff]
      %v255 = vld [vmem:[%s3 + $0x20] sm:$0xff]
      %v256 = vld [vmem:[%s3 + $0x28] sm:$0xff]
      %v257 = vld [vmem:[%s3 + $0x30] sm:$0xff]
      %v258 = vld [vmem:[%s3 + $0x38] sm:$0xff]
      %vm259 = vcmask 523264
      %v261 = vsel %vm259, %v241, 0
      %263 = vmatprep.subr.mxu0 0.0
      %264 = vmatpush1.msra.mxu0 %v251
      %265 = vmatprep.subr.mxu0 0.0
      %266 = vmatpush1.msra.mxu0 %v252
      %267 = vmatprep.subr.mxu0 0.0
      %268 = vmatpush1.msra.mxu0 %v253
      %269 = vmatprep.subr.mxu0 0.0
      %270 = vmatpush1.msra.mxu0 %v254
      %271 = vmatprep.subr.mxu0 0.0
      %272 = vmatpush1.msra.mxu0 %v255
      %273 = vmatprep.subr.mxu0 0.0
      %274 = vmatpush1.msra.mxu0 %v256
      %275 = vmatprep.subr.mxu0 0.0
      %276 = vmatpush1.msra.mxu0 %v257
      %277 = vmatprep.subr.mxu0 0.0
      %278 = vmatpush1.msra.mxu0 %v258
      %279 = vmatprep.subr.mxu0 0.0
      %280 = vmatpush1.msra.mxu0 0.0
      %281 = vmatprep.subr.mxu0 0.0
      %282 = vmatpush1.msra.mxu0 0.0
      %283 = vmatprep.subr.mxu0 0.0
      %284 = vmatpush1.msra.mxu0 0.0
      %285 = vmatprep.subr.mxu0 0.0
      %286 = vmatpush1.msra.mxu0 0.0
      %287 = vmatprep.subr.mxu0 0.0
      %288 = vmatpush1.msra.mxu0 0.0
      %289 = vmatprep.subr.mxu0 0.0
      %290 = vmatpush1.msra.mxu0 0.0
      %291 = vmatprep.subr.mxu0 0.0
      %292 = vmatpush1.msra.mxu0 0.0
      %293 = vmatprep.subr.mxu0 0.0
      %294 = vmatpush1.msra.mxu0 0.0
      %295 = vmatprep.subr.mxu0 0.0
      %296 = vmatpush1.msra.mxu0 0.0
      %297 = vmatprep.subr.mxu0 0.0
      %298 = vmatpush1.msra.mxu0 0.0
      %299 = vmatprep.subr.mxu0 0.0
      %300 = vmatpush1.msra.mxu0 0.0
      %301 = vmatprep.subr.mxu0 0.0
      %302 = vmatpush1.msra.mxu0 0.0
      %303 = vmatprep.subr.mxu0 0.0
      %304 = vmatpush1.msra.mxu0 0.0
      %305 = vmatprep.subr.mxu0 0.0
      %306 = vmatpush1.msra.mxu0 0.0
      %307 = vmatprep.subr.mxu0 0.0
      %308 = vmatpush1.msra.mxu0 0.0
      %309 = vmatprep.subr.mxu0 0.0
      %310 = vmatpush1.msra.mxu0 0.0
      %311 = vmatprep.subr.mxu0 0.0
      %312 = vmatpush1.msra.mxu0 0.0
      %313 = vmatprep.subr.mxu0 0.0
      %314 = vmatpush1.msra.mxu0 0.0
      %315 = vmatprep.subr.mxu0 0.0
      %316 = vmatpush1.msra.mxu0 0.0
      %317 = vmatprep.subr.mxu0 0.0
      %318 = vmatpush1.msra.mxu0 0.0
      %319 = vmatprep.subr.mxu0 0.0
      %320 = vmatpush1.msra.mxu0 0.0
      %321 = vmatprep.subr.mxu0 0.0
      %322 = vmatpush1.msra.mxu0 0.0
      %323 = vmatprep.subr.mxu0 0.0
      %324 = vmatpush1.msra.mxu0 0.0
      %325 = vmatprep.subr.mxu0 0.0
      %326 = vmatpush1.msra.mxu0 0.0
      %327 = vmatprep.mubr.f32.mxu0 0.0
      %328 = vmatmul.mubr.f32.gmra.mrb[0].mxu0 %v261
      %v329 = vpop.f32.mrb[0].mxu0
      %v330 = vadd.f32 0.0, %v329
      %v331 = vpop.f32.mrb[0].mxu0
      %332 = vdwg.mxu0
      %v334 = vsel %vm259, %v240, 0
      %336 = vmatprep.subr.mxu0 0.0
      %337 = vmatpush1.msra.mxu0 %v243
      %338 = vmatprep.subr.mxu0 0.0
      %339 = vmatpush1.msra.mxu0 %v244
      %340 = vmatprep.subr.mxu0 0.0
      %341 = vmatpush1.msra.mxu0 %v245
      %342 = vmatprep.subr.mxu0 0.0
      %343 = vmatpush1.msra.mxu0 %v246
      %344 = vmatprep.subr.mxu0 0.0
      %345 = vmatpush1.msra.mxu0 %v247
      %346 = vmatprep.subr.mxu0 0.0
      %347 = vmatpush1.msra.mxu0 %v248
      %348 = vmatprep.subr.mxu0 0.0
      %349 = vmatpush1.msra.mxu0 %v249
      %350 = vmatprep.subr.mxu0 0.0
      %351 = vmatpush1.msra.mxu0 %v250
      %352 = vmatprep.subr.mxu0 0.0
      %353 = vmatpush1.msra.mxu0 0.0
      %354 = vmatprep.subr.mxu0 0.0
      %355 = vmatpush1.msra.mxu0 0.0
      %356 = vmatprep.subr.mxu0 0.0
      %357 = vmatpush1.msra.mxu0 0.0
      %358 = vmatprep.subr.mxu0 0.0
      %359 = vmatpush1.msra.mxu0 0.0
      %360 = vmatprep.subr.mxu0 0.0
      %361 = vmatpush1.msra.mxu0 0.0
      %362 = vmatprep.subr.mxu0 0.0
      %363 = vmatpush1.msra.mxu0 0.0
      %364 = vmatprep.subr.mxu0 0.0
      %365 = vmatpush1.msra.mxu0 0.0
      %366 = vmatprep.subr.mxu0 0.0
      %367 = vmatpush1.msra.mxu0 0.0
      %368 = vmatprep.subr.mxu0 0.0
      %369 = vmatpush1.msra.mxu0 0.0
      %370 = vmatprep.subr.mxu0 0.0
      %371 = vmatpush1.msra.mxu0 0.0
      %372 = vmatprep.subr.mxu0 0.0
      %373 = vmatpush1.msra.mxu0 0.0
      %374 = vmatprep.subr.mxu0 0.0
      %375 = vmatpush1.msra.mxu0 0.0
      %376 = vmatprep.subr.mxu0 0.0
      %377 = vmatpush1.msra.mxu0 0.0
      %378 = vmatprep.subr.mxu0 0.0
      %379 = vmatpush1.msra.mxu0 0.0
      %380 = vmatprep.subr.mxu0 0.0
      %381 = vmatpush1.msra.mxu0 0.0
      %382 = vmatprep.subr.mxu0 0.0
      %383 = vmatpush1.msra.mxu0 0.0
      %384 = vmatprep.subr.mxu0 0.0
      %385 = vmatpush1.msra.mxu0 0.0
      %386 = vmatprep.subr.mxu0 0.0
      %387 = vmatpush1.msra.mxu0 0.0
      %388 = vmatprep.subr.mxu0 0.0
      %389 = vmatpush1.msra.mxu0 0.0
      %390 = vmatprep.subr.mxu0 0.0
      %391 = vmatpush1.msra.mxu0 0.0
      %392 = vmatprep.subr.mxu0 0.0
      %393 = vmatpush1.msra.mxu0 0.0
      %394 = vmatprep.subr.mxu0 0.0
      %395 = vmatpush1.msra.mxu0 0.0
      %396 = vmatprep.subr.mxu0 0.0
      %397 = vmatpush1.msra.mxu0 0.0
      %398 = vmatprep.subr.mxu0 0.0
      %399 = vmatpush1.msra.mxu0 0.0
      %400 = vmatprep.mubr.f32.mxu0 0.0
      %401 = vmatmul.mubr.f32.gmra.mrb[0].mxu0 %v334
      %v402 = vpop.f32.mrb[0].mxu0
      %v403 = vadd.f32 %v330, %v402
      %v404 = vpop.f32.mrb[0].mxu0
      %405 = vdwg.mxu0
      %v407 = vlaneseq
      %v408 = vshrl.u32 %v407, 7
      %v409 = vsub.s32 0, %v408
      %v410 = vrot.slane %v242, %v409
      %v412 = vadd.f32 %v403, %v410
      %vm413 = vcmask 654336
      %414 = vst.msk [vmem:[#allocation2] sm:$0xff] %vm413, %v412
      %s415 = scalar_lea.vmem %s2, 64
      %v416 = vld [vmem:[%s415] sm:$0xff]
      %v417 = vld [vmem:[%s415 + $0x8] sm:$0xff]
      %v418 = vld [vmem:[%s415 + $0x10] sm:$0xff]
      %v419 = vld [vmem:[%s415 + $0x18] sm:$0xff]
      %v420 = vld [vmem:[%s415 + $0x20] sm:$0xff]
      %v421 = vld [vmem:[%s415 + $0x28] sm:$0xff]
      %v422 = vld [vmem:[%s415 + $0x30] sm:$0xff]
      %v423 = vld [vmem:[%s415 + $0x38] sm:$0xff]
      %s424 = scalar_lea.vmem %s3, 64
      %v425 = vld [vmem:[%s424] sm:$0xff]
      %v426 = vld [vmem:[%s424 + $0x8] sm:$0xff]
      %v427 = vld [vmem:[%s424 + $0x10] sm:$0xff]
      %v428 = vld [vmem:[%s424 + $0x18] sm:$0xff]
      %v429 = vld [vmem:[%s424 + $0x20] sm:$0xff]
      %v430 = vld [vmem:[%s424 + $0x28] sm:$0xff]
      %v431 = vld [vmem:[%s424 + $0x30] sm:$0xff]
      %v432 = vld [vmem:[%s424 + $0x38] sm:$0xff]
      %433 = vmatprep.subr.mxu0 0.0
      %434 = vmatpush1.msra.mxu0 %v425
      %435 = vmatprep.subr.mxu0 0.0
      %436 = vmatpush1.msra.mxu0 %v426
      %437 = vmatprep.subr.mxu0 0.0
      %438 = vmatpush1.msra.mxu0 %v427
      %439 = vmatprep.subr.mxu0 0.0
      %440 = vmatpush1.msra.mxu0 %v428
      %441 = vmatprep.subr.mxu0 0.0
      %442 = vmatpush1.msra.mxu0 %v429
      %443 = vmatprep.subr.mxu0 0.0
      %444 = vmatpush1.msra.mxu0 %v430
      %445 = vmatprep.subr.mxu0 0.0
      %446 = vmatpush1.msra.mxu0 %v431
      %447 = vmatprep.subr.mxu0 0.0
      %448 = vmatpush1.msra.mxu0 %v432
      %449 = vmatprep.subr.mxu0 0.0
      %450 = vmatpush1.msra.mxu0 0.0
      %451 = vmatprep.subr.mxu0 0.0
      %452 = vmatpush1.msra.mxu0 0.0
      %453 = vmatprep.subr.mxu0 0.0
      %454 = vmatpush1.msra.mxu0 0.0
      %455 = vmatprep.subr.mxu0 0.0
      %456 = vmatpush1.msra.mxu0 0.0
      %457 = vmatprep.subr.mxu0 0.0
      %458 = vmatpush1.msra.mxu0 0.0
      %459 = vmatprep.subr.mxu0 0.0
      %460 = vmatpush1.msra.mxu0 0.0
      %461 = vmatprep.subr.mxu0 0.0
      %462 = vmatpush1.msra.mxu0 0.0
      %463 = vmatprep.subr.mxu0 0.0
      %464 = vmatpush1.msra.mxu0 0.0
      %465 = vmatprep.subr.mxu0 0.0
      %466 = vmatpush1.msra.mxu0 0.0
      %467 = vmatprep.subr.mxu0 0.0
      %468 = vmatpush1.msra.mxu0 0.0
      %469 = vmatprep.subr.mxu0 0.0
      %470 = vmatpush1.msra.mxu0 0.0
      %471 = vmatprep.subr.mxu0 0.0
      %472 = vmatpush1.msra.mxu0 0.0
      %473 = vmatprep.subr.mxu0 0.0
      %474 = vmatpush1.msra.mxu0 0.0
      %475 = vmatprep.subr.mxu0 0.0
      %476 = vmatpush1.msra.mxu0 0.0
      %477 = vmatprep.subr.mxu0 0.0
      %478 = vmatpush1.msra.mxu0 0.0
      %479 = vmatprep.subr.mxu0 0.0
      %480 = vmatpush1.msra.mxu0 0.0
      %481 = vmatprep.subr.mxu0 0.0
      %482 = vmatpush1.msra.mxu0 0.0
      %483 = vmatprep.subr.mxu0 0.0
      %484 = vmatpush1.msra.mxu0 0.0
      %485 = vmatprep.subr.mxu0 0.0
      %486 = vmatpush1.msra.mxu0 0.0
      %487 = vmatprep.subr.mxu0 0.0
      %488 = vmatpush1.msra.mxu0 0.0
      %489 = vmatprep.subr.mxu0 0.0
      %490 = vmatpush1.msra.mxu0 0.0
      %491 = vmatprep.subr.mxu0 0.0
      %492 = vmatpush1.msra.mxu0 0.0
      %493 = vmatprep.subr.mxu0 0.0
      %494 = vmatpush1.msra.mxu0 0.0
      %495 = vmatprep.subr.mxu0 0.0
      %496 = vmatpush1.msra.mxu0 0.0
      %497 = vmatprep.mubr.f32.mxu0 0.0
      %498 = vmatmul.mubr.f32.gmra.mrb[0].mxu0 %v261
      %v499 = vpop.f32.mrb[0].mxu0
      %v500 = vadd.f32 0.0, %v499
      %v501 = vpop.f32.mrb[0].mxu0
      %502 = vdwg.mxu0
      %503 = vmatprep.subr.mxu0 0.0
      %504 = vmatpush1.msra.mxu0 %v416
      %505 = vmatprep.subr.mxu0 0.0
      %506 = vmatpush1.msra.mxu0 %v417
      %507 = vmatprep.subr.mxu0 0.0
      %508 = vmatpush1.msra.mxu0 %v418
      %509 = vmatprep.subr.mxu0 0.0
      %510 = vmatpush1.msra.mxu0 %v419
      %511 = vmatprep.subr.mxu0 0.0
      %512 = vmatpush1.msra.mxu0 %v420
      %513 = vmatprep.subr.mxu0 0.0
      %514 = vmatpush1.msra.mxu0 %v421
      %515 = vmatprep.subr.mxu0 0.0
      %516 = vmatpush1.msra.mxu0 %v422
      %517 = vmatprep.subr.mxu0 0.0
      %518 = vmatpush1.msra.mxu0 %v423
      %519 = vmatprep.subr.mxu0 0.0
      %520 = vmatpush1.msra.mxu0 0.0
      %521 = vmatprep.subr.mxu0 0.0
      %522 = vmatpush1.msra.mxu0 0.0
      %523 = vmatprep.subr.mxu0 0.0
      %524 = vmatpush1.msra.mxu0 0.0
      %525 = vmatprep.subr.mxu0 0.0
      %526 = vmatpush1.msra.mxu0 0.0
      %527 = vmatprep.subr.mxu0 0.0
      %528 = vmatpush1.msra.mxu0 0.0
      %529 = vmatprep.subr.mxu0 0.0
      %530 = vmatpush1.msra.mxu0 0.0
      %531 = vmatprep.subr.mxu0 0.0
      %532 = vmatpush1.msra.mxu0 0.0
      %533 = vmatprep.subr.mxu0 0.0
      %534 = vmatpush1.msra.mxu0 0.0
      %535 = vmatprep.subr.mxu0 0.0
      %536 = vmatpush1.msra.mxu0 0.0
      %537 = vmatprep.subr.mxu0 0.0
      %538 = vmatpush1.msra.mxu0 0.0
      %539 = vmatprep.subr.mxu0 0.0
      %540 = vmatpush1.msra.mxu0 0.0
      %541 = vmatprep.subr.mxu0 0.0
      %542 = vmatpush1.msra.mxu0 0.0
      %543 = vmatprep.subr.mxu0 0.0
      %544 = vmatpush1.msra.mxu0 0.0
      %545 = vmatprep.subr.mxu0 0.0
      %546 = vmatpush1.msra.mxu0 0.0
      %547 = vmatprep.subr.mxu0 0.0
      %548 = vmatpush1.msra.mxu0 0.0
      %549 = vmatprep.subr.mxu0 0.0
      %550 = vmatpush1.msra.mxu0 0.0
      %551 = vmatprep.subr.mxu0 0.0
      %552 = vmatpush1.msra.mxu0 0.0
      %553 = vmatprep.subr.mxu0 0.0
      %554 = vmatpush1.msra.mxu0 0.0
      %555 = vmatprep.subr.mxu0 0.0
      %556 = vmatpush1.msra.mxu0 0.0
      %557 = vmatprep.subr.mxu0 0.0
      %558 = vmatpush1.msra.mxu0 0.0
      %559 = vmatprep.subr.mxu0 0.0
      %560 = vmatpush1.msra.mxu0 0.0
      %561 = vmatprep.subr.mxu0 0.0
      %562 = vmatpush1.msra.mxu0 0.0
      %563 = vmatprep.subr.mxu0 0.0
      %564 = vmatpush1.msra.mxu0 0.0
      %565 = vmatprep.subr.mxu0 0.0
      %566 = vmatpush1.msra.mxu0 0.0
      %567 = vmatprep.mubr.f32.mxu0 0.0
      %568 = vmatmul.mubr.f32.gmra.mrb[0].mxu0 %v334
      %v569 = vpop.f32.mrb[0].mxu0
      %v570 = vadd.f32 %v500, %v569
      %v571 = vpop.f32.mrb[0].mxu0
      %572 = vdwg.mxu0
      %v573 = vadd.f32 %v570, %v410
      %574 = vst.msk [vmem:[#allocation3] sm:$0xff] %vm413, %v573
      %v575 = vld [vmem:[#allocation2] sm:$0x1]
      %vm576 = vcmask 647168
      %577 = vst.msk [vmem:[%s238] sm:$0x1] %vm576, %v575
      %v578 = vld [vmem:[#allocation3] sm:$0x1]
      %579 = vst.msk [vmem:[%s238 + $0x1] sm:$0x1] %vm576, %v578
      %v580 = vld [vmem:[#allocation2 + $0x1] sm:$0x1]
      %581 = vst.msk [vmem:[%s238 + $0x2] sm:$0x1] %vm576, %v580
      %v582 = vld [vmem:[#allocation3 + $0x1] sm:$0x1]
      %583 = vst.msk [vmem:[%s238 + $0x3] sm:$0x1] %vm576, %v582
      %v584 = vld [vmem:[#allocation2 + $0x2] sm:$0x1]
      %585 = vst.msk [vmem:[%s238 + $0x4] sm:$0x1] %vm576, %v584
      %v586 = vld [vmem:[#allocation3 + $0x2] sm:$0x1]
      %587 = vst.msk [vmem:[%s238 + $0x5] sm:$0x1] %vm576, %v586
      %v588 = vld [vmem:[#allocation2 + $0x3] sm:$0x1]
      %589 = vst.msk [vmem:[%s238 + $0x6] sm:$0x1] %vm576, %v588
      %v590 = vld [vmem:[#allocation3 + $0x3] sm:$0x1]
      %591 = vst.msk [vmem:[%s238 + $0x7] sm:$0x1] %vm576, %v590
      %v592 = vld [vmem:[#allocation2 + $0x4] sm:$0x1]
      %593 = vst.msk [vmem:[%s238 + $0x8] sm:$0x1] %vm576, %v592
      %v594 = vld [vmem:[#allocation3 + $0x4] sm:$0x1]
      %595 = vst.msk [vmem:[%s238 + $0x9] sm:$0x1] %vm576, %v594
      %v596 = vld [vmem:[#allocation2 + $0x5] sm:$0x1]
      %597 = vst.msk [vmem:[%s238 + $0xa] sm:$0x1] %vm576, %v596
      %v598 = vld [vmem:[#allocation3 + $0x5] sm:$0x1]
      %599 = vst.msk [vmem:[%s238 + $0xb] sm:$0x1] %vm576, %v598
      %v600 = vld [vmem:[#allocation2 + $0x6] sm:$0x1]
      %601 = vst.msk [vmem:[%s238 + $0xc] sm:$0x1] %vm576, %v600
      %v602 = vld [vmem:[#allocation3 + $0x6] sm:$0x1]
      %603 = vst.msk [vmem:[%s238 + $0xd] sm:$0x1] %vm576, %v602
      %v604 = vld [vmem:[#allocation2 + $0x7] sm:$0x1]
      %605 = vst.msk [vmem:[%s238 + $0xe] sm:$0x1] %vm576, %v604
      %v606 = vld [vmem:[#allocation3 + $0x7] sm:$0x1]
      %607 = vst.msk [vmem:[%s238 + $0xf] sm:$0x1] %vm576, %v606
      %p608 = scmp.lt.s32.totalorder %s16, 1
      %s609 = scalar_select %p608, %s16, 1
      %s610 = smul.addr %s609, 2
      %s611 = smul.addr %s610, 8
      %s612 = scalar_lea.vmem %s5, %s611
      // Predicated region
      $region41: #{unet_forward.9} parent=39 // pred_check
        %p613 = pneg %p149
      $region42: #{unet_forward.9} parent=39 // pred_check_branch
        %615 = sbr.rel (%p613) target = $region44
      $region43: #{unet_forward.9} parent=39 // pred_region
        _
      $region44: #{unet_forward.9} parent=39 // pred_fallthru
        _
    $region40: #{unet_forward.9} parent=5 // pred_fallthru
      _
    %p616 = scmp.le.s32.totalorder 2, %s11
    // Predicated region
    $region45: #{unet_forward.9} parent=5 // pred_check
      %p617 = pneg %p616
    $region46: #{unet_forward.9} parent=5 // pred_check_branch
      %619 = sbr.rel (%p617) target = $region48
    $region47: #{unet_forward.9} parent=5 // pred_region
      %s620 = ssub.s32 %s11, 2
      // Predicated region
      $region49: #{unet_forward.9} parent=47 // pred_check
        %p621 = pneg %p155
      $region50: #{unet_forward.9} parent=47 // pred_check_branch
        %623 = sbr.rel (%p621) target = $region52
      $region51: #{unet_forward.9} parent=47 // pred_region
        %p624 = scmp.lt.s32.totalorder %s17, 1
        %s625 = scalar_select %p624, %s17, 1
        %s626 = smul.addr %s625, 2
        %s627 = smul.addr %s626, 8
        %s628 = scalar_lea.vmem %s5, %s627
      $region52: #{unet_forward.9} parent=47 // pred_fallthru
        _
    $region48: #{unet_forward.9} parent=5 // pred_fallthru
      _
  $region6: #{unet_forward.9} parent=0 // loop_footer
    %s15 = sadd.s32 1, %s11
  $region7: #{unet_forward.9} parent=0 // loop_footer_branch
    %10 = sbr.rel target = $region3
  $region8: #{unet_forward.9} parent=0 // loop_exit
    _

</llo_original>
